<compile_context>
chip_gen: v7x
topology: tpu7x:2x2x1
jax: 0.10.0
libtpu: 0.0.40
codegen_flags: <defaults>
</compile_context>

<pallas_src>
import functools

import jax
import jax.numpy as jnp
import numpy as np
from jax.experimental import pallas as pl
from jax.experimental.pallas import tpu as pltpu


def _rope_cache_kernel(inv_freq_ref, cos_ref, sin_ref):
    """One (block_rows, dim) tile of the rotary cos/sin cache.

    inv_freq_ref: (1, dim//2) f32 VMEM (same block every grid step)
    cos_ref/sin_ref: (block_rows, dim) output tiles in the cache dtype
    """
    block_rows = cos_ref.shape[0]
    half = inv_freq_ref.shape[1]

    # Absolute position of each row in this tile (int math, cast once to f32;
    # exact for cache lengths < 2^24, same as the f32 PyTorch reference).
    row_start = pl.program_id(0) * block_rows
    t = (row_start
         + jax.lax.broadcasted_iota(jnp.int32, (block_rows, 1), 0)
         ).astype(jnp.float32)                                   # (block_rows, 1)

    freqs = t * inv_freq_ref[...]                                # (block_rows, half) f32

    # emb = concat([freqs, freqs]) duplicates the transcendental inputs, so
    # compute cos/sin once on the half-width array and write it to both
    # halves of the output (no jnp.concatenate, half the EUP work).
    c = jnp.cos(freqs).astype(cos_ref.dtype)
    s = jnp.sin(freqs).astype(sin_ref.dtype)

    cos_ref[:, :half] = c
    cos_ref[:, half:] = c
    sin_ref[:, :half] = s
    sin_ref[:, half:] = s


@functools.partial(
    jax.jit, static_argnames=("cache_len", "dim", "block_rows", "out_dtype"))
def _build_rope_cache(inv_freq, *, cache_len, dim, block_rows, out_dtype):
    half = dim // 2
    inv_freq_2d = inv_freq.reshape(1, half).astype(jnp.float32)
    grid = (cache_len // block_rows,)

    itemsize = jnp.dtype(out_dtype).itemsize
    cost = pl.CostEstimate(
        flops=2 * cache_len * half,                       # outer product muls
        transcendentals=cache_len * dim,                  # cos+sin on half width
        bytes_accessed=2 * cache_len * dim * itemsize + grid[0] * half * 4,
    )

    cos, sin = pl.pallas_call(
        _rope_cache_kernel,
        out_shape=(
            jax.ShapeDtypeStruct((cache_len, dim), out_dtype),
            jax.ShapeDtypeStruct((cache_len, dim), out_dtype),
        ),
        grid=grid,
        in_specs=[pl.BlockSpec((1, half), lambda i: (0, 0))],
        out_specs=(
            pl.BlockSpec((block_rows, dim), lambda i: (i, 0)),
            pl.BlockSpec((block_rows, dim), lambda i: (i, 0)),
        ),
        compiler_params=pltpu.CompilerParams(
            dimension_semantics=("parallel",)),
        cost_estimate=cost,
    )(inv_freq_2d)
    return cos, sin


class Emu3RotaryEmbeddingPallas:
    """JAX/Pallas equivalent of Emu3RotaryEmbedding."""

    # Large tiles amortize the ~0.35us/step grid overhead; 1024 rows keeps
    # the default 2048-length cache at >=2 grid steps (v7x megacore) while
    # staying far below scoped VMEM on all generations.
    _MAX_BLOCK_ROWS = 1024

    def __init__(self, dim, max_position_embeddings=2048, base=10000.0):
        assert dim % 2 == 0
        self.dim = dim
        self.max_position_embeddings = max_position_embeddings
        self.base = float(base)
        # Parameter-free "buffer", same formula as the PyTorch module.
        self.inv_freq = 1.0 / (
            self.base ** (jnp.arange(0, dim, 2, dtype=jnp.float32) / dim)
        )
        # torch.get_default_dtype() == float32 at init time.
        self._set_cos_sin_cache(max_position_embeddings, jnp.float32)

    def _choose_block_rows(self, padded_len):
        return padded_len if padded_len <= self._MAX_BLOCK_ROWS else self._MAX_BLOCK_ROWS

    def _set_cos_sin_cache(self, seq_len, dtype):
        self.max_seq_len_cached = seq_len
        self._cache_dtype = jnp.dtype(dtype)
        # Pad rows to a multiple of 8 (sublane), then to a block multiple so
        # tiles divide the cache exactly; forward slices back to seq_len.
        padded8 = ((seq_len + 7) // 8) * 8
        block_rows = self._choose_block_rows(padded8)
        padded = ((padded8 + block_rows - 1) // block_rows) * block_rows
        cos, sin = _build_rope_cache(
            self.inv_freq,
            cache_len=padded,
            dim=self.dim,
            block_rows=block_rows,
            out_dtype=np.dtype(self._cache_dtype),
        )
        self.cos_cached = cos
        self.sin_cached = sin

    def __call__(self, x, seq_len=None):
        if seq_len is None:
            seq_len = x.shape[-2]
        needs_longer = seq_len > self.max_seq_len_cached
        needs_dtype = jnp.dtype(x.dtype) != self._cache_dtype
        if needs_longer or needs_dtype:
            # Rebuild the cache directly in x.dtype so forward is a pure slice
            # (no whole-cache read/convert/write per call).
            self._set_cos_sin_cache(
                max(seq_len, self.max_seq_len_cached), x.dtype)
        # astype is a no-op when dtypes already match (they do after rebuild).
        return (
            self.cos_cached[:seq_len].astype(x.dtype),
            self.sin_cached[:seq_len].astype(x.dtype),
        )


def _reference_rope(dim, base, seq_len, dtype):
    inv_freq = 1.0 / (base ** (jnp.arange(0, dim, 2, dtype=jnp.float32) / dim))
    t = jnp.arange(seq_len, dtype=jnp.float32)
    freqs = jnp.outer(t, inv_freq)
    emb = jnp.concatenate([freqs, freqs], axis=-1)
    return jnp.cos(emb).astype(dtype), jnp.sin(emb).astype(dtype)


if __name__ == "__main__":
    key = jax.random.PRNGKey(0)

    batch, num_heads, seq_len, head_dim = 2, 4, 8, 32
    # x is only consulted for its dtype / seq dim (as in the PyTorch module).
    x = jax.random.normal(key, (batch, num_heads, seq_len, head_dim),
                          dtype=jnp.float32)

    rope = Emu3RotaryEmbeddingPallas(dim=head_dim, max_position_embeddings=128,
                                     base=10000.0)
    cos, sin = rope(x, seq_len=seq_len)
    cos, sin = jax.block_until_ready((cos, sin))

    assert cos.shape == (seq_len, head_dim) and sin.shape == (seq_len, head_dim)
    assert cos.dtype == x.dtype and sin.dtype == x.dtype

    cos_ref, sin_ref = _reference_rope(head_dim, 10000.0, seq_len, x.dtype)
    assert jnp.allclose(cos, cos_ref, atol=1e-5, rtol=1e-5)
    assert jnp.allclose(sin, sin_ref, atol=1e-5, rtol=1e-5)

    # Default seq_len=None path (derives from x.shape[-2]).
    cos_d, sin_d = jax.block_until_ready(rope(x))
    assert jnp.allclose(cos_d, cos_ref, atol=1e-5, rtol=1e-5)
    assert jnp.allclose(sin_d, sin_ref, atol=1e-5, rtol=1e-5)

    # Cache-extension path (seq_len > max cached).
    cos2, sin2 = jax.block_until_ready(rope(x, seq_len=200))
    cos2_ref, sin2_ref = _reference_rope(head_dim, 10000.0, 200, x.dtype)
    assert jnp.allclose(cos2, cos2_ref, atol=1e-5, rtol=1e-5)
    assert jnp.allclose(sin2, sin2_ref, atol=1e-5, rtol=1e-5)

    # Multi-tile cache (grid of 2 blocks of 1024 rows) + bf16 consumer dtype:
    # cache is built directly in bf16, forward is just a slice.
    rope_big = Emu3RotaryEmbeddingPallas(dim=head_dim,
                                         max_position_embeddings=2048,
                                         base=10000.0)
    x_bf16 = x.astype(jnp.bfloat16)
    cos3, sin3 = jax.block_until_ready(rope_big(x_bf16, seq_len=2048))
    assert cos3.shape == (2048, head_dim) and cos3.dtype == jnp.bfloat16
    cos3_ref, sin3_ref = _reference_rope(head_dim, 10000.0, 2048, jnp.bfloat16)
    assert jnp.allclose(cos3.astype(jnp.float32), cos3_ref.astype(jnp.float32),
                        atol=1e-2, rtol=1e-2)
    assert jnp.allclose(sin3.astype(jnp.float32), sin3_ref.astype(jnp.float32),
                        atol=1e-2, rtol=1e-2)

    print("KERNEL_OK")
</pallas_src>

<mosaic_0001>
module attributes {stable_mosaic.version = 11 : i64} {
  func.func @_rope_cache_kernel(%arg0: i32, %arg1: memref<1x16xf32, #tpu.memory_space<vmem>>, %arg2: memref<128x32xf32, #tpu.memory_space<vmem>>, %arg3: memref<128x32xf32, #tpu.memory_space<vmem>>) attributes {dimension_semantics = [#tpu.dimension_semantics<parallel>], iteration_bounds = array<i64: 1>, scalar_prefetch = 0 : i64, scratch_operands = 0 : i64, tpu.core_type = #tpu.core_type<tc>, window_params = [{pipeline_mode = #tpu.pipeline_mode<synchronous>, transform_indices = @transform_0, window_bounds = array<i64: 1, 16>}, {transform_indices = @transform_1, window_bounds = array<i64: 128, 32>}, {transform_indices = @transform_2, window_bounds = array<i64: 128, 32>}]} {
    %c128_i32 = arith.constant 128 : i32
    %0 = arith.muli %arg0, %c128_i32 : i32
    %1 = tpu.iota {dimensions = array<i32: 0>} : vector<128x1xi32>
    %2 = vector.broadcast %0 : i32 to vector<128x1xi32>
    %3 = arith.addi %2, %1 : vector<128x1xi32>
    %4 = arith.sitofp %3 : vector<128x1xi32> to vector<128x1xf32>
    %c0 = arith.constant 0 : index
    %c0_0 = arith.constant 0 : index
    %5 = vector.load %arg1[%c0, %c0_0] : memref<1x16xf32, #tpu.memory_space<vmem>>, vector<1x16xf32>
    %6 = vector.broadcast %4 : vector<128x1xf32> to vector<128x16xf32>
    %7 = vector.broadcast %5 : vector<1x16xf32> to vector<128x16xf32>
    %8 = arith.mulf %6, %7 : vector<128x16xf32>
    %9 = math.cos %8 : vector<128x16xf32>
    %10 = math.sin %8 : vector<128x16xf32>
    %c0_1 = arith.constant 0 : index
    %c0_2 = arith.constant 0 : index
    %11 = vector.load %arg2[%c0_1, %c0_2] : memref<128x32xf32, #tpu.memory_space<vmem>>, vector<128x16xf32>
    tpu.vector_store %arg2[%c0_1, %c0_2], %9 {strides = array<i32>} : memref<128x32xf32, #tpu.memory_space<vmem>>, vector<128x16xf32>,
    %c0_3 = arith.constant 0 : index
    %c16 = arith.constant 16 : index
    %12 = vector.load %arg2[%c0_3, %c16] : memref<128x32xf32, #tpu.memory_space<vmem>>, vector<128x16xf32>
    tpu.vector_store %arg2[%c0_3, %c16], %9 {strides = array<i32>} : memref<128x32xf32, #tpu.memory_space<vmem>>, vector<128x16xf32>,
    %c0_4 = arith.constant 0 : index
    %c0_5 = arith.constant 0 : index
    %13 = vector.load %arg3[%c0_4, %c0_5] : memref<128x32xf32, #tpu.memory_space<vmem>>, vector<128x16xf32>
    tpu.vector_store %arg3[%c0_4, %c0_5], %10 {strides = array<i32>} : memref<128x32xf32, #tpu.memory_space<vmem>>, vector<128x16xf32>,
    %c0_6 = arith.constant 0 : index
    %c16_7 = arith.constant 16 : index
    %14 = vector.load %arg3[%c0_6, %c16_7] : memref<128x32xf32, #tpu.memory_space<vmem>>, vector<128x16xf32>
    tpu.vector_store %arg3[%c0_6, %c16_7], %10 {strides = array<i32>} : memref<128x32xf32, #tpu.memory_space<vmem>>, vector<128x16xf32>,
    return
  }
  func.func @transform_0(%arg0: i32) -> (i32, i32) {
    %c0_i32 = arith.constant 0 : i32
    %c0_i32_0 = arith.constant 0 : i32
    %c0_i32_1 = arith.constant 0 : i32
    return %c0_i32, %c0_i32_0 : i32, i32
  }
  func.func @transform_1(%arg0: i32) -> (i32, i32) {
    %c0_i32 = arith.constant 0 : i32
    %c0_i32_0 = arith.constant 0 : i32
    return %arg0, %c0_i32 : i32, i32
  }
  func.func @transform_2(%arg0: i32) -> (i32, i32) {
    %c0_i32 = arith.constant 0 : i32
    %c0_i32_0 = arith.constant 0 : i32
    return %arg0, %c0_i32 : i32, i32
  }
}

</mosaic_0001>

<llo_original>
// kernel: _build_rope_cache.1
$region0: #{_build_rope_cache.1}
  #allocation0 [shape = 'u32[]', space=smem, size = 0x4, offset = 0x4, fixed_abs, tag = 'smem constant byte address 0x4 - core index']
  #allocation1 [shape = 'u32[144,128]{1,0:T(1,128)}', space=vmem, size = 0x12000, scoped, tag = 'internal scratch']
  %s0 = inlined_call_operand.vmem [shape: f32[1,16], index: 0, kind: input, shape index: {}]
  %s1 = inlined_call_operand.vmem [shape: f32[128,32], index: 1, kind: output, shape index: {0}]
  %s2 = inlined_call_operand.vmem [shape: f32[128,32], index: 2, kind: output, shape index: {1}]
  %3 = xla_tuple %s1, %s2
  %s4 = sld [smem:[#allocation0]]
  $region22: #{_build_rope_cache.1} parent=0
    _
  %s6 = ssub.s32 1, %s4
  %s7 = scalar_select 0, %s6, %s4
  // Predicated region
  $region2: #{_build_rope_cache.1} parent=0 // pred_check
    _
  $region3: #{_build_rope_cache.1} parent=0 // pred_check_branch
    %9 = sbr.rel (0) target = $region5
  $region4: #{_build_rope_cache.1} parent=0 // pred_region
    _
  $region5: #{_build_rope_cache.1} parent=0 // pred_fallthru
    _
  %s10 = smul.u32 0, 128
  %v11 = vlaneseq
  %v12 = vshrl.u32 %v11, 7
  %v13 = vadd.s32 %v12, 8
  %v14 = vadd.s32 %v12, 16
  %v15 = vadd.s32 %v12, 24
  %v16 = vadd.s32 %v12, 32
  %v17 = vadd.s32 %v12, 40
  %v18 = vadd.s32 %v12, 48
  %v19 = vadd.s32 %v12, 56
  %v20 = vadd.s32 %v12, 64
  %v21 = vadd.s32 %v12, 72
  %v22 = vadd.s32 %v12, 80
  %v23 = vadd.s32 %v12, 88
  %v24 = vadd.s32 %v12, 96
  %v25 = vadd.s32 %v12, 104
  %v26 = vadd.s32 %v12, 112
  %v27 = vadd.s32 %v12, 120
  %v28 = vstv %s10
  %v29 = vadd.s32 %v28, %v12
  %v30 = vadd.s32 %v28, %v13
  %v31 = vadd.s32 %v28, %v14
  %v32 = vadd.s32 %v28, %v15
  %v33 = vadd.s32 %v28, %v16
  %v34 = vadd.s32 %v28, %v17
  %v35 = vadd.s32 %v28, %v18
  %v36 = vadd.s32 %v28, %v19
  %v37 = vadd.s32 %v28, %v20
  %v38 = vadd.s32 %v28, %v21
  %v39 = vadd.s32 %v28, %v22
  %v40 = vadd.s32 %v28, %v23
  %v41 = vadd.s32 %v28, %v24
  %v42 = vadd.s32 %v28, %v25
  %v43 = vadd.s32 %v28, %v26
  %v44 = vadd.s32 %v28, %v27
  %v45 = vcvt.s32.f32 %v29
  %v46 = vcvt.s32.f32 %v30
  %v47 = vcvt.s32.f32 %v31
  %v48 = vcvt.s32.f32 %v32
  %v49 = vcvt.s32.f32 %v33
  %v50 = vcvt.s32.f32 %v34
  %v51 = vcvt.s32.f32 %v35
  %v52 = vcvt.s32.f32 %v36
  %v53 = vcvt.s32.f32 %v37
  %v54 = vcvt.s32.f32 %v38
  %v55 = vcvt.s32.f32 %v39
  %v56 = vcvt.s32.f32 %v40
  %v57 = vcvt.s32.f32 %v41
  %v58 = vcvt.s32.f32 %v42
  %v59 = vcvt.s32.f32 %v43
  %v60 = vcvt.s32.f32 %v44
  %v61 = vld [vmem:[%s0] sm:$0x1]
  %v63 = vlaneseq
  %v64 = vshrl.u32 %v63, 7
  %v65 = vsub.s32 0, %v64
  %v66 = vrot.slane %v61, %v65
  %v68 = vmul.f32 %v45, %v66
  %v69 = vmul.f32 %v46, %v66
  %v70 = vmul.f32 %v47, %v66
  %v71 = vmul.f32 %v48, %v66
  %v72 = vmul.f32 %v49, %v66
  %v73 = vmul.f32 %v50, %v66
  %v74 = vmul.f32 %v51, %v66
  %v75 = vmul.f32 %v52, %v66
  %v76 = vmul.f32 %v53, %v66
  %v77 = vmul.f32 %v54, %v66
  %v78 = vmul.f32 %v55, %v66
  %v79 = vmul.f32 %v56, %v66
  %v80 = vmul.f32 %v57, %v66
  %v81 = vmul.f32 %v58, %v66
  %v82 = vmul.f32 %v59, %v66
  %v83 = vmul.f32 %v60, %v66
  %v84 = vand.u32 2147483647, %v68
  %vm85 = vcmp.le.f32.partialorder %v84, 0.7853982
  %vm86 = vcmp.lt.s32.totalorder %v68, 0
  %v87 = vand.u32 %v68, 2139095040
  %v88 = vshrl.u32 %v87, 23
  %v89 = vsub.s32 %v88, 127
  %v90 = vand.u32 2147483647, %v68
  %v91 = vand.u32 %v90, 8388607
  %v92 = vor.u32 %v91, 8388608
  %v93 = vsub.s32 0, %v92
  %v94 = vadd.s32 %v89, 1
  %vm95 = vcmp.gt.s32.totalorder %v94, 0
  %v96 = vsel %vm95, %v94, 0
  %v97 = vshrl.u32 %v96, 5
  %v98 = vand.u32 %v96, 31
  %v99 = vsub.s32 32, %v98
  %v100 = vshrl.u32 683565275, %v99
  %v101 = vshll.u32 683565275, %v98
  %v102 = vshrl.u32 2475754826, %v99
  %v103 = vor.u32 %v101, %v102
  %v104 = vshll.u32 2475754826, %v98
  %v105 = vshrl.u32 2131351028, %v99
  %v106 = vor.u32 %v104, %v105
  %v107 = vshll.u32 2131351028, %v98
  %v108 = vshrl.u32 2102212464, %v99
  %v109 = vor.u32 %v107, %v108
  %v110 = vshll.u32 2102212464, %v98
  %v111 = vshrl.u32 920167782, %v99
  %v112 = vor.u32 %v110, %v111
  %v113 = vshll.u32 920167782, %v98
  %v114 = vshrl.u32 1326507024, %v99
  %v115 = vor.u32 %v113, %v114
  %vm116 = vcmp.lt.s32.totalorder %v97, 1
  %vm117 = vcmp.lt.s32.totalorder %v97, 2
  %vm118 = vcmp.lt.s32.totalorder %v97, 3
  %vm119 = vcmp.lt.s32.totalorder %v97, 4
  %v120 = vsel %vm116, %v100, %v103
  %v121 = vsel %vm119, %v109, 2102212464
  %v122 = vsel %vm118, %v106, %v121
  %v123 = vsel %vm117, %v120, %v122
  %v124 = vsel %vm116, %v103, %v106
  %v125 = vsel %vm119, %v112, 920167782
  %v126 = vsel %vm118, %v109, %v125
  %v127 = vsel %vm117, %v124, %v126
  %v128 = vsel %vm116, %v106, %v109
  %v129 = vsel %vm119, %v115, 1326507024
  %v130 = vsel %vm118, %v112, %v129
  %v131 = vsel %vm117, %v128, %v130
  %v132 = vshll.u32 %v92, 8
  %v133 = vmul.u32.u64.compose %v132, %v131
  %v134 = vextract.low.u32 %v133
  %v135 = vextract.high.u32 %v133
  %v136 = vmul.u32.u64.compose %v132, %v127
  %v137 = vextract.low.u32 %v136
  %v138 = vextract.high.u32 %v136
  %v139 = vmul.u32 %v132, %v123
  %v140 = vadd.s32 %v135, %v137
  %vm141 = vc.u32 %v135, %v137
  %v142 = vadd.s32 %v138, 1
  %v143 = vsel %vm141, %v142, %v138
  %v144 = vadd.s32 %v139, %v143
  %v145 = vadd.s32 %v144, 536870912
  %v146 = vshrl.u32 %v145, 30
  %v147 = vshll.u32 %v146, 30
  %v148 = vsub.s32 %v144, %v147
  %vm149 = vcmp.lt.s32.totalorder %v148, 0
  %v150 = vsub.s32 0, %v148
  %v151 = vsel %vm149, %v150, %v148
  %v152 = vclz %v151
  %v153 = vsub.s32 %v152, 2
  %vm154 = vcmp.gt.s32.totalorder 0, %v153
  %v155 = vsel %vm154, 0, %v153
  %v156 = vsub.s32 32, %v155
  %v157 = vshll.u32 %v148, %v155
  %v158 = vshrl.u32 %v140, %v156
  %v159 = vor.u32 %v157, %v158
  %v160 = vsub.s32 4294967266, %v155
  %v161 = vadd.s32 %v160, 127
  %v162 = vshll.u32 %v161, 23
  %v163 = vor.u32 4788187, %v162
  %v164 = vand.u32 2147483647, %v163
  %v166 = vcvt.s32.f32 %v159
  %v167 = vmul.f32 %v166, %v164
  %v168 = vxor.u32 %v167, 2147483648
  %v169 = vsel %vm86, %v168, %v167
  %v170 = vsub.s32 4, %v146
  %v171 = vsel %vm86, %v170, %v146
  %v172 = vsel %vm85, %v68, %v169
  %v173 = vsel %vm85, 0, %v171
  %v174 = vcosq.f32.pop %v172
  %v175 = vsinq.f32.pop %v172
  %vm176 = vweird.f32 %v68
  %v177 = vand.u32 %v173, 3
  %vm178 = vcmp.lt.s32.totalorder %v177, 2
  %vm179 = vcmp.eq.s32.totalorder %v177, 0
  %v180 = vxor.u32 %v175, 2147483648
  %v181 = vsel %vm179, %v174, %v180
  %vm182 = vcmp.eq.s32.totalorder %v177, 2
  %v183 = vxor.u32 %v174, 2147483648
  %v184 = vsel %vm182, %v183, %v175
  %v185 = vsel %vm178, %v181, %v184
  %v186 = vsel %vm176, nan, %v185
  %v187 = vand.u32 2147483647, %v69
  %vm188 = vcmp.le.f32.partialorder %v187, 0.7853982
  %vm189 = vcmp.lt.s32.totalorder %v69, 0
  %v190 = vand.u32 %v69, 2139095040
  %v191 = vshrl.u32 %v190, 23
  %v192 = vsub.s32 %v191, 127
  %v193 = vand.u32 2147483647, %v69
  %v194 = vand.u32 %v193, 8388607
  %v195 = vor.u32 %v194, 8388608
  %v196 = vsub.s32 0, %v195
  %v197 = vadd.s32 %v192, 1
  %vm198 = vcmp.gt.s32.totalorder %v197, 0
  %v199 = vsel %vm198, %v197, 0
  %v200 = vshrl.u32 %v199, 5
  %v201 = vand.u32 %v199, 31
  %v202 = vsub.s32 32, %v201
  %v203 = vshrl.u32 683565275, %v202
  %v204 = vshll.u32 683565275, %v201
  %v205 = vshrl.u32 2475754826, %v202
  %v206 = vor.u32 %v204, %v205
  %v207 = vshll.u32 2475754826, %v201
  %v208 = vshrl.u32 2131351028, %v202
  %v209 = vor.u32 %v207, %v208
  %v210 = vshll.u32 2131351028, %v201
  %v211 = vshrl.u32 2102212464, %v202
  %v212 = vor.u32 %v210, %v211
  %v213 = vshll.u32 2102212464, %v201
  %v214 = vshrl.u32 920167782, %v202
  %v215 = vor.u32 %v213, %v214
  %v216 = vshll.u32 920167782, %v201
  %v217 = vshrl.u32 1326507024, %v202
  %v218 = vor.u32 %v216, %v217
  %vm219 = vcmp.lt.s32.totalorder %v200, 1
  %vm220 = vcmp.lt.s32.totalorder %v200, 2
  %vm221 = vcmp.lt.s32.totalorder %v200, 3
  %vm222 = vcmp.lt.s32.totalorder %v200, 4
  %v223 = vsel %vm219, %v203, %v206
  %v224 = vsel %vm222, %v212, 2102212464
  %v225 = vsel %vm221, %v209, %v224
  %v226 = vsel %vm220, %v223, %v225
  %v227 = vsel %vm219, %v206, %v209
  %v228 = vsel %vm222, %v215, 920167782
  %v229 = vsel %vm221, %v212, %v228
  %v230 = vsel %vm220, %v227, %v229
  %v231 = vsel %vm219, %v209, %v212
  %v232 = vsel %vm222, %v218, 1326507024
  %v233 = vsel %vm221, %v215, %v232
  %v234 = vsel %vm220, %v231, %v233
  %v235 = vshll.u32 %v195, 8
  %v236 = vmul.u32.u64.compose %v235, %v234
  %v237 = vextract.low.u32 %v236
  %v238 = vextract.high.u32 %v236
  %v239 = vmul.u32.u64.compose %v235, %v230
  %v240 = vextract.low.u32 %v239
  %v241 = vextract.high.u32 %v239
  %v242 = vmul.u32 %v235, %v226
  %v243 = vadd.s32 %v238, %v240
  %vm244 = vc.u32 %v238, %v240
  %v245 = vadd.s32 %v241, 1
  %v246 = vsel %vm244, %v245, %v241
  %v247 = vadd.s32 %v242, %v246
  %v248 = vadd.s32 %v247, 536870912
  %v249 = vshrl.u32 %v248, 30
  %v250 = vshll.u32 %v249, 30
  %v251 = vsub.s32 %v247, %v250
  %vm252 = vcmp.lt.s32.totalorder %v251, 0
  %v253 = vsub.s32 0, %v251
  %v254 = vsel %vm252, %v253, %v251
  %v255 = vclz %v254
  %v256 = vsub.s32 %v255, 2
  %vm257 = vcmp.gt.s32.totalorder 0, %v256
  %v258 = vsel %vm257, 0, %v256
  %v259 = vsub.s32 32, %v258
  %v260 = vshll.u32 %v251, %v258
  %v261 = vshrl.u32 %v243, %v259
  %v262 = vor.u32 %v260, %v261
  %v263 = vsub.s32 4294967266, %v258
  %v264 = vadd.s32 %v263, 127
  %v265 = vshll.u32 %v264, 23
  %v266 = vor.u32 4788187, %v265
  %v267 = vand.u32 2147483647, %v266
  %v269 = vcvt.s32.f32 %v262
  %v270 = vmul.f32 %v269, %v267
  %v271 = vxor.u32 %v270, 2147483648
  %v272 = vsel %vm189, %v271, %v270
  %v273 = vsub.s32 4, %v249
  %v274 = vsel %vm189, %v273, %v249
  %v275 = vsel %vm188, %v69, %v272
  %v276 = vsel %vm188, 0, %v274
  %v277 = vcosq.f32.pop %v275
  %v278 = vsinq.f32.pop %v275
  %vm279 = vweird.f32 %v69
  %v280 = vand.u32 %v276, 3
  %vm281 = vcmp.lt.s32.totalorder %v280, 2
  %vm282 = vcmp.eq.s32.totalorder %v280, 0
  %v283 = vxor.u32 %v278, 2147483648
  %v284 = vsel %vm282, %v277, %v283
  %vm285 = vcmp.eq.s32.totalorder %v280, 2
  %v286 = vxor.u32 %v277, 2147483648
  %v287 = vsel %vm285, %v286, %v278
  %v288 = vsel %vm281, %v284, %v287
  %v289 = vsel %vm279, nan, %v288
  %v290 = vand.u32 2147483647, %v70
  %vm291 = vcmp.le.f32.partialorder %v290, 0.7853982
  %vm292 = vcmp.lt.s32.totalorder %v70, 0
  %v293 = vand.u32 %v70, 2139095040
  %v294 = vshrl.u32 %v293, 23
  %v295 = vsub.s32 %v294, 127
  %v296 = vand.u32 2147483647, %v70
  %v297 = vand.u32 %v296, 8388607
  %v298 = vor.u32 %v297, 8388608
  %v299 = vsub.s32 0, %v298
  %v300 = vadd.s32 %v295, 1
  %vm301 = vcmp.gt.s32.totalorder %v300, 0
  %v302 = vsel %vm301, %v300, 0
  %v303 = vshrl.u32 %v302, 5
  %v304 = vand.u32 %v302, 31
  %v305 = vsub.s32 32, %v304
  %v306 = vshrl.u32 683565275, %v305
  %v307 = vshll.u32 683565275, %v304
  %v308 = vshrl.u32 2475754826, %v305
  %v309 = vor.u32 %v307, %v308
  %v310 = vshll.u32 2475754826, %v304
  %v311 = vshrl.u32 2131351028, %v305
  %v312 = vor.u32 %v310, %v311
  %v313 = vshll.u32 2131351028, %v304
  %v314 = vshrl.u32 2102212464, %v305
  %v315 = vor.u32 %v313, %v314
  %v316 = vshll.u32 2102212464, %v304
  %v317 = vshrl.u32 920167782, %v305
  %v318 = vor.u32 %v316, %v317
  %v319 = vshll.u32 920167782, %v304
  %v320 = vshrl.u32 1326507024, %v305
  %v321 = vor.u32 %v319, %v320
  %vm322 = vcmp.lt.s32.totalorder %v303, 1
  %vm323 = vcmp.lt.s32.totalorder %v303, 2
  %vm324 = vcmp.lt.s32.totalorder %v303, 3
  %vm325 = vcmp.lt.s32.totalorder %v303, 4
  %v326 = vsel %vm322, %v306, %v309
  %v327 = vsel %vm325, %v315, 2102212464
  %v328 = vsel %vm324, %v312, %v327
  %v329 = vsel %vm323, %v326, %v328
  %v330 = vsel %vm322, %v309, %v312
  %v331 = vsel %vm325, %v318, 920167782
  %v332 = vsel %vm324, %v315, %v331
  %v333 = vsel %vm323, %v330, %v332
  %v334 = vsel %vm322, %v312, %v315
  %v335 = vsel %vm325, %v321, 1326507024
  %v336 = vsel %vm324, %v318, %v335
  %v337 = vsel %vm323, %v334, %v336
  %v338 = vshll.u32 %v298, 8
  %v339 = vmul.u32.u64.compose %v338, %v337
  %v340 = vextract.low.u32 %v339
  %v341 = vextract.high.u32 %v339
  %v342 = vmul.u32.u64.compose %v338, %v333
  %v343 = vextract.low.u32 %v342
  %v344 = vextract.high.u32 %v342
  %v345 = vmul.u32 %v338, %v329
  %v346 = vadd.s32 %v341, %v343
  %vm347 = vc.u32 %v341, %v343
  %v348 = vadd.s32 %v344, 1
  %v349 = vsel %vm347, %v348, %v344
  %v350 = vadd.s32 %v345, %v349
  %v351 = vadd.s32 %v350, 536870912
  %v352 = vshrl.u32 %v351, 30
  %v353 = vshll.u32 %v352, 30
  %v354 = vsub.s32 %v350, %v353
  %vm355 = vcmp.lt.s32.totalorder %v354, 0
  %v356 = vsub.s32 0, %v354
  %v357 = vsel %vm355, %v356, %v354
  %v358 = vclz %v357
  %v359 = vsub.s32 %v358, 2
  %vm360 = vcmp.gt.s32.totalorder 0, %v359
  %v361 = vsel %vm360, 0, %v359
  %v362 = vsub.s32 32, %v361
  %v363 = vshll.u32 %v354, %v361
  %v364 = vshrl.u32 %v346, %v362
  %v365 = vor.u32 %v363, %v364
  %v366 = vsub.s32 4294967266, %v361
  %v367 = vadd.s32 %v366, 127
  %v368 = vshll.u32 %v367, 23
  %v369 = vor.u32 4788187, %v368
  %v370 = vand.u32 2147483647, %v369
  %v372 = vcvt.s32.f32 %v365
  %v373 = vmul.f32 %v372, %v370
  %v374 = vxor.u32 %v373, 2147483648
  %v375 = vsel %vm292, %v374, %v373
  %v376 = vsub.s32 4, %v352
  %v377 = vsel %vm292, %v376, %v352
  %v378 = vsel %vm291, %v70, %v375
  %v379 = vsel %vm291, 0, %v377
  %v380 = vcosq.f32.pop %v378
  %v381 = vsinq.f32.pop %v378
  %vm382 = vweird.f32 %v70
  %v383 = vand.u32 %v379, 3
  %vm384 = vcmp.lt.s32.totalorder %v383, 2
  %vm385 = vcmp.eq.s32.totalorder %v383, 0
  %v386 = vxor.u32 %v381, 2147483648
  %v387 = vsel %vm385, %v380, %v386
  %vm388 = vcmp.eq.s32.totalorder %v383, 2
  %v389 = vxor.u32 %v380, 2147483648
  %v390 = vsel %vm388, %v389, %v381
  %v391 = vsel %vm384, %v387, %v390
  %v392 = vsel %vm382, nan, %v391
  %v393 = vand.u32 2147483647, %v71
  %vm394 = vcmp.le.f32.partialorder %v393, 0.7853982
  %vm395 = vcmp.lt.s32.totalorder %v71, 0
  %v396 = vand.u32 %v71, 2139095040
  %v397 = vshrl.u32 %v396, 23
  %v398 = vsub.s32 %v397, 127
  %v399 = vand.u32 2147483647, %v71
  %v400 = vand.u32 %v399, 8388607
  %v401 = vor.u32 %v400, 8388608
  %v402 = vsub.s32 0, %v401
  %v403 = vadd.s32 %v398, 1
  %vm404 = vcmp.gt.s32.totalorder %v403, 0
  %v405 = vsel %vm404, %v403, 0
  %v406 = vshrl.u32 %v405, 5
  %v407 = vand.u32 %v405, 31
  %v408 = vsub.s32 32, %v407
  %v409 = vshrl.u32 683565275, %v408
  %v410 = vshll.u32 683565275, %v407
  %v411 = vshrl.u32 2475754826, %v408
  %v412 = vor.u32 %v410, %v411
  %v413 = vshll.u32 2475754826, %v407
  %v414 = vshrl.u32 2131351028, %v408
  %v415 = vor.u32 %v413, %v414
  %v416 = vshll.u32 2131351028, %v407
  %v417 = vshrl.u32 2102212464, %v408
  %v418 = vor.u32 %v416, %v417
  %v419 = vshll.u32 2102212464, %v407
  %v420 = vshrl.u32 920167782, %v408
  %v421 = vor.u32 %v419, %v420
  %v422 = vshll.u32 920167782, %v407
  %v423 = vshrl.u32 1326507024, %v408
  %v424 = vor.u32 %v422, %v423
  %vm425 = vcmp.lt.s32.totalorder %v406, 1
  %vm426 = vcmp.lt.s32.totalorder %v406, 2
  %vm427 = vcmp.lt.s32.totalorder %v406, 3
  %vm428 = vcmp.lt.s32.totalorder %v406, 4
  %v429 = vsel %vm425, %v409, %v412
  %v430 = vsel %vm428, %v418, 2102212464
  %v431 = vsel %vm427, %v415, %v430
  %v432 = vsel %vm426, %v429, %v431
  %v433 = vsel %vm425, %v412, %v415
  %v434 = vsel %vm428, %v421, 920167782
  %v435 = vsel %vm427, %v418, %v434
  %v436 = vsel %vm426, %v433, %v435
  %v437 = vsel %vm425, %v415, %v418
  %v438 = vsel %vm428, %v424, 1326507024
  %v439 = vsel %vm427, %v421, %v438
  %v440 = vsel %vm426, %v437, %v439
  %v441 = vshll.u32 %v401, 8
  %v442 = vmul.u32.u64.compose %v441, %v440
  %v443 = vextract.low.u32 %v442
  %v444 = vextract.high.u32 %v442
  %v445 = vmul.u32.u64.compose %v441, %v436
  %v446 = vextract.low.u32 %v445
  %v447 = vextract.high.u32 %v445
  %v448 = vmul.u32 %v441, %v432
  %v449 = vadd.s32 %v444, %v446
  %vm450 = vc.u32 %v444, %v446
  %v451 = vadd.s32 %v447, 1
  %v452 = vsel %vm450, %v451, %v447
  %v453 = vadd.s32 %v448, %v452
  %v454 = vadd.s32 %v453, 536870912
  %v455 = vshrl.u32 %v454, 30
  %v456 = vshll.u32 %v455, 30
  %v457 = vsub.s32 %v453, %v456
  %vm458 = vcmp.lt.s32.totalorder %v457, 0
  %v459 = vsub.s32 0, %v457
  %v460 = vsel %vm458, %v459, %v457
  %v461 = vclz %v460
  %v462 = vsub.s32 %v461, 2
  %vm463 = vcmp.gt.s32.totalorder 0, %v462
  %v464 = vsel %vm463, 0, %v462
  %v465 = vsub.s32 32, %v464
  %v466 = vshll.u32 %v457, %v464
  %v467 = vshrl.u32 %v449, %v465
  %v468 = vor.u32 %v466, %v467
  %v469 = vsub.s32 4294967266, %v464
  %v470 = vadd.s32 %v469, 127
  %v471 = vshll.u32 %v470, 23
  %v472 = vor.u32 4788187, %v471
  %v473 = vand.u32 2147483647, %v472
  %v475 = vcvt.s32.f32 %v468
  %v476 = vmul.f32 %v475, %v473
  %v477 = vxor.u32 %v476, 2147483648
  %v478 = vsel %vm395, %v477, %v476
  %v479 = vsub.s32 4, %v455
  %v480 = vsel %vm395, %v479, %v455
  %v481 = vsel %vm394, %v71, %v478
  %v482 = vsel %vm394, 0, %v480
  %v483 = vcosq.f32.pop %v481
  %v484 = vsinq.f32.pop %v481
  %vm485 = vweird.f32 %v71
  %v486 = vand.u32 %v482, 3
  %vm487 = vcmp.lt.s32.totalorder %v486, 2
  %vm488 = vcmp.eq.s32.totalorder %v486, 0
  %v489 = vxor.u32 %v484, 2147483648
  %v490 = vsel %vm488, %v483, %v489
  %vm491 = vcmp.eq.s32.totalorder %v486, 2
  %v492 = vxor.u32 %v483, 2147483648
  %v493 = vsel %vm491, %v492, %v484
  %v494 = vsel %vm487, %v490, %v493
  %v495 = vsel %vm485, nan, %v494
  %v496 = vand.u32 2147483647, %v72
  %vm497 = vcmp.le.f32.partialorder %v496, 0.7853982
  %vm498 = vcmp.lt.s32.totalorder %v72, 0
  %v499 = vand.u32 %v72, 2139095040
  %v500 = vshrl.u32 %v499, 23
  %v501 = vsub.s32 %v500, 127
  %v502 = vand.u32 2147483647, %v72
  %v503 = vand.u32 %v502, 8388607
  %v504 = vor.u32 %v503, 8388608
  %v505 = vsub.s32 0, %v504
  %v506 = vadd.s32 %v501, 1
  %vm507 = vcmp.gt.s32.totalorder %v506, 0
  %v508 = vsel %vm507, %v506, 0
  %v509 = vshrl.u32 %v508, 5
  %v510 = vand.u32 %v508, 31
  %v511 = vsub.s32 32, %v510
  %v512 = vshrl.u32 683565275, %v511
  %v513 = vshll.u32 683565275, %v510
  %v514 = vshrl.u32 2475754826, %v511
  %v515 = vor.u32 %v513, %v514
  %v516 = vshll.u32 2475754826, %v510
  %v517 = vshrl.u32 2131351028, %v511
  %v518 = vor.u32 %v516, %v517
  %v519 = vshll.u32 2131351028, %v510
  %v520 = vshrl.u32 2102212464, %v511
  %v521 = vor.u32 %v519, %v520
  %v522 = vshll.u32 2102212464, %v510
  %v523 = vshrl.u32 920167782, %v511
  %v524 = vor.u32 %v522, %v523
  %v525 = vshll.u32 920167782, %v510
  %v526 = vshrl.u32 1326507024, %v511
  %v527 = vor.u32 %v525, %v526
  %vm528 = vcmp.lt.s32.totalorder %v509, 1
  %vm529 = vcmp.lt.s32.totalorder %v509, 2
  %vm530 = vcmp.lt.s32.totalorder %v509, 3
  %vm531 = vcmp.lt.s32.totalorder %v509, 4
  %v532 = vsel %vm528, %v512, %v515
  %v533 = vsel %vm531, %v521, 2102212464
  %v534 = vsel %vm530, %v518, %v533
  %v535 = vsel %vm529, %v532, %v534
  %v536 = vsel %vm528, %v515, %v518
  %v537 = vsel %vm531, %v524, 920167782
  %v538 = vsel %vm530, %v521, %v537
  %v539 = vsel %vm529, %v536, %v538
  %v540 = vsel %vm528, %v518, %v521
  %v541 = vsel %vm531, %v527, 1326507024
  %v542 = vsel %vm530, %v524, %v541
  %v543 = vsel %vm529, %v540, %v542
  %v544 = vshll.u32 %v504, 8
  %v545 = vmul.u32.u64.compose %v544, %v543
  %v546 = vextract.low.u32 %v545
  %v547 = vextract.high.u32 %v545
  %v548 = vmul.u32.u64.compose %v544, %v539
  %v549 = vextract.low.u32 %v548
  %v550 = vextract.high.u32 %v548
  %v551 = vmul.u32 %v544, %v535
  %v552 = vadd.s32 %v547, %v549
  %vm553 = vc.u32 %v547, %v549
  %v554 = vadd.s32 %v550, 1
  %v555 = vsel %vm553, %v554, %v550
  %v556 = vadd.s32 %v551, %v555
  %v557 = vadd.s32 %v556, 536870912
  %v558 = vshrl.u32 %v557, 30
  %v559 = vshll.u32 %v558, 30
  %v560 = vsub.s32 %v556, %v559
  %vm561 = vcmp.lt.s32.totalorder %v560, 0
  %v562 = vsub.s32 0, %v560
  %v563 = vsel %vm561, %v562, %v560
  %v564 = vclz %v563
  %v565 = vsub.s32 %v564, 2
  %vm566 = vcmp.gt.s32.totalorder 0, %v565
  %v567 = vsel %vm566, 0, %v565
  %v568 = vsub.s32 32, %v567
  %v569 = vshll.u32 %v560, %v567
  %v570 = vshrl.u32 %v552, %v568
  %v571 = vor.u32 %v569, %v570
  %v572 = vsub.s32 4294967266, %v567
  %v573 = vadd.s32 %v572, 127
  %v574 = vshll.u32 %v573, 23
  %v575 = vor.u32 4788187, %v574
  %v576 = vand.u32 2147483647, %v575
  %v578 = vcvt.s32.f32 %v571
  %v579 = vmul.f32 %v578, %v576
  %v580 = vxor.u32 %v579, 2147483648
  %v581 = vsel %vm498, %v580, %v579
  %v582 = vsub.s32 4, %v558
  %v583 = vsel %vm498, %v582, %v558
  %v584 = vsel %vm497, %v72, %v581
  %v585 = vsel %vm497, 0, %v583
  %v586 = vcosq.f32.pop %v584
  %v587 = vsinq.f32.pop %v584
  %vm588 = vweird.f32 %v72
  %v589 = vand.u32 %v585, 3
  %vm590 = vcmp.lt.s32.totalorder %v589, 2
  %vm591 = vcmp.eq.s32.totalorder %v589, 0
  %v592 = vxor.u32 %v587, 2147483648
  %v593 = vsel %vm591, %v586, %v592
  %vm594 = vcmp.eq.s32.totalorder %v589, 2
  %v595 = vxor.u32 %v586, 2147483648
  %v596 = vsel %vm594, %v595, %v587
  %v597 = vsel %vm590, %v593, %v596
  %v598 = vsel %vm588, nan, %v597
  %v599 = vand.u32 2147483647, %v73
  %vm600 = vcmp.le.f32.partialorder %v599, 0.7853982
  %vm601 = vcmp.lt.s32.totalorder %v73, 0
  %v602 = vand.u32 %v73, 2139095040
  %v603 = vshrl.u32 %v602, 23
  %v604 = vsub.s32 %v603, 127
  %v605 = vand.u32 2147483647, %v73
  %v606 = vand.u32 %v605, 8388607
  %v607 = vor.u32 %v606, 8388608
  %v608 = vsub.s32 0, %v607
  %v609 = vadd.s32 %v604, 1
  %vm610 = vcmp.gt.s32.totalorder %v609, 0
  %v611 = vsel %vm610, %v609, 0
  %v612 = vshrl.u32 %v611, 5
  %v613 = vand.u32 %v611, 31
  %v614 = vsub.s32 32, %v613
  %v615 = vshrl.u32 683565275, %v614
  %v616 = vshll.u32 683565275, %v613
  %v617 = vshrl.u32 2475754826, %v614
  %v618 = vor.u32 %v616, %v617
  %v619 = vshll.u32 2475754826, %v613
  %v620 = vshrl.u32 2131351028, %v614
  %v621 = vor.u32 %v619, %v620
  %v622 = vshll.u32 2131351028, %v613
  %v623 = vshrl.u32 2102212464, %v614
  %v624 = vor.u32 %v622, %v623
  %v625 = vshll.u32 2102212464, %v613
  %v626 = vshrl.u32 920167782, %v614
  %v627 = vor.u32 %v625, %v626
  %v628 = vshll.u32 920167782, %v613
  %v629 = vshrl.u32 1326507024, %v614
  %v630 = vor.u32 %v628, %v629
  %vm631 = vcmp.lt.s32.totalorder %v612, 1
  %vm632 = vcmp.lt.s32.totalorder %v612, 2
  %vm633 = vcmp.lt.s32.totalorder %v612, 3
  %vm634 = vcmp.lt.s32.totalorder %v612, 4
  %v635 = vsel %vm631, %v615, %v618
  %v636 = vsel %vm634, %v624, 2102212464
  %v637 = vsel %vm633, %v621, %v636
  %v638 = vsel %vm632, %v635, %v637
  %v639 = vsel %vm631, %v618, %v621
  %v640 = vsel %vm634, %v627, 920167782
  %v641 = vsel %vm633, %v624, %v640
  %v642 = vsel %vm632, %v639, %v641
  %v643 = vsel %vm631, %v621, %v624
  %v644 = vsel %vm634, %v630, 1326507024
  %v645 = vsel %vm633, %v627, %v644
  %v646 = vsel %vm632, %v643, %v645
  %v647 = vshll.u32 %v607, 8
  %v648 = vmul.u32.u64.compose %v647, %v646
  %v649 = vextract.low.u32 %v648
  %v650 = vextract.high.u32 %v648
  %v651 = vmul.u32.u64.compose %v647, %v642
  %v652 = vextract.low.u32 %v651
  %v653 = vextract.high.u32 %v651
  %v654 = vmul.u32 %v647, %v638
  %v655 = vadd.s32 %v650, %v652
  %vm656 = vc.u32 %v650, %v652
  %v657 = vadd.s32 %v653, 1
  %v658 = vsel %vm656, %v657, %v653
  %v659 = vadd.s32 %v654, %v658
  %v660 = vadd.s32 %v659, 536870912
  %v661 = vshrl.u32 %v660, 30
  %v662 = vshll.u32 %v661, 30
  %v663 = vsub.s32 %v659, %v662
  %vm664 = vcmp.lt.s32.totalorder %v663, 0
  %v665 = vsub.s32 0, %v663
  %v666 = vsel %vm664, %v665, %v663
  %v667 = vclz %v666
  %v668 = vsub.s32 %v667, 2
  %vm669 = vcmp.gt.s32.totalorder 0, %v668
  %v670 = vsel %vm669, 0, %v668
  %v671 = vsub.s32 32, %v670
  %v672 = vshll.u32 %v663, %v670
  %v673 = vshrl.u32 %v655, %v671
  %v674 = vor.u32 %v672, %v673
  %v675 = vsub.s32 4294967266, %v670
  %v676 = vadd.s32 %v675, 127
  %v677 = vshll.u32 %v676, 23
  %v678 = vor.u32 4788187, %v677
  %v679 = vand.u32 2147483647, %v678
  %v681 = vcvt.s32.f32 %v674
  %v682 = vmul.f32 %v681, %v679
  %v683 = vxor.u32 %v682, 2147483648
  %v684 = vsel %vm601, %v683, %v682
  %v685 = vsub.s32 4, %v661
  %v686 = vsel %vm601, %v685, %v661
  %v687 = vsel %vm600, %v73, %v684
  %v688 = vsel %vm600, 0, %v686
  %v689 = vcosq.f32.pop %v687
  %v690 = vsinq.f32.pop %v687
  %vm691 = vweird.f32 %v73
  %v692 = vand.u32 %v688, 3
  %vm693 = vcmp.lt.s32.totalorder %v692, 2
  %vm694 = vcmp.eq.s32.totalorder %v692, 0
  %v695 = vxor.u32 %v690, 2147483648
  %v696 = vsel %vm694, %v689, %v695
  %vm697 = vcmp.eq.s32.totalorder %v692, 2
  %v698 = vxor.u32 %v689, 2147483648
  %v699 = vsel %vm697, %v698, %v690
  %v700 = vsel %vm693, %v696, %v699
  %v701 = vsel %vm691, nan, %v700
  %v702 = vand.u32 2147483647, %v74
  %vm703 = vcmp.le.f32.partialorder %v702, 0.7853982
  %vm704 = vcmp.lt.s32.totalorder %v74, 0
  %v705 = vand.u32 %v74, 2139095040
  %v706 = vshrl.u32 %v705, 23
  %v707 = vsub.s32 %v706, 127
  %v708 = vand.u32 2147483647, %v74
  %v709 = vand.u32 %v708, 8388607
  %v710 = vor.u32 %v709, 8388608
  %v711 = vsub.s32 0, %v710
  %v712 = vadd.s32 %v707, 1
  %vm713 = vcmp.gt.s32.totalorder %v712, 0
  %v714 = vsel %vm713, %v712, 0
  %v715 = vshrl.u32 %v714, 5
  %v716 = vand.u32 %v714, 31
  %v717 = vsub.s32 32, %v716
  %v718 = vshrl.u32 683565275, %v717
  %v719 = vshll.u32 683565275, %v716
  %v720 = vshrl.u32 2475754826, %v717
  %v721 = vor.u32 %v719, %v720
  %v722 = vshll.u32 2475754826, %v716
  %v723 = vshrl.u32 2131351028, %v717
  %v724 = vor.u32 %v722, %v723
  %v725 = vshll.u32 2131351028, %v716
  %v726 = vshrl.u32 2102212464, %v717
  %v727 = vor.u32 %v725, %v726
  %v728 = vshll.u32 2102212464, %v716
  %v729 = vshrl.u32 920167782, %v717
  %v730 = vor.u32 %v728, %v729
  %v731 = vshll.u32 920167782, %v716
  %v732 = vshrl.u32 1326507024, %v717
  %v733 = vor.u32 %v731, %v732
  %vm734 = vcmp.lt.s32.totalorder %v715, 1
  %vm735 = vcmp.lt.s32.totalorder %v715, 2
  %vm736 = vcmp.lt.s32.totalorder %v715, 3
  %vm737 = vcmp.lt.s32.totalorder %v715, 4
  %v738 = vsel %vm734, %v718, %v721
  %v739 = vsel %vm737, %v727, 2102212464
  %v740 = vsel %vm736, %v724, %v739
  %v741 = vsel %vm735, %v738, %v740
  %v742 = vsel %vm734, %v721, %v724
  %v743 = vsel %vm737, %v730, 920167782
  %v744 = vsel %vm736, %v727, %v743
  %v745 = vsel %vm735, %v742, %v744
  %v746 = vsel %vm734, %v724, %v727
  %v747 = vsel %vm737, %v733, 1326507024
  %v748 = vsel %vm736, %v730, %v747
  %v749 = vsel %vm735, %v746, %v748
  %v750 = vshll.u32 %v710, 8
  %v751 = vmul.u32.u64.compose %v750, %v749
  %v752 = vextract.low.u32 %v751
  %v753 = vextract.high.u32 %v751
  %v754 = vmul.u32.u64.compose %v750, %v745
  %v755 = vextract.low.u32 %v754
  %v756 = vextract.high.u32 %v754
  %v757 = vmul.u32 %v750, %v741
  %v758 = vadd.s32 %v753, %v755
  %vm759 = vc.u32 %v753, %v755
  %v760 = vadd.s32 %v756, 1
  %v761 = vsel %vm759, %v760, %v756
  %v762 = vadd.s32 %v757, %v761
  %v763 = vadd.s32 %v762, 536870912
  %v764 = vshrl.u32 %v763, 30
  %v765 = vshll.u32 %v764, 30
  %v766 = vsub.s32 %v762, %v765
  %vm767 = vcmp.lt.s32.totalorder %v766, 0
  %v768 = vsub.s32 0, %v766
  %v769 = vsel %vm767, %v768, %v766
  %v770 = vclz %v769
  %v771 = vsub.s32 %v770, 2
  %vm772 = vcmp.gt.s32.totalorder 0, %v771
  %v773 = vsel %vm772, 0, %v771
  %v774 = vsub.s32 32, %v773
  %v775 = vshll.u32 %v766, %v773
  %v776 = vshrl.u32 %v758, %v774
  %v777 = vor.u32 %v775, %v776
  %v778 = vsub.s32 4294967266, %v773
  %v779 = vadd.s32 %v778, 127
  %v780 = vshll.u32 %v779, 23
  %v781 = vor.u32 4788187, %v780
  %v782 = vand.u32 2147483647, %v781
  %v784 = vcvt.s32.f32 %v777
  %v785 = vmul.f32 %v784, %v782
  %v786 = vxor.u32 %v785, 2147483648
  %v787 = vsel %vm704, %v786, %v785
  %v788 = vsub.s32 4, %v764
  %v789 = vsel %vm704, %v788, %v764
  %v790 = vsel %vm703, %v74, %v787
  %v791 = vsel %vm703, 0, %v789
  %v792 = vcosq.f32.pop %v790
  %v793 = vsinq.f32.pop %v790
  %vm794 = vweird.f32 %v74
  %v795 = vand.u32 %v791, 3
  %vm796 = vcmp.lt.s32.totalorder %v795, 2
  %vm797 = vcmp.eq.s32.totalorder %v795, 0
  %v798 = vxor.u32 %v793, 2147483648
  %v799 = vsel %vm797, %v792, %v798
  %vm800 = vcmp.eq.s32.totalorder %v795, 2
  %v801 = vxor.u32 %v792, 2147483648
  %v802 = vsel %vm800, %v801, %v793
  %v803 = vsel %vm796, %v799, %v802
  %v804 = vsel %vm794, nan, %v803
  %v805 = vand.u32 2147483647, %v75
  %vm806 = vcmp.le.f32.partialorder %v805, 0.7853982
  %vm807 = vcmp.lt.s32.totalorder %v75, 0
  %v808 = vand.u32 %v75, 2139095040
  %v809 = vshrl.u32 %v808, 23
  %v810 = vsub.s32 %v809, 127
  %v811 = vand.u32 2147483647, %v75
  %v812 = vand.u32 %v811, 8388607
  %v813 = vor.u32 %v812, 8388608
  %v814 = vsub.s32 0, %v813
  %v815 = vadd.s32 %v810, 1
  %vm816 = vcmp.gt.s32.totalorder %v815, 0
  %v817 = vsel %vm816, %v815, 0
  %v818 = vshrl.u32 %v817, 5
  %v819 = vand.u32 %v817, 31
  %v820 = vsub.s32 32, %v819
  %v821 = vshrl.u32 683565275, %v820
  %v822 = vshll.u32 683565275, %v819
  %v823 = vshrl.u32 2475754826, %v820
  %v824 = vor.u32 %v822, %v823
  %v825 = vshll.u32 2475754826, %v819
  %v826 = vshrl.u32 2131351028, %v820
  %v827 = vor.u32 %v825, %v826
  %v828 = vshll.u32 2131351028, %v819
  %v829 = vshrl.u32 2102212464, %v820
  %v830 = vor.u32 %v828, %v829
  %v831 = vshll.u32 2102212464, %v819
  %v832 = vshrl.u32 920167782, %v820
  %v833 = vor.u32 %v831, %v832
  %v834 = vshll.u32 920167782, %v819
  %v835 = vshrl.u32 1326507024, %v820
  %v836 = vor.u32 %v834, %v835
  %vm837 = vcmp.lt.s32.totalorder %v818, 1
  %vm838 = vcmp.lt.s32.totalorder %v818, 2
  %vm839 = vcmp.lt.s32.totalorder %v818, 3
  %vm840 = vcmp.lt.s32.totalorder %v818, 4
  %v841 = vsel %vm837, %v821, %v824
  %v842 = vsel %vm840, %v830, 2102212464
  %v843 = vsel %vm839, %v827, %v842
  %v844 = vsel %vm838, %v841, %v843
  %v845 = vsel %vm837, %v824, %v827
  %v846 = vsel %vm840, %v833, 920167782
  %v847 = vsel %vm839, %v830, %v846
  %v848 = vsel %vm838, %v845, %v847
  %v849 = vsel %vm837, %v827, %v830
  %v850 = vsel %vm840, %v836, 1326507024
  %v851 = vsel %vm839, %v833, %v850
  %v852 = vsel %vm838, %v849, %v851
  %v853 = vshll.u32 %v813, 8
  %v854 = vmul.u32.u64.compose %v853, %v852
  %v855 = vextract.low.u32 %v854
  %v856 = vextract.high.u32 %v854
  %v857 = vmul.u32.u64.compose %v853, %v848
  %v858 = vextract.low.u32 %v857
  %v859 = vextract.high.u32 %v857
  %v860 = vmul.u32 %v853, %v844
  %v861 = vadd.s32 %v856, %v858
  %vm862 = vc.u32 %v856, %v858
  %v863 = vadd.s32 %v859, 1
  %v864 = vsel %vm862, %v863, %v859
  %v865 = vadd.s32 %v860, %v864
  %v866 = vadd.s32 %v865, 536870912
  %v867 = vshrl.u32 %v866, 30
  %v868 = vshll.u32 %v867, 30
  %v869 = vsub.s32 %v865, %v868
  %vm870 = vcmp.lt.s32.totalorder %v869, 0
  %v871 = vsub.s32 0, %v869
  %v872 = vsel %vm870, %v871, %v869
  %v873 = vclz %v872
  %v874 = vsub.s32 %v873, 2
  %vm875 = vcmp.gt.s32.totalorder 0, %v874
  %v876 = vsel %vm875, 0, %v874
  %v877 = vsub.s32 32, %v876
  %v878 = vshll.u32 %v869, %v876
  %v879 = vshrl.u32 %v861, %v877
  %v880 = vor.u32 %v878, %v879
  %v881 = vsub.s32 4294967266, %v876
  %v882 = vadd.s32 %v881, 127
  %v883 = vshll.u32 %v882, 23
  %v884 = vor.u32 4788187, %v883
  %v885 = vand.u32 2147483647, %v884
  %v887 = vcvt.s32.f32 %v880
  %v888 = vmul.f32 %v887, %v885
  %v889 = vxor.u32 %v888, 2147483648
  %v890 = vsel %vm807, %v889, %v888
  %v891 = vsub.s32 4, %v867
  %v892 = vsel %vm807, %v891, %v867
  %v893 = vsel %vm806, %v75, %v890
  %v894 = vsel %vm806, 0, %v892
  %v895 = vcosq.f32.pop %v893
  %v896 = vsinq.f32.pop %v893
  %vm897 = vweird.f32 %v75
  %v898 = vand.u32 %v894, 3
  %vm899 = vcmp.lt.s32.totalorder %v898, 2
  %vm900 = vcmp.eq.s32.totalorder %v898, 0
  %v901 = vxor.u32 %v896, 2147483648
  %v902 = vsel %vm900, %v895, %v901
  %vm903 = vcmp.eq.s32.totalorder %v898, 2
  %v904 = vxor.u32 %v895, 2147483648
  %v905 = vsel %vm903, %v904, %v896
  %v906 = vsel %vm899, %v902, %v905
  %v907 = vsel %vm897, nan, %v906
  %v908 = vand.u32 2147483647, %v76
  %vm909 = vcmp.le.f32.partialorder %v908, 0.7853982
  %vm910 = vcmp.lt.s32.totalorder %v76, 0
  %v911 = vand.u32 %v76, 2139095040
  %v912 = vshrl.u32 %v911, 23
  %v913 = vsub.s32 %v912, 127
  %v914 = vand.u32 2147483647, %v76
  %v915 = vand.u32 %v914, 8388607
  %v916 = vor.u32 %v915, 8388608
  %v917 = vsub.s32 0, %v916
  %v918 = vadd.s32 %v913, 1
  %vm919 = vcmp.gt.s32.totalorder %v918, 0
  %v920 = vsel %vm919, %v918, 0
  %v921 = vshrl.u32 %v920, 5
  %v922 = vand.u32 %v920, 31
  %v923 = vsub.s32 32, %v922
  %v924 = vshrl.u32 683565275, %v923
  %v925 = vshll.u32 683565275, %v922
  %v926 = vshrl.u32 2475754826, %v923
  %v927 = vor.u32 %v925, %v926
  %v928 = vshll.u32 2475754826, %v922
  %v929 = vshrl.u32 2131351028, %v923
  %v930 = vor.u32 %v928, %v929
  %v931 = vshll.u32 2131351028, %v922
  %v932 = vshrl.u32 2102212464, %v923
  %v933 = vor.u32 %v931, %v932
  %v934 = vshll.u32 2102212464, %v922
  %v935 = vshrl.u32 920167782, %v923
  %v936 = vor.u32 %v934, %v935
  %v937 = vshll.u32 920167782, %v922
  %v938 = vshrl.u32 1326507024, %v923
  %v939 = vor.u32 %v937, %v938
  %vm940 = vcmp.lt.s32.totalorder %v921, 1
  %vm941 = vcmp.lt.s32.totalorder %v921, 2
  %vm942 = vcmp.lt.s32.totalorder %v921, 3
  %vm943 = vcmp.lt.s32.totalorder %v921, 4
  %v944 = vsel %vm940, %v924, %v927
  %v945 = vsel %vm943, %v933, 2102212464
  %v946 = vsel %vm942, %v930, %v945
  %v947 = vsel %vm941, %v944, %v946
  %v948 = vsel %vm940, %v927, %v930
  %v949 = vsel %vm943, %v936, 920167782
  %v950 = vsel %vm942, %v933, %v949
  %v951 = vsel %vm941, %v948, %v950
  %v952 = vsel %vm940, %v930, %v933
  %v953 = vsel %vm943, %v939, 1326507024
  %v954 = vsel %vm942, %v936, %v953
  %v955 = vsel %vm941, %v952, %v954
  %v956 = vshll.u32 %v916, 8
  %v957 = vmul.u32.u64.compose %v956, %v955
  %v958 = vextract.low.u32 %v957
  %v959 = vextract.high.u32 %v957
  %v960 = vmul.u32.u64.compose %v956, %v951
  %v961 = vextract.low.u32 %v960
  %v962 = vextract.high.u32 %v960
  %v963 = vmul.u32 %v956, %v947
  %v964 = vadd.s32 %v959, %v961
  %vm965 = vc.u32 %v959, %v961
  %v966 = vadd.s32 %v962, 1
  %v967 = vsel %vm965, %v966, %v962
  %v968 = vadd.s32 %v963, %v967
  %v969 = vadd.s32 %v968, 536870912
  %v970 = vshrl.u32 %v969, 30
  %v971 = vshll.u32 %v970, 30
  %v972 = vsub.s32 %v968, %v971
  %vm973 = vcmp.lt.s32.totalorder %v972, 0
  %v974 = vsub.s32 0, %v972
  %v975 = vsel %vm973, %v974, %v972
  %v976 = vclz %v975
  %v977 = vsub.s32 %v976, 2
  %vm978 = vcmp.gt.s32.totalorder 0, %v977
  %v979 = vsel %vm978, 0, %v977
  %v980 = vsub.s32 32, %v979
  %v981 = vshll.u32 %v972, %v979
  %v982 = vshrl.u32 %v964, %v980
  %v983 = vor.u32 %v981, %v982
  %v984 = vsub.s32 4294967266, %v979
  %v985 = vadd.s32 %v984, 127
  %v986 = vshll.u32 %v985, 23
  %v987 = vor.u32 4788187, %v986
  %v988 = vand.u32 2147483647, %v987
  %v990 = vcvt.s32.f32 %v983
  %v991 = vmul.f32 %v990, %v988
  %v992 = vxor.u32 %v991, 2147483648
  %v993 = vsel %vm910, %v992, %v991
  %v994 = vsub.s32 4, %v970
  %v995 = vsel %vm910, %v994, %v970
  %v996 = vsel %vm909, %v76, %v993
  %v997 = vsel %vm909, 0, %v995
  %v998 = vcosq.f32.pop %v996
  %v999 = vsinq.f32.pop %v996
  %vm1000 = vweird.f32 %v76
  %v1001 = vand.u32 %v997, 3
  %vm1002 = vcmp.lt.s32.totalorder %v1001, 2
  %vm1003 = vcmp.eq.s32.totalorder %v1001, 0
  %v1004 = vxor.u32 %v999, 2147483648
  %v1005 = vsel %vm1003, %v998, %v1004
  %vm1006 = vcmp.eq.s32.totalorder %v1001, 2
  %v1007 = vxor.u32 %v998, 2147483648
  %v1008 = vsel %vm1006, %v1007, %v999
  %v1009 = vsel %vm1002, %v1005, %v1008
  %v1010 = vsel %vm1000, nan, %v1009
  %v1011 = vand.u32 2147483647, %v77
  %vm1012 = vcmp.le.f32.partialorder %v1011, 0.7853982
  %vm1013 = vcmp.lt.s32.totalorder %v77, 0
  %v1014 = vand.u32 %v77, 2139095040
  %v1015 = vshrl.u32 %v1014, 23
  %v1016 = vsub.s32 %v1015, 127
  %v1017 = vand.u32 2147483647, %v77
  %v1018 = vand.u32 %v1017, 8388607
  %v1019 = vor.u32 %v1018, 8388608
  %v1020 = vsub.s32 0, %v1019
  %v1021 = vadd.s32 %v1016, 1
  %vm1022 = vcmp.gt.s32.totalorder %v1021, 0
  %v1023 = vsel %vm1022, %v1021, 0
  %v1024 = vshrl.u32 %v1023, 5
  %v1025 = vand.u32 %v1023, 31
  %v1026 = vsub.s32 32, %v1025
  %v1027 = vshrl.u32 683565275, %v1026
  %v1028 = vshll.u32 683565275, %v1025
  %v1029 = vshrl.u32 2475754826, %v1026
  %v1030 = vor.u32 %v1028, %v1029
  %v1031 = vshll.u32 2475754826, %v1025
  %v1032 = vshrl.u32 2131351028, %v1026
  %v1033 = vor.u32 %v1031, %v1032
  %v1034 = vshll.u32 2131351028, %v1025
  %v1035 = vshrl.u32 2102212464, %v1026
  %v1036 = vor.u32 %v1034, %v1035
  %v1037 = vshll.u32 2102212464, %v1025
  %v1038 = vshrl.u32 920167782, %v1026
  %v1039 = vor.u32 %v1037, %v1038
  %v1040 = vshll.u32 920167782, %v1025
  %v1041 = vshrl.u32 1326507024, %v1026
  %v1042 = vor.u32 %v1040, %v1041
  %vm1043 = vcmp.lt.s32.totalorder %v1024, 1
  %vm1044 = vcmp.lt.s32.totalorder %v1024, 2
  %vm1045 = vcmp.lt.s32.totalorder %v1024, 3
  %vm1046 = vcmp.lt.s32.totalorder %v1024, 4
  %v1047 = vsel %vm1043, %v1027, %v1030
  %v1048 = vsel %vm1046, %v1036, 2102212464
  %v1049 = vsel %vm1045, %v1033, %v1048
  %v1050 = vsel %vm1044, %v1047, %v1049
  %v1051 = vsel %vm1043, %v1030, %v1033
  %v1052 = vsel %vm1046, %v1039, 920167782
  %v1053 = vsel %vm1045, %v1036, %v1052
  %v1054 = vsel %vm1044, %v1051, %v1053
  %v1055 = vsel %vm1043, %v1033, %v1036
  %v1056 = vsel %vm1046, %v1042, 1326507024
  %v1057 = vsel %vm1045, %v1039, %v1056
  %v1058 = vsel %vm1044, %v1055, %v1057
  %v1059 = vshll.u32 %v1019, 8
  %v1060 = vmul.u32.u64.compose %v1059, %v1058
  %v1061 = vextract.low.u32 %v1060
  %v1062 = vextract.high.u32 %v1060
  %v1063 = vmul.u32.u64.compose %v1059, %v1054
  %v1064 = vextract.low.u32 %v1063
  %v1065 = vextract.high.u32 %v1063
  %v1066 = vmul.u32 %v1059, %v1050
  %v1067 = vadd.s32 %v1062, %v1064
  %vm1068 = vc.u32 %v1062, %v1064
  %v1069 = vadd.s32 %v1065, 1
  %v1070 = vsel %vm1068, %v1069, %v1065
  %v1071 = vadd.s32 %v1066, %v1070
  %v1072 = vadd.s32 %v1071, 536870912
  %v1073 = vshrl.u32 %v1072, 30
  %v1074 = vshll.u32 %v1073, 30
  %v1075 = vsub.s32 %v1071, %v1074
  %vm1076 = vcmp.lt.s32.totalorder %v1075, 0
  %v1077 = vsub.s32 0, %v1075
  %v1078 = vsel %vm1076, %v1077, %v1075
  %v1079 = vclz %v1078
  %v1080 = vsub.s32 %v1079, 2
  %vm1081 = vcmp.gt.s32.totalorder 0, %v1080
  %v1082 = vsel %vm1081, 0, %v1080
  %v1083 = vsub.s32 32, %v1082
  %v1084 = vshll.u32 %v1075, %v1082
  %v1085 = vshrl.u32 %v1067, %v1083
  %v1086 = vor.u32 %v1084, %v1085
  %v1087 = vsub.s32 4294967266, %v1082
  %v1088 = vadd.s32 %v1087, 127
  %v1089 = vshll.u32 %v1088, 23
  %v1090 = vor.u32 4788187, %v1089
  %v1091 = vand.u32 2147483647, %v1090
  %v1093 = vcvt.s32.f32 %v1086
  %v1094 = vmul.f32 %v1093, %v1091
  %v1095 = vxor.u32 %v1094, 2147483648
  %v1096 = vsel %vm1013, %v1095, %v1094
  %v1097 = vsub.s32 4, %v1073
  %v1098 = vsel %vm1013, %v1097, %v1073
  %v1099 = vsel %vm1012, %v77, %v1096
  %v1100 = vsel %vm1012, 0, %v1098
  %v1101 = vcosq.f32.pop %v1099
  %v1102 = vsinq.f32.pop %v1099
  %vm1103 = vweird.f32 %v77
  %v1104 = vand.u32 %v1100, 3
  %vm1105 = vcmp.lt.s32.totalorder %v1104, 2
  %vm1106 = vcmp.eq.s32.totalorder %v1104, 0
  %v1107 = vxor.u32 %v1102, 2147483648
  %v1108 = vsel %vm1106, %v1101, %v1107
  %vm1109 = vcmp.eq.s32.totalorder %v1104, 2
  %v1110 = vxor.u32 %v1101, 2147483648
  %v1111 = vsel %vm1109, %v1110, %v1102
  %v1112 = vsel %vm1105, %v1108, %v1111
  %v1113 = vsel %vm1103, nan, %v1112
  %v1114 = vand.u32 2147483647, %v78
  %vm1115 = vcmp.le.f32.partialorder %v1114, 0.7853982
  %vm1116 = vcmp.lt.s32.totalorder %v78, 0
  %v1117 = vand.u32 %v78, 2139095040
  %v1118 = vshrl.u32 %v1117, 23
  %v1119 = vsub.s32 %v1118, 127
  %v1120 = vand.u32 2147483647, %v78
  %v1121 = vand.u32 %v1120, 8388607
  %v1122 = vor.u32 %v1121, 8388608
  %v1123 = vsub.s32 0, %v1122
  %v1124 = vadd.s32 %v1119, 1
  %vm1125 = vcmp.gt.s32.totalorder %v1124, 0
  %v1126 = vsel %vm1125, %v1124, 0
  %v1127 = vshrl.u32 %v1126, 5
  %v1128 = vand.u32 %v1126, 31
  %v1129 = vsub.s32 32, %v1128
  %v1130 = vshrl.u32 683565275, %v1129
  %v1131 = vshll.u32 683565275, %v1128
  %v1132 = vshrl.u32 2475754826, %v1129
  %v1133 = vor.u32 %v1131, %v1132
  %v1134 = vshll.u32 2475754826, %v1128
  %v1135 = vshrl.u32 2131351028, %v1129
  %v1136 = vor.u32 %v1134, %v1135
  %v1137 = vshll.u32 2131351028, %v1128
  %v1138 = vshrl.u32 2102212464, %v1129
  %v1139 = vor.u32 %v1137, %v1138
  %v1140 = vshll.u32 2102212464, %v1128
  %v1141 = vshrl.u32 920167782, %v1129
  %v1142 = vor.u32 %v1140, %v1141
  %v1143 = vshll.u32 920167782, %v1128
  %v1144 = vshrl.u32 1326507024, %v1129
  %v1145 = vor.u32 %v1143, %v1144
  %vm1146 = vcmp.lt.s32.totalorder %v1127, 1
  %vm1147 = vcmp.lt.s32.totalorder %v1127, 2
  %vm1148 = vcmp.lt.s32.totalorder %v1127, 3
  %vm1149 = vcmp.lt.s32.totalorder %v1127, 4
  %v1150 = vsel %vm1146, %v1130, %v1133
  %v1151 = vsel %vm1149, %v1139, 2102212464
  %v1152 = vsel %vm1148, %v1136, %v1151
  %v1153 = vsel %vm1147, %v1150, %v1152
  %v1154 = vsel %vm1146, %v1133, %v1136
  %v1155 = vsel %vm1149, %v1142, 920167782
  %v1156 = vsel %vm1148, %v1139, %v1155
  %v1157 = vsel %vm1147, %v1154, %v1156
  %v1158 = vsel %vm1146, %v1136, %v1139
  %v1159 = vsel %vm1149, %v1145, 1326507024
  %v1160 = vsel %vm1148, %v1142, %v1159
  %v1161 = vsel %vm1147, %v1158, %v1160
  %v1162 = vshll.u32 %v1122, 8
  %v1163 = vmul.u32.u64.compose %v1162, %v1161
  %v1164 = vextract.low.u32 %v1163
  %v1165 = vextract.high.u32 %v1163
  %v1166 = vmul.u32.u64.compose %v1162, %v1157
  %v1167 = vextract.low.u32 %v1166
  %v1168 = vextract.high.u32 %v1166
  %v1169 = vmul.u32 %v1162, %v1153
  %v1170 = vadd.s32 %v1165, %v1167
  %vm1171 = vc.u32 %v1165, %v1167
  %v1172 = vadd.s32 %v1168, 1
  %v1173 = vsel %vm1171, %v1172, %v1168
  %v1174 = vadd.s32 %v1169, %v1173
  %v1175 = vadd.s32 %v1174, 536870912
  %v1176 = vshrl.u32 %v1175, 30
  %v1177 = vshll.u32 %v1176, 30
  %v1178 = vsub.s32 %v1174, %v1177
  %vm1179 = vcmp.lt.s32.totalorder %v1178, 0
  %v1180 = vsub.s32 0, %v1178
  %v1181 = vsel %vm1179, %v1180, %v1178
  %v1182 = vclz %v1181
  %v1183 = vsub.s32 %v1182, 2
  %vm1184 = vcmp.gt.s32.totalorder 0, %v1183
  %v1185 = vsel %vm1184, 0, %v1183
  %v1186 = vsub.s32 32, %v1185
  %v1187 = vshll.u32 %v1178, %v1185
  %v1188 = vshrl.u32 %v1170, %v1186
  %v1189 = vor.u32 %v1187, %v1188
  %v1190 = vsub.s32 4294967266, %v1185
  %v1191 = vadd.s32 %v1190, 127
  %v1192 = vshll.u32 %v1191, 23
  %v1193 = vor.u32 4788187, %v1192
  %v1194 = vand.u32 2147483647, %v1193
  %v1196 = vcvt.s32.f32 %v1189
  %v1197 = vmul.f32 %v1196, %v1194
  %v1198 = vxor.u32 %v1197, 2147483648
  %v1199 = vsel %vm1116, %v1198, %v1197
  %v1200 = vsub.s32 4, %v1176
  %v1201 = vsel %vm1116, %v1200, %v1176
  %v1202 = vsel %vm1115, %v78, %v1199
  %v1203 = vsel %vm1115, 0, %v1201
  %v1204 = vcosq.f32.pop %v1202
  %v1205 = vsinq.f32.pop %v1202
  %vm1206 = vweird.f32 %v78
  %v1207 = vand.u32 %v1203, 3
  %vm1208 = vcmp.lt.s32.totalorder %v1207, 2
  %vm1209 = vcmp.eq.s32.totalorder %v1207, 0
  %v1210 = vxor.u32 %v1205, 2147483648
  %v1211 = vsel %vm1209, %v1204, %v1210
  %vm1212 = vcmp.eq.s32.totalorder %v1207, 2
  %v1213 = vxor.u32 %v1204, 2147483648
  %v1214 = vsel %vm1212, %v1213, %v1205
  %v1215 = vsel %vm1208, %v1211, %v1214
  %v1216 = vsel %vm1206, nan, %v1215
  %v1217 = vand.u32 2147483647, %v79
  %vm1218 = vcmp.le.f32.partialorder %v1217, 0.7853982
  %vm1219 = vcmp.lt.s32.totalorder %v79, 0
  %v1220 = vand.u32 %v79, 2139095040
  %v1221 = vshrl.u32 %v1220, 23
  %v1222 = vsub.s32 %v1221, 127
  %v1223 = vand.u32 2147483647, %v79
  %v1224 = vand.u32 %v1223, 8388607
  %v1225 = vor.u32 %v1224, 8388608
  %v1226 = vsub.s32 0, %v1225
  %v1227 = vadd.s32 %v1222, 1
  %vm1228 = vcmp.gt.s32.totalorder %v1227, 0
  %v1229 = vsel %vm1228, %v1227, 0
  %v1230 = vshrl.u32 %v1229, 5
  %v1231 = vand.u32 %v1229, 31
  %v1232 = vsub.s32 32, %v1231
  %v1233 = vshrl.u32 683565275, %v1232
  %v1234 = vshll.u32 683565275, %v1231
  %v1235 = vshrl.u32 2475754826, %v1232
  %v1236 = vor.u32 %v1234, %v1235
  %v1237 = vshll.u32 2475754826, %v1231
  %v1238 = vshrl.u32 2131351028, %v1232
  %v1239 = vor.u32 %v1237, %v1238
  %v1240 = vshll.u32 2131351028, %v1231
  %v1241 = vshrl.u32 2102212464, %v1232
  %v1242 = vor.u32 %v1240, %v1241
  %v1243 = vshll.u32 2102212464, %v1231
  %v1244 = vshrl.u32 920167782, %v1232
  %v1245 = vor.u32 %v1243, %v1244
  %v1246 = vshll.u32 920167782, %v1231
  %v1247 = vshrl.u32 1326507024, %v1232
  %v1248 = vor.u32 %v1246, %v1247
  %vm1249 = vcmp.lt.s32.totalorder %v1230, 1
  %vm1250 = vcmp.lt.s32.totalorder %v1230, 2
  %vm1251 = vcmp.lt.s32.totalorder %v1230, 3
  %vm1252 = vcmp.lt.s32.totalorder %v1230, 4
  %v1253 = vsel %vm1249, %v1233, %v1236
  %v1254 = vsel %vm1252, %v1242, 2102212464
  %v1255 = vsel %vm1251, %v1239, %v1254
  %v1256 = vsel %vm1250, %v1253, %v1255
  %v1257 = vsel %vm1249, %v1236, %v1239
  %v1258 = vsel %vm1252, %v1245, 920167782
  %v1259 = vsel %vm1251, %v1242, %v1258
  %v1260 = vsel %vm1250, %v1257, %v1259
  %v1261 = vsel %vm1249, %v1239, %v1242
  %v1262 = vsel %vm1252, %v1248, 1326507024
  %v1263 = vsel %vm1251, %v1245, %v1262
  %v1264 = vsel %vm1250, %v1261, %v1263
  %v1265 = vshll.u32 %v1225, 8
  %v1266 = vmul.u32.u64.compose %v1265, %v1264
  %v1267 = vextract.low.u32 %v1266
  %v1268 = vextract.high.u32 %v1266
  %v1269 = vmul.u32.u64.compose %v1265, %v1260
  %v1270 = vextract.low.u32 %v1269
  %v1271 = vextract.high.u32 %v1269
  %v1272 = vmul.u32 %v1265, %v1256
  %v1273 = vadd.s32 %v1268, %v1270
  %vm1274 = vc.u32 %v1268, %v1270
  %v1275 = vadd.s32 %v1271, 1
  %v1276 = vsel %vm1274, %v1275, %v1271
  %v1277 = vadd.s32 %v1272, %v1276
  %v1278 = vadd.s32 %v1277, 536870912
  %v1279 = vshrl.u32 %v1278, 30
  %v1280 = vshll.u32 %v1279, 30
  %v1281 = vsub.s32 %v1277, %v1280
  %vm1282 = vcmp.lt.s32.totalorder %v1281, 0
  %v1283 = vsub.s32 0, %v1281
  %v1284 = vsel %vm1282, %v1283, %v1281
  %v1285 = vclz %v1284
  %v1286 = vsub.s32 %v1285, 2
  %vm1287 = vcmp.gt.s32.totalorder 0, %v1286
  %v1288 = vsel %vm1287, 0, %v1286
  %v1289 = vsub.s32 32, %v1288
  %v1290 = vshll.u32 %v1281, %v1288
  %v1291 = vshrl.u32 %v1273, %v1289
  %v1292 = vor.u32 %v1290, %v1291
  %v1293 = vsub.s32 4294967266, %v1288
  %v1294 = vadd.s32 %v1293, 127
  %v1295 = vshll.u32 %v1294, 23
  %v1296 = vor.u32 4788187, %v1295
  %v1297 = vand.u32 2147483647, %v1296
  %v1299 = vcvt.s32.f32 %v1292
  %v1300 = vmul.f32 %v1299, %v1297
  %v1301 = vxor.u32 %v1300, 2147483648
  %v1302 = vsel %vm1219, %v1301, %v1300
  %v1303 = vsub.s32 4, %v1279
  %v1304 = vsel %vm1219, %v1303, %v1279
  %v1305 = vsel %vm1218, %v79, %v1302
  %v1306 = vsel %vm1218, 0, %v1304
  %v1307 = vcosq.f32.pop %v1305
  %v1308 = vsinq.f32.pop %v1305
  %vm1309 = vweird.f32 %v79
  %v1310 = vand.u32 %v1306, 3
  %vm1311 = vcmp.lt.s32.totalorder %v1310, 2
  %vm1312 = vcmp.eq.s32.totalorder %v1310, 0
  %v1313 = vxor.u32 %v1308, 2147483648
  %v1314 = vsel %vm1312, %v1307, %v1313
  %vm1315 = vcmp.eq.s32.totalorder %v1310, 2
  %v1316 = vxor.u32 %v1307, 2147483648
  %v1317 = vsel %vm1315, %v1316, %v1308
  %v1318 = vsel %vm1311, %v1314, %v1317
  %v1319 = vsel %vm1309, nan, %v1318
  %v1320 = vand.u32 2147483647, %v80
  %vm1321 = vcmp.le.f32.partialorder %v1320, 0.7853982
  %vm1322 = vcmp.lt.s32.totalorder %v80, 0
  %v1323 = vand.u32 %v80, 2139095040
  %v1324 = vshrl.u32 %v1323, 23
  %v1325 = vsub.s32 %v1324, 127
  %v1326 = vand.u32 2147483647, %v80
  %v1327 = vand.u32 %v1326, 8388607
  %v1328 = vor.u32 %v1327, 8388608
  %v1329 = vsub.s32 0, %v1328
  %v1330 = vadd.s32 %v1325, 1
  %vm1331 = vcmp.gt.s32.totalorder %v1330, 0
  %v1332 = vsel %vm1331, %v1330, 0
  %v1333 = vshrl.u32 %v1332, 5
  %v1334 = vand.u32 %v1332, 31
  %v1335 = vsub.s32 32, %v1334
  %v1336 = vshrl.u32 683565275, %v1335
  %v1337 = vshll.u32 683565275, %v1334
  %v1338 = vshrl.u32 2475754826, %v1335
  %v1339 = vor.u32 %v1337, %v1338
  %v1340 = vshll.u32 2475754826, %v1334
  %v1341 = vshrl.u32 2131351028, %v1335
  %v1342 = vor.u32 %v1340, %v1341
  %v1343 = vshll.u32 2131351028, %v1334
  %v1344 = vshrl.u32 2102212464, %v1335
  %v1345 = vor.u32 %v1343, %v1344
  %v1346 = vshll.u32 2102212464, %v1334
  %v1347 = vshrl.u32 920167782, %v1335
  %v1348 = vor.u32 %v1346, %v1347
  %v1349 = vshll.u32 920167782, %v1334
  %v1350 = vshrl.u32 1326507024, %v1335
  %v1351 = vor.u32 %v1349, %v1350
  %vm1352 = vcmp.lt.s32.totalorder %v1333, 1
  %vm1353 = vcmp.lt.s32.totalorder %v1333, 2
  %vm1354 = vcmp.lt.s32.totalorder %v1333, 3
  %vm1355 = vcmp.lt.s32.totalorder %v1333, 4
  %v1356 = vsel %vm1352, %v1336, %v1339
  %v1357 = vsel %vm1355, %v1345, 2102212464
  %v1358 = vsel %vm1354, %v1342, %v1357
  %v1359 = vsel %vm1353, %v1356, %v1358
  %v1360 = vsel %vm1352, %v1339, %v1342
  %v1361 = vsel %vm1355, %v1348, 920167782
  %v1362 = vsel %vm1354, %v1345, %v1361
  %v1363 = vsel %vm1353, %v1360, %v1362
  %v1364 = vsel %vm1352, %v1342, %v1345
  %v1365 = vsel %vm1355, %v1351, 1326507024
  %v1366 = vsel %vm1354, %v1348, %v1365
  %v1367 = vsel %vm1353, %v1364, %v1366
  %v1368 = vshll.u32 %v1328, 8
  %v1369 = vmul.u32.u64.compose %v1368, %v1367
  %v1370 = vextract.low.u32 %v1369
  %v1371 = vextract.high.u32 %v1369
  %v1372 = vmul.u32.u64.compose %v1368, %v1363
  %v1373 = vextract.low.u32 %v1372
  %v1374 = vextract.high.u32 %v1372
  %v1375 = vmul.u32 %v1368, %v1359
  %v1376 = vadd.s32 %v1371, %v1373
  %vm1377 = vc.u32 %v1371, %v1373
  %v1378 = vadd.s32 %v1374, 1
  %v1379 = vsel %vm1377, %v1378, %v1374
  %v1380 = vadd.s32 %v1375, %v1379
  %v1381 = vadd.s32 %v1380, 536870912
  %v1382 = vshrl.u32 %v1381, 30
  %v1383 = vshll.u32 %v1382, 30
  %v1384 = vsub.s32 %v1380, %v1383
  %vm1385 = vcmp.lt.s32.totalorder %v1384, 0
  %v1386 = vsub.s32 0, %v1384
  %v1387 = vsel %vm1385, %v1386, %v1384
  %v1388 = vclz %v1387
  %v1389 = vsub.s32 %v1388, 2
  %vm1390 = vcmp.gt.s32.totalorder 0, %v1389
  %v1391 = vsel %vm1390, 0, %v1389
  %v1392 = vsub.s32 32, %v1391
  %v1393 = vshll.u32 %v1384, %v1391
  %v1394 = vshrl.u32 %v1376, %v1392
  %v1395 = vor.u32 %v1393, %v1394
  %v1396 = vsub.s32 4294967266, %v1391
  %v1397 = vadd.s32 %v1396, 127
  %v1398 = vshll.u32 %v1397, 23
  %v1399 = vor.u32 4788187, %v1398
  %v1400 = vand.u32 2147483647, %v1399
  %v1402 = vcvt.s32.f32 %v1395
  %v1403 = vmul.f32 %v1402, %v1400
  %v1404 = vxor.u32 %v1403, 2147483648
  %v1405 = vsel %vm1322, %v1404, %v1403
  %v1406 = vsub.s32 4, %v1382
  %v1407 = vsel %vm1322, %v1406, %v1382
  %v1408 = vsel %vm1321, %v80, %v1405
  %v1409 = vsel %vm1321, 0, %v1407
  %v1410 = vcosq.f32.pop %v1408
  %v1411 = vsinq.f32.pop %v1408
  %vm1412 = vweird.f32 %v80
  %v1413 = vand.u32 %v1409, 3
  %vm1414 = vcmp.lt.s32.totalorder %v1413, 2
  %vm1415 = vcmp.eq.s32.totalorder %v1413, 0
  %v1416 = vxor.u32 %v1411, 2147483648
  %v1417 = vsel %vm1415, %v1410, %v1416
  %vm1418 = vcmp.eq.s32.totalorder %v1413, 2
  %v1419 = vxor.u32 %v1410, 2147483648
  %v1420 = vsel %vm1418, %v1419, %v1411
  %v1421 = vsel %vm1414, %v1417, %v1420
  %v1422 = vsel %vm1412, nan, %v1421
  %v1423 = vand.u32 2147483647, %v81
  %vm1424 = vcmp.le.f32.partialorder %v1423, 0.7853982
  %vm1425 = vcmp.lt.s32.totalorder %v81, 0
  %v1426 = vand.u32 %v81, 2139095040
  %v1427 = vshrl.u32 %v1426, 23
  %v1428 = vsub.s32 %v1427, 127
  %v1429 = vand.u32 2147483647, %v81
  %v1430 = vand.u32 %v1429, 8388607
  %v1431 = vor.u32 %v1430, 8388608
  %v1432 = vsub.s32 0, %v1431
  %v1433 = vadd.s32 %v1428, 1
  %vm1434 = vcmp.gt.s32.totalorder %v1433, 0
  %v1435 = vsel %vm1434, %v1433, 0
  %v1436 = vshrl.u32 %v1435, 5
  %v1437 = vand.u32 %v1435, 31
  %v1438 = vsub.s32 32, %v1437
  %v1439 = vshrl.u32 683565275, %v1438
  %v1440 = vshll.u32 683565275, %v1437
  %v1441 = vshrl.u32 2475754826, %v1438
  %v1442 = vor.u32 %v1440, %v1441
  %v1443 = vshll.u32 2475754826, %v1437
  %v1444 = vshrl.u32 2131351028, %v1438
  %v1445 = vor.u32 %v1443, %v1444
  %v1446 = vshll.u32 2131351028, %v1437
  %v1447 = vshrl.u32 2102212464, %v1438
  %v1448 = vor.u32 %v1446, %v1447
  %v1449 = vshll.u32 2102212464, %v1437
  %v1450 = vshrl.u32 920167782, %v1438
  %v1451 = vor.u32 %v1449, %v1450
  %v1452 = vshll.u32 920167782, %v1437
  %v1453 = vshrl.u32 1326507024, %v1438
  %v1454 = vor.u32 %v1452, %v1453
  %vm1455 = vcmp.lt.s32.totalorder %v1436, 1
  %vm1456 = vcmp.lt.s32.totalorder %v1436, 2
  %vm1457 = vcmp.lt.s32.totalorder %v1436, 3
  %vm1458 = vcmp.lt.s32.totalorder %v1436, 4
  %v1459 = vsel %vm1455, %v1439, %v1442
  %v1460 = vsel %vm1458, %v1448, 2102212464
  %v1461 = vsel %vm1457, %v1445, %v1460
  %v1462 = vsel %vm1456, %v1459, %v1461
  %v1463 = vsel %vm1455, %v1442, %v1445
  %v1464 = vsel %vm1458, %v1451, 920167782
  %v1465 = vsel %vm1457, %v1448, %v1464
  %v1466 = vsel %vm1456, %v1463, %v1465
  %v1467 = vsel %vm1455, %v1445, %v1448
  %v1468 = vsel %vm1458, %v1454, 1326507024
  %v1469 = vsel %vm1457, %v1451, %v1468
  %v1470 = vsel %vm1456, %v1467, %v1469
  %v1471 = vshll.u32 %v1431, 8
  %v1472 = vmul.u32.u64.compose %v1471, %v1470
  %v1473 = vextract.low.u32 %v1472
  %v1474 = vextract.high.u32 %v1472
  %v1475 = vmul.u32.u64.compose %v1471, %v1466
  %v1476 = vextract.low.u32 %v1475
  %v1477 = vextract.high.u32 %v1475
  %v1478 = vmul.u32 %v1471, %v1462
  %v1479 = vadd.s32 %v1474, %v1476
  %vm1480 = vc.u32 %v1474, %v1476
  %v1481 = vadd.s32 %v1477, 1
  %v1482 = vsel %vm1480, %v1481, %v1477
  %v1483 = vadd.s32 %v1478, %v1482
  %v1484 = vadd.s32 %v1483, 536870912
  %v1485 = vshrl.u32 %v1484, 30
  %v1486 = vshll.u32 %v1485, 30
  %v1487 = vsub.s32 %v1483, %v1486
  %vm1488 = vcmp.lt.s32.totalorder %v1487, 0
  %v1489 = vsub.s32 0, %v1487
  %v1490 = vsel %vm1488, %v1489, %v1487
  %v1491 = vclz %v1490
  %v1492 = vsub.s32 %v1491, 2
  %vm1493 = vcmp.gt.s32.totalorder 0, %v1492
  %v1494 = vsel %vm1493, 0, %v1492
  %v1495 = vsub.s32 32, %v1494
  %v1496 = vshll.u32 %v1487, %v1494
  %v1497 = vshrl.u32 %v1479, %v1495
  %v1498 = vor.u32 %v1496, %v1497
  %v1499 = vsub.s32 4294967266, %v1494
  %v1500 = vadd.s32 %v1499, 127
  %v1501 = vshll.u32 %v1500, 23
  %v1502 = vor.u32 4788187, %v1501
  %v1503 = vand.u32 2147483647, %v1502
  %v1505 = vcvt.s32.f32 %v1498
  %v1506 = vmul.f32 %v1505, %v1503
  %v1507 = vxor.u32 %v1506, 2147483648
  %v1508 = vsel %vm1425, %v1507, %v1506
  %v1509 = vsub.s32 4, %v1485
  %v1510 = vsel %vm1425, %v1509, %v1485
  %v1511 = vsel %vm1424, %v81, %v1508
  %v1512 = vsel %vm1424, 0, %v1510
  %v1513 = vcosq.f32.pop %v1511
  %v1514 = vsinq.f32.pop %v1511
  %vm1515 = vweird.f32 %v81
  %v1516 = vand.u32 %v1512, 3
  %vm1517 = vcmp.lt.s32.totalorder %v1516, 2
  %vm1518 = vcmp.eq.s32.totalorder %v1516, 0
  %v1519 = vxor.u32 %v1514, 2147483648
  %v1520 = vsel %vm1518, %v1513, %v1519
  %vm1521 = vcmp.eq.s32.totalorder %v1516, 2
  %v1522 = vxor.u32 %v1513, 2147483648
  %v1523 = vsel %vm1521, %v1522, %v1514
  %v1524 = vsel %vm1517, %v1520, %v1523
  %v1525 = vsel %vm1515, nan, %v1524
  %v1526 = vand.u32 2147483647, %v82
  %vm1527 = vcmp.le.f32.partialorder %v1526, 0.7853982
  %vm1528 = vcmp.lt.s32.totalorder %v82, 0
  %v1529 = vand.u32 %v82, 2139095040
  %v1530 = vshrl.u32 %v1529, 23
  %v1531 = vsub.s32 %v1530, 127
  %v1532 = vand.u32 2147483647, %v82
  %v1533 = vand.u32 %v1532, 8388607
  %v1534 = vor.u32 %v1533, 8388608
  %v1535 = vsub.s32 0, %v1534
  %v1536 = vadd.s32 %v1531, 1
  %vm1537 = vcmp.gt.s32.totalorder %v1536, 0
  %v1538 = vsel %vm1537, %v1536, 0
  %v1539 = vshrl.u32 %v1538, 5
  %v1540 = vand.u32 %v1538, 31
  %v1541 = vsub.s32 32, %v1540
  %v1542 = vshrl.u32 683565275, %v1541
  %v1543 = vshll.u32 683565275, %v1540
  %v1544 = vshrl.u32 2475754826, %v1541
  %v1545 = vor.u32 %v1543, %v1544
  %v1546 = vshll.u32 2475754826, %v1540
  %v1547 = vshrl.u32 2131351028, %v1541
  %v1548 = vor.u32 %v1546, %v1547
  %v1549 = vshll.u32 2131351028, %v1540
  %v1550 = vshrl.u32 2102212464, %v1541
  %v1551 = vor.u32 %v1549, %v1550
  %v1552 = vshll.u32 2102212464, %v1540
  %v1553 = vshrl.u32 920167782, %v1541
  %v1554 = vor.u32 %v1552, %v1553
  %v1555 = vshll.u32 920167782, %v1540
  %v1556 = vshrl.u32 1326507024, %v1541
  %v1557 = vor.u32 %v1555, %v1556
  %vm1558 = vcmp.lt.s32.totalorder %v1539, 1
  %vm1559 = vcmp.lt.s32.totalorder %v1539, 2
  %vm1560 = vcmp.lt.s32.totalorder %v1539, 3
  %vm1561 = vcmp.lt.s32.totalorder %v1539, 4
  %v1562 = vsel %vm1558, %v1542, %v1545
  %v1563 = vsel %vm1561, %v1551, 2102212464
  %v1564 = vsel %vm1560, %v1548, %v1563
  %v1565 = vsel %vm1559, %v1562, %v1564
  %v1566 = vsel %vm1558, %v1545, %v1548
  %v1567 = vsel %vm1561, %v1554, 920167782
  %v1568 = vsel %vm1560, %v1551, %v1567
  %v1569 = vsel %vm1559, %v1566, %v1568
  %v1570 = vsel %vm1558, %v1548, %v1551
  %v1571 = vsel %vm1561, %v1557, 1326507024
  %v1572 = vsel %vm1560, %v1554, %v1571
  %v1573 = vsel %vm1559, %v1570, %v1572
  %v1574 = vshll.u32 %v1534, 8
  %v1575 = vmul.u32.u64.compose %v1574, %v1573
  %v1576 = vextract.low.u32 %v1575
  %v1577 = vextract.high.u32 %v1575
  %v1578 = vmul.u32.u64.compose %v1574, %v1569
  %v1579 = vextract.low.u32 %v1578
  %v1580 = vextract.high.u32 %v1578
  %v1581 = vmul.u32 %v1574, %v1565
  %v1582 = vadd.s32 %v1577, %v1579
  %vm1583 = vc.u32 %v1577, %v1579
  %v1584 = vadd.s32 %v1580, 1
  %v1585 = vsel %vm1583, %v1584, %v1580
  %v1586 = vadd.s32 %v1581, %v1585
  %v1587 = vadd.s32 %v1586, 536870912
  %v1588 = vshrl.u32 %v1587, 30
  %v1589 = vshll.u32 %v1588, 30
  %v1590 = vsub.s32 %v1586, %v1589
  %vm1591 = vcmp.lt.s32.totalorder %v1590, 0
  %v1592 = vsub.s32 0, %v1590
  %v1593 = vsel %vm1591, %v1592, %v1590
  %v1594 = vclz %v1593
  %v1595 = vsub.s32 %v1594, 2
  %vm1596 = vcmp.gt.s32.totalorder 0, %v1595
  %v1597 = vsel %vm1596, 0, %v1595
  %v1598 = vsub.s32 32, %v1597
  %v1599 = vshll.u32 %v1590, %v1597
  %v1600 = vshrl.u32 %v1582, %v1598
  %v1601 = vor.u32 %v1599, %v1600
  %v1602 = vsub.s32 4294967266, %v1597
  %v1603 = vadd.s32 %v1602, 127
  %v1604 = vshll.u32 %v1603, 23
  %v1605 = vor.u32 4788187, %v1604
  %v1606 = vand.u32 2147483647, %v1605
  %v1608 = vcvt.s32.f32 %v1601
  %v1609 = vmul.f32 %v1608, %v1606
  %v1610 = vxor.u32 %v1609, 2147483648
  %v1611 = vsel %vm1528, %v1610, %v1609
  %v1612 = vsub.s32 4, %v1588
  %v1613 = vsel %vm1528, %v1612, %v1588
  %v1614 = vsel %vm1527, %v82, %v1611
  %v1615 = vsel %vm1527, 0, %v1613
  %v1616 = vcosq.f32.pop %v1614
  %v1617 = vsinq.f32.pop %v1614
  %vm1618 = vweird.f32 %v82
  %v1619 = vand.u32 %v1615, 3
  %vm1620 = vcmp.lt.s32.totalorder %v1619, 2
  %vm1621 = vcmp.eq.s32.totalorder %v1619, 0
  %v1622 = vxor.u32 %v1617, 2147483648
  %v1623 = vsel %vm1621, %v1616, %v1622
  %vm1624 = vcmp.eq.s32.totalorder %v1619, 2
  %v1625 = vxor.u32 %v1616, 2147483648
  %v1626 = vsel %vm1624, %v1625, %v1617
  %v1627 = vsel %vm1620, %v1623, %v1626
  %v1628 = vsel %vm1618, nan, %v1627
  %v1629 = vand.u32 2147483647, %v83
  %vm1630 = vcmp.le.f32.partialorder %v1629, 0.7853982
  %vm1631 = vcmp.lt.s32.totalorder %v83, 0
  %v1632 = vand.u32 %v83, 2139095040
  %v1633 = vshrl.u32 %v1632, 23
  %v1634 = vsub.s32 %v1633, 127
  %v1635 = vand.u32 2147483647, %v83
  %v1636 = vand.u32 %v1635, 8388607
  %v1637 = vor.u32 %v1636, 8388608
  %v1638 = vsub.s32 0, %v1637
  %v1639 = vadd.s32 %v1634, 1
  %vm1640 = vcmp.gt.s32.totalorder %v1639, 0
  %v1641 = vsel %vm1640, %v1639, 0
  %v1642 = vshrl.u32 %v1641, 5
  %v1643 = vand.u32 %v1641, 31
  %v1644 = vsub.s32 32, %v1643
  %v1645 = vshrl.u32 683565275, %v1644
  %v1646 = vshll.u32 683565275, %v1643
  %v1647 = vshrl.u32 2475754826, %v1644
  %v1648 = vor.u32 %v1646, %v1647
  %v1649 = vshll.u32 2475754826, %v1643
  %v1650 = vshrl.u32 2131351028, %v1644
  %v1651 = vor.u32 %v1649, %v1650
  %v1652 = vshll.u32 2131351028, %v1643
  %v1653 = vshrl.u32 2102212464, %v1644
  %v1654 = vor.u32 %v1652, %v1653
  %v1655 = vshll.u32 2102212464, %v1643
  %v1656 = vshrl.u32 920167782, %v1644
  %v1657 = vor.u32 %v1655, %v1656
  %v1658 = vshll.u32 920167782, %v1643
  %v1659 = vshrl.u32 1326507024, %v1644
  %v1660 = vor.u32 %v1658, %v1659
  %vm1661 = vcmp.lt.s32.totalorder %v1642, 1
  %vm1662 = vcmp.lt.s32.totalorder %v1642, 2
  %vm1663 = vcmp.lt.s32.totalorder %v1642, 3
  %vm1664 = vcmp.lt.s32.totalorder %v1642, 4
  %v1665 = vsel %vm1661, %v1645, %v1648
  %v1666 = vsel %vm1664, %v1654, 2102212464
  %v1667 = vsel %vm1663, %v1651, %v1666
  %v1668 = vsel %vm1662, %v1665, %v1667
  %v1669 = vsel %vm1661, %v1648, %v1651
  %v1670 = vsel %vm1664, %v1657, 920167782
  %v1671 = vsel %vm1663, %v1654, %v1670
  %v1672 = vsel %vm1662, %v1669, %v1671
  %v1673 = vsel %vm1661, %v1651, %v1654
  %v1674 = vsel %vm1664, %v1660, 1326507024
  %v1675 = vsel %vm1663, %v1657, %v1674
  %v1676 = vsel %vm1662, %v1673, %v1675
  %v1677 = vshll.u32 %v1637, 8
  %v1678 = vmul.u32.u64.compose %v1677, %v1676
  %v1679 = vextract.low.u32 %v1678
  %v1680 = vextract.high.u32 %v1678
  %v1681 = vmul.u32.u64.compose %v1677, %v1672
  %v1682 = vextract.low.u32 %v1681
  %v1683 = vextract.high.u32 %v1681
  %v1684 = vmul.u32 %v1677, %v1668
  %v1685 = vadd.s32 %v1680, %v1682
  %vm1686 = vc.u32 %v1680, %v1682
  %v1687 = vadd.s32 %v1683, 1
  %v1688 = vsel %vm1686, %v1687, %v1683
  %v1689 = vadd.s32 %v1684, %v1688
  %v1690 = vadd.s32 %v1689, 536870912
  %v1691 = vshrl.u32 %v1690, 30
  %v1692 = vshll.u32 %v1691, 30
  %v1693 = vsub.s32 %v1689, %v1692
  %vm1694 = vcmp.lt.s32.totalorder %v1693, 0
  %v1695 = vsub.s32 0, %v1693
  %v1696 = vsel %vm1694, %v1695, %v1693
  %v1697 = vclz %v1696
  %v1698 = vsub.s32 %v1697, 2
  %vm1699 = vcmp.gt.s32.totalorder 0, %v1698
  %v1700 = vsel %vm1699, 0, %v1698
  %v1701 = vsub.s32 32, %v1700
  %v1702 = vshll.u32 %v1693, %v1700
  %v1703 = vshrl.u32 %v1685, %v1701
  %v1704 = vor.u32 %v1702, %v1703
  %v1705 = vsub.s32 4294967266, %v1700
  %v1706 = vadd.s32 %v1705, 127
  %v1707 = vshll.u32 %v1706, 23
  %v1708 = vor.u32 4788187, %v1707
  %v1709 = vand.u32 2147483647, %v1708
  %v1711 = vcvt.s32.f32 %v1704
  %v1712 = vmul.f32 %v1711, %v1709
  %v1713 = vxor.u32 %v1712, 2147483648
  %v1714 = vsel %vm1631, %v1713, %v1712
  %v1715 = vsub.s32 4, %v1691
  %v1716 = vsel %vm1631, %v1715, %v1691
  %v1717 = vsel %vm1630, %v83, %v1714
  %v1718 = vsel %vm1630, 0, %v1716
  %v1719 = vcosq.f32.pop %v1717
  %v1720 = vsinq.f32.pop %v1717
  %vm1721 = vweird.f32 %v83
  %v1722 = vand.u32 %v1718, 3
  %vm1723 = vcmp.lt.s32.totalorder %v1722, 2
  %vm1724 = vcmp.eq.s32.totalorder %v1722, 0
  %v1725 = vxor.u32 %v1720, 2147483648
  %v1726 = vsel %vm1724, %v1719, %v1725
  %vm1727 = vcmp.eq.s32.totalorder %v1722, 2
  %v1728 = vxor.u32 %v1719, 2147483648
  %v1729 = vsel %vm1727, %v1728, %v1720
  %v1730 = vsel %vm1723, %v1726, %v1729
  %v1731 = vsel %vm1721, nan, %v1730
  %v1732 = vand.u32 2147483647, %v68
  %vm1733 = vcmp.le.f32.partialorder %v1732, 0.7853982
  %vm1734 = vcmp.lt.s32.totalorder %v68, 0
  %v1735 = vand.u32 %v68, 2139095040
  %v1736 = vshrl.u32 %v1735, 23
  %v1737 = vsub.s32 %v1736, 127
  %v1738 = vand.u32 2147483647, %v68
  %v1739 = vand.u32 %v1738, 8388607
  %v1740 = vor.u32 %v1739, 8388608
  %v1741 = vsub.s32 0, %v1740
  %v1742 = vadd.s32 %v1737, 1
  %vm1743 = vcmp.gt.s32.totalorder %v1742, 0
  %v1744 = vsel %vm1743, %v1742, 0
  %v1745 = vshrl.u32 %v1744, 5
  %v1746 = vand.u32 %v1744, 31
  %v1747 = vsub.s32 32, %v1746
  %v1748 = vshrl.u32 683565275, %v1747
  %v1749 = vshll.u32 683565275, %v1746
  %v1750 = vshrl.u32 2475754826, %v1747
  %v1751 = vor.u32 %v1749, %v1750
  %v1752 = vshll.u32 2475754826, %v1746
  %v1753 = vshrl.u32 2131351028, %v1747
  %v1754 = vor.u32 %v1752, %v1753
  %v1755 = vshll.u32 2131351028, %v1746
  %v1756 = vshrl.u32 2102212464, %v1747
  %v1757 = vor.u32 %v1755, %v1756
  %v1758 = vshll.u32 2102212464, %v1746
  %v1759 = vshrl.u32 920167782, %v1747
  %v1760 = vor.u32 %v1758, %v1759
  %v1761 = vshll.u32 920167782, %v1746
  %v1762 = vshrl.u32 1326507024, %v1747
  %v1763 = vor.u32 %v1761, %v1762
  %vm1764 = vcmp.lt.s32.totalorder %v1745, 1
  %vm1765 = vcmp.lt.s32.totalorder %v1745, 2
  %vm1766 = vcmp.lt.s32.totalorder %v1745, 3
  %vm1767 = vcmp.lt.s32.totalorder %v1745, 4
  %v1768 = vsel %vm1764, %v1748, %v1751
  %v1769 = vsel %vm1767, %v1757, 2102212464
  %v1770 = vsel %vm1766, %v1754, %v1769
  %v1771 = vsel %vm1765, %v1768, %v1770
  %v1772 = vsel %vm1764, %v1751, %v1754
  %v1773 = vsel %vm1767, %v1760, 920167782
  %v1774 = vsel %vm1766, %v1757, %v1773
  %v1775 = vsel %vm1765, %v1772, %v1774
  %v1776 = vsel %vm1764, %v1754, %v1757
  %v1777 = vsel %vm1767, %v1763, 1326507024
  %v1778 = vsel %vm1766, %v1760, %v1777
  %v1779 = vsel %vm1765, %v1776, %v1778
  %v1780 = vshll.u32 %v1740, 8
  %v1781 = vmul.u32.u64.compose %v1780, %v1779
  %v1782 = vextract.low.u32 %v1781
  %v1783 = vextract.high.u32 %v1781
  %v1784 = vmul.u32.u64.compose %v1780, %v1775
  %v1785 = vextract.low.u32 %v1784
  %v1786 = vextract.high.u32 %v1784
  %v1787 = vmul.u32 %v1780, %v1771
  %v1788 = vadd.s32 %v1783, %v1785
  %vm1789 = vc.u32 %v1783, %v1785
  %v1790 = vadd.s32 %v1786, 1
  %v1791 = vsel %vm1789, %v1790, %v1786
  %v1792 = vadd.s32 %v1787, %v1791
  %v1793 = vadd.s32 %v1792, 536870912
  %v1794 = vshrl.u32 %v1793, 30
  %v1795 = vshll.u32 %v1794, 30
  %v1796 = vsub.s32 %v1792, %v1795
  %vm1797 = vcmp.lt.s32.totalorder %v1796, 0
  %v1798 = vsub.s32 0, %v1796
  %v1799 = vsel %vm1797, %v1798, %v1796
  %v1800 = vclz %v1799
  %v1801 = vsub.s32 %v1800, 2
  %vm1802 = vcmp.gt.s32.totalorder 0, %v1801
  %v1803 = vsel %vm1802, 0, %v1801
  %v1804 = vsub.s32 32, %v1803
  %v1805 = vshll.u32 %v1796, %v1803
  %v1806 = vshrl.u32 %v1788, %v1804
  %v1807 = vor.u32 %v1805, %v1806
  %v1808 = vsub.s32 4294967266, %v1803
  %v1809 = vadd.s32 %v1808, 127
  %v1810 = vshll.u32 %v1809, 23
  %v1811 = vor.u32 4788187, %v1810
  %v1812 = vand.u32 2147483647, %v1811
  %v1814 = vcvt.s32.f32 %v1807
  %v1815 = vmul.f32 %v1814, %v1812
  %v1816 = vxor.u32 %v1815, 2147483648
  %v1817 = vsel %vm1734, %v1816, %v1815
  %v1818 = vsub.s32 4, %v1794
  %v1819 = vsel %vm1734, %v1818, %v1794
  %v1820 = vsel %vm1733, %v68, %v1817
  %v1821 = vsel %vm1733, 0, %v1819
  %v1822 = vcosq.f32.pop %v1820
  %v1823 = vsinq.f32.pop %v1820
  %vm1824 = vweird.f32 %v68
  %v1825 = vadd.s32 %v1821, 3
  %v1826 = vand.u32 %v1825, 3
  %vm1827 = vcmp.lt.s32.totalorder %v1826, 2
  %vm1828 = vcmp.eq.s32.totalorder %v1826, 0
  %v1829 = vxor.u32 %v1823, 2147483648
  %v1830 = vsel %vm1828, %v1822, %v1829
  %vm1831 = vcmp.eq.s32.totalorder %v1826, 2
  %v1832 = vxor.u32 %v1822, 2147483648
  %v1833 = vsel %vm1831, %v1832, %v1823
  %v1834 = vsel %vm1827, %v1830, %v1833
  %v1835 = vsel %vm1824, nan, %v1834
  %v1836 = vand.u32 2147483647, %v69
  %vm1837 = vcmp.le.f32.partialorder %v1836, 0.7853982
  %vm1838 = vcmp.lt.s32.totalorder %v69, 0
  %v1839 = vand.u32 %v69, 2139095040
  %v1840 = vshrl.u32 %v1839, 23
  %v1841 = vsub.s32 %v1840, 127
  %v1842 = vand.u32 2147483647, %v69
  %v1843 = vand.u32 %v1842, 8388607
  %v1844 = vor.u32 %v1843, 8388608
  %v1845 = vsub.s32 0, %v1844
  %v1846 = vadd.s32 %v1841, 1
  %vm1847 = vcmp.gt.s32.totalorder %v1846, 0
  %v1848 = vsel %vm1847, %v1846, 0
  %v1849 = vshrl.u32 %v1848, 5
  %v1850 = vand.u32 %v1848, 31
  %v1851 = vsub.s32 32, %v1850
  %v1852 = vshrl.u32 683565275, %v1851
  %v1853 = vshll.u32 683565275, %v1850
  %v1854 = vshrl.u32 2475754826, %v1851
  %v1855 = vor.u32 %v1853, %v1854
  %v1856 = vshll.u32 2475754826, %v1850
  %v1857 = vshrl.u32 2131351028, %v1851
  %v1858 = vor.u32 %v1856, %v1857
  %v1859 = vshll.u32 2131351028, %v1850
  %v1860 = vshrl.u32 2102212464, %v1851
  %v1861 = vor.u32 %v1859, %v1860
  %v1862 = vshll.u32 2102212464, %v1850
  %v1863 = vshrl.u32 920167782, %v1851
  %v1864 = vor.u32 %v1862, %v1863
  %v1865 = vshll.u32 920167782, %v1850
  %v1866 = vshrl.u32 1326507024, %v1851
  %v1867 = vor.u32 %v1865, %v1866
  %vm1868 = vcmp.lt.s32.totalorder %v1849, 1
  %vm1869 = vcmp.lt.s32.totalorder %v1849, 2
  %vm1870 = vcmp.lt.s32.totalorder %v1849, 3
  %vm1871 = vcmp.lt.s32.totalorder %v1849, 4
  %v1872 = vsel %vm1868, %v1852, %v1855
  %v1873 = vsel %vm1871, %v1861, 2102212464
  %v1874 = vsel %vm1870, %v1858, %v1873
  %v1875 = vsel %vm1869, %v1872, %v1874
  %v1876 = vsel %vm1868, %v1855, %v1858
  %v1877 = vsel %vm1871, %v1864, 920167782
  %v1878 = vsel %vm1870, %v1861, %v1877
  %v1879 = vsel %vm1869, %v1876, %v1878
  %v1880 = vsel %vm1868, %v1858, %v1861
  %v1881 = vsel %vm1871, %v1867, 1326507024
  %v1882 = vsel %vm1870, %v1864, %v1881
  %v1883 = vsel %vm1869, %v1880, %v1882
  %v1884 = vshll.u32 %v1844, 8
  %v1885 = vmul.u32.u64.compose %v1884, %v1883
  %v1886 = vextract.low.u32 %v1885
  %v1887 = vextract.high.u32 %v1885
  %v1888 = vmul.u32.u64.compose %v1884, %v1879
  %v1889 = vextract.low.u32 %v1888
  %v1890 = vextract.high.u32 %v1888
  %v1891 = vmul.u32 %v1884, %v1875
  %v1892 = vadd.s32 %v1887, %v1889
  %vm1893 = vc.u32 %v1887, %v1889
  %v1894 = vadd.s32 %v1890, 1
  %v1895 = vsel %vm1893, %v1894, %v1890
  %v1896 = vadd.s32 %v1891, %v1895
  %v1897 = vadd.s32 %v1896, 536870912
  %v1898 = vshrl.u32 %v1897, 30
  %v1899 = vshll.u32 %v1898, 30
  %v1900 = vsub.s32 %v1896, %v1899
  %vm1901 = vcmp.lt.s32.totalorder %v1900, 0
  %v1902 = vsub.s32 0, %v1900
  %v1903 = vsel %vm1901, %v1902, %v1900
  %v1904 = vclz %v1903
  %v1905 = vsub.s32 %v1904, 2
  %vm1906 = vcmp.gt.s32.totalorder 0, %v1905
  %v1907 = vsel %vm1906, 0, %v1905
  %v1908 = vsub.s32 32, %v1907
  %v1909 = vshll.u32 %v1900, %v1907
  %v1910 = vshrl.u32 %v1892, %v1908
  %v1911 = vor.u32 %v1909, %v1910
  %v1912 = vsub.s32 4294967266, %v1907
  %v1913 = vadd.s32 %v1912, 127
  %v1914 = vshll.u32 %v1913, 23
  %v1915 = vor.u32 4788187, %v1914
  %v1916 = vand.u32 2147483647, %v1915
  %v1918 = vcvt.s32.f32 %v1911
  %v1919 = vmul.f32 %v1918, %v1916
  %v1920 = vxor.u32 %v1919, 2147483648
  %v1921 = vsel %vm1838, %v1920, %v1919
  %v1922 = vsub.s32 4, %v1898
  %v1923 = vsel %vm1838, %v1922, %v1898
  %v1924 = vsel %vm1837, %v69, %v1921
  %v1925 = vsel %vm1837, 0, %v1923
  %v1926 = vcosq.f32.pop %v1924
  %v1927 = vsinq.f32.pop %v1924
  %vm1928 = vweird.f32 %v69
  %v1929 = vadd.s32 %v1925, 3
  %v1930 = vand.u32 %v1929, 3
  %vm1931 = vcmp.lt.s32.totalorder %v1930, 2
  %vm1932 = vcmp.eq.s32.totalorder %v1930, 0
  %v1933 = vxor.u32 %v1927, 2147483648
  %v1934 = vsel %vm1932, %v1926, %v1933
  %vm1935 = vcmp.eq.s32.totalorder %v1930, 2
  %v1936 = vxor.u32 %v1926, 2147483648
  %v1937 = vsel %vm1935, %v1936, %v1927
  %v1938 = vsel %vm1931, %v1934, %v1937
  %v1939 = vsel %vm1928, nan, %v1938
  %v1940 = vand.u32 2147483647, %v70
  %vm1941 = vcmp.le.f32.partialorder %v1940, 0.7853982
  %vm1942 = vcmp.lt.s32.totalorder %v70, 0
  %v1943 = vand.u32 %v70, 2139095040
  %v1944 = vshrl.u32 %v1943, 23
  %v1945 = vsub.s32 %v1944, 127
  %v1946 = vand.u32 2147483647, %v70
  %v1947 = vand.u32 %v1946, 8388607
  %v1948 = vor.u32 %v1947, 8388608
  %v1949 = vsub.s32 0, %v1948
  %v1950 = vadd.s32 %v1945, 1
  %vm1951 = vcmp.gt.s32.totalorder %v1950, 0
  %v1952 = vsel %vm1951, %v1950, 0
  %v1953 = vshrl.u32 %v1952, 5
  %v1954 = vand.u32 %v1952, 31
  %v1955 = vsub.s32 32, %v1954
  %v1956 = vshrl.u32 683565275, %v1955
  %v1957 = vshll.u32 683565275, %v1954
  %v1958 = vshrl.u32 2475754826, %v1955
  %v1959 = vor.u32 %v1957, %v1958
  %v1960 = vshll.u32 2475754826, %v1954
  %v1961 = vshrl.u32 2131351028, %v1955
  %v1962 = vor.u32 %v1960, %v1961
  %v1963 = vshll.u32 2131351028, %v1954
  %v1964 = vshrl.u32 2102212464, %v1955
  %v1965 = vor.u32 %v1963, %v1964
  %v1966 = vshll.u32 2102212464, %v1954
  %v1967 = vshrl.u32 920167782, %v1955
  %v1968 = vor.u32 %v1966, %v1967
  %v1969 = vshll.u32 920167782, %v1954
  %v1970 = vshrl.u32 1326507024, %v1955
  %v1971 = vor.u32 %v1969, %v1970
  %vm1972 = vcmp.lt.s32.totalorder %v1953, 1
  %vm1973 = vcmp.lt.s32.totalorder %v1953, 2
  %vm1974 = vcmp.lt.s32.totalorder %v1953, 3
  %vm1975 = vcmp.lt.s32.totalorder %v1953, 4
  %v1976 = vsel %vm1972, %v1956, %v1959
  %v1977 = vsel %vm1975, %v1965, 2102212464
  %v1978 = vsel %vm1974, %v1962, %v1977
  %v1979 = vsel %vm1973, %v1976, %v1978
  %v1980 = vsel %vm1972, %v1959, %v1962
  %v1981 = vsel %vm1975, %v1968, 920167782
  %v1982 = vsel %vm1974, %v1965, %v1981
  %v1983 = vsel %vm1973, %v1980, %v1982
  %v1984 = vsel %vm1972, %v1962, %v1965
  %v1985 = vsel %vm1975, %v1971, 1326507024
  %v1986 = vsel %vm1974, %v1968, %v1985
  %v1987 = vsel %vm1973, %v1984, %v1986
  %v1988 = vshll.u32 %v1948, 8
  %v1989 = vmul.u32.u64.compose %v1988, %v1987
  %v1990 = vextract.low.u32 %v1989
  %v1991 = vextract.high.u32 %v1989
  %v1992 = vmul.u32.u64.compose %v1988, %v1983
  %v1993 = vextract.low.u32 %v1992
  %v1994 = vextract.high.u32 %v1992
  %v1995 = vmul.u32 %v1988, %v1979
  %v1996 = vadd.s32 %v1991, %v1993
  %vm1997 = vc.u32 %v1991, %v1993
  %v1998 = vadd.s32 %v1994, 1
  %v1999 = vsel %vm1997, %v1998, %v1994
  %v2000 = vadd.s32 %v1995, %v1999
  %v2001 = vadd.s32 %v2000, 536870912
  %v2002 = vshrl.u32 %v2001, 30
  %v2003 = vshll.u32 %v2002, 30
  %v2004 = vsub.s32 %v2000, %v2003
  %vm2005 = vcmp.lt.s32.totalorder %v2004, 0
  %v2006 = vsub.s32 0, %v2004
  %v2007 = vsel %vm2005, %v2006, %v2004
  %v2008 = vclz %v2007
  %v2009 = vsub.s32 %v2008, 2
  %vm2010 = vcmp.gt.s32.totalorder 0, %v2009
  %v2011 = vsel %vm2010, 0, %v2009
  %v2012 = vsub.s32 32, %v2011
  %v2013 = vshll.u32 %v2004, %v2011
  %v2014 = vshrl.u32 %v1996, %v2012
  %v2015 = vor.u32 %v2013, %v2014
  %v2016 = vsub.s32 4294967266, %v2011
  %v2017 = vadd.s32 %v2016, 127
  %v2018 = vshll.u32 %v2017, 23
  %v2019 = vor.u32 4788187, %v2018
  %v2020 = vand.u32 2147483647, %v2019
  %v2022 = vcvt.s32.f32 %v2015
  %v2023 = vmul.f32 %v2022, %v2020
  %v2024 = vxor.u32 %v2023, 2147483648
  %v2025 = vsel %vm1942, %v2024, %v2023
  %v2026 = vsub.s32 4, %v2002
  %v2027 = vsel %vm1942, %v2026, %v2002
  %v2028 = vsel %vm1941, %v70, %v2025
  %v2029 = vsel %vm1941, 0, %v2027
  %v2030 = vcosq.f32.pop %v2028
  %v2031 = vsinq.f32.pop %v2028
  %vm2032 = vweird.f32 %v70
  %v2033 = vadd.s32 %v2029, 3
  %v2034 = vand.u32 %v2033, 3
  %vm2035 = vcmp.lt.s32.totalorder %v2034, 2
  %vm2036 = vcmp.eq.s32.totalorder %v2034, 0
  %v2037 = vxor.u32 %v2031, 2147483648
  %v2038 = vsel %vm2036, %v2030, %v2037
  %vm2039 = vcmp.eq.s32.totalorder %v2034, 2
  %v2040 = vxor.u32 %v2030, 2147483648
  %v2041 = vsel %vm2039, %v2040, %v2031
  %v2042 = vsel %vm2035, %v2038, %v2041
  %v2043 = vsel %vm2032, nan, %v2042
  %v2044 = vand.u32 2147483647, %v71
  %vm2045 = vcmp.le.f32.partialorder %v2044, 0.7853982
  %vm2046 = vcmp.lt.s32.totalorder %v71, 0
  %v2047 = vand.u32 %v71, 2139095040
  %v2048 = vshrl.u32 %v2047, 23
  %v2049 = vsub.s32 %v2048, 127
  %v2050 = vand.u32 2147483647, %v71
  %v2051 = vand.u32 %v2050, 8388607
  %v2052 = vor.u32 %v2051, 8388608
  %v2053 = vsub.s32 0, %v2052
  %v2054 = vadd.s32 %v2049, 1
  %vm2055 = vcmp.gt.s32.totalorder %v2054, 0
  %v2056 = vsel %vm2055, %v2054, 0
  %v2057 = vshrl.u32 %v2056, 5
  %v2058 = vand.u32 %v2056, 31
  %v2059 = vsub.s32 32, %v2058
  %v2060 = vshrl.u32 683565275, %v2059
  %v2061 = vshll.u32 683565275, %v2058
  %v2062 = vshrl.u32 2475754826, %v2059
  %v2063 = vor.u32 %v2061, %v2062
  %v2064 = vshll.u32 2475754826, %v2058
  %v2065 = vshrl.u32 2131351028, %v2059
  %v2066 = vor.u32 %v2064, %v2065
  %v2067 = vshll.u32 2131351028, %v2058
  %v2068 = vshrl.u32 2102212464, %v2059
  %v2069 = vor.u32 %v2067, %v2068
  %v2070 = vshll.u32 2102212464, %v2058
  %v2071 = vshrl.u32 920167782, %v2059
  %v2072 = vor.u32 %v2070, %v2071
  %v2073 = vshll.u32 920167782, %v2058
  %v2074 = vshrl.u32 1326507024, %v2059
  %v2075 = vor.u32 %v2073, %v2074
  %vm2076 = vcmp.lt.s32.totalorder %v2057, 1
  %vm2077 = vcmp.lt.s32.totalorder %v2057, 2
  %vm2078 = vcmp.lt.s32.totalorder %v2057, 3
  %vm2079 = vcmp.lt.s32.totalorder %v2057, 4
  %v2080 = vsel %vm2076, %v2060, %v2063
  %v2081 = vsel %vm2079, %v2069, 2102212464
  %v2082 = vsel %vm2078, %v2066, %v2081
  %v2083 = vsel %vm2077, %v2080, %v2082
  %v2084 = vsel %vm2076, %v2063, %v2066
  %v2085 = vsel %vm2079, %v2072, 920167782
  %v2086 = vsel %vm2078, %v2069, %v2085
  %v2087 = vsel %vm2077, %v2084, %v2086
  %v2088 = vsel %vm2076, %v2066, %v2069
  %v2089 = vsel %vm2079, %v2075, 1326507024
  %v2090 = vsel %vm2078, %v2072, %v2089
  %v2091 = vsel %vm2077, %v2088, %v2090
  %v2092 = vshll.u32 %v2052, 8
  %v2093 = vmul.u32.u64.compose %v2092, %v2091
  %v2094 = vextract.low.u32 %v2093
  %v2095 = vextract.high.u32 %v2093
  %v2096 = vmul.u32.u64.compose %v2092, %v2087
  %v2097 = vextract.low.u32 %v2096
  %v2098 = vextract.high.u32 %v2096
  %v2099 = vmul.u32 %v2092, %v2083
  %v2100 = vadd.s32 %v2095, %v2097
  %vm2101 = vc.u32 %v2095, %v2097
  %v2102 = vadd.s32 %v2098, 1
  %v2103 = vsel %vm2101, %v2102, %v2098
  %v2104 = vadd.s32 %v2099, %v2103
  %v2105 = vadd.s32 %v2104, 536870912
  %v2106 = vshrl.u32 %v2105, 30
  %v2107 = vshll.u32 %v2106, 30
  %v2108 = vsub.s32 %v2104, %v2107
  %vm2109 = vcmp.lt.s32.totalorder %v2108, 0
  %v2110 = vsub.s32 0, %v2108
  %v2111 = vsel %vm2109, %v2110, %v2108
  %v2112 = vclz %v2111
  %v2113 = vsub.s32 %v2112, 2
  %vm2114 = vcmp.gt.s32.totalorder 0, %v2113
  %v2115 = vsel %vm2114, 0, %v2113
  %v2116 = vsub.s32 32, %v2115
  %v2117 = vshll.u32 %v2108, %v2115
  %v2118 = vshrl.u32 %v2100, %v2116
  %v2119 = vor.u32 %v2117, %v2118
  %v2120 = vsub.s32 4294967266, %v2115
  %v2121 = vadd.s32 %v2120, 127
  %v2122 = vshll.u32 %v2121, 23
  %v2123 = vor.u32 4788187, %v2122
  %v2124 = vand.u32 2147483647, %v2123
  %v2126 = vcvt.s32.f32 %v2119
  %v2127 = vmul.f32 %v2126, %v2124
  %v2128 = vxor.u32 %v2127, 2147483648
  %v2129 = vsel %vm2046, %v2128, %v2127
  %v2130 = vsub.s32 4, %v2106
  %v2131 = vsel %vm2046, %v2130, %v2106
  %v2132 = vsel %vm2045, %v71, %v2129
  %v2133 = vsel %vm2045, 0, %v2131
  %v2134 = vcosq.f32.pop %v2132
  %v2135 = vsinq.f32.pop %v2132
  %vm2136 = vweird.f32 %v71
  %v2137 = vadd.s32 %v2133, 3
  %v2138 = vand.u32 %v2137, 3
  %vm2139 = vcmp.lt.s32.totalorder %v2138, 2
  %vm2140 = vcmp.eq.s32.totalorder %v2138, 0
  %v2141 = vxor.u32 %v2135, 2147483648
  %v2142 = vsel %vm2140, %v2134, %v2141
  %vm2143 = vcmp.eq.s32.totalorder %v2138, 2
  %v2144 = vxor.u32 %v2134, 2147483648
  %v2145 = vsel %vm2143, %v2144, %v2135
  %v2146 = vsel %vm2139, %v2142, %v2145
  %v2147 = vsel %vm2136, nan, %v2146
  %v2148 = vand.u32 2147483647, %v72
  %vm2149 = vcmp.le.f32.partialorder %v2148, 0.7853982
  %vm2150 = vcmp.lt.s32.totalorder %v72, 0
  %v2151 = vand.u32 %v72, 2139095040
  %v2152 = vshrl.u32 %v2151, 23
  %v2153 = vsub.s32 %v2152, 127
  %v2154 = vand.u32 2147483647, %v72
  %v2155 = vand.u32 %v2154, 8388607
  %v2156 = vor.u32 %v2155, 8388608
  %v2157 = vsub.s32 0, %v2156
  %v2158 = vadd.s32 %v2153, 1
  %vm2159 = vcmp.gt.s32.totalorder %v2158, 0
  %v2160 = vsel %vm2159, %v2158, 0
  %v2161 = vshrl.u32 %v2160, 5
  %v2162 = vand.u32 %v2160, 31
  %v2163 = vsub.s32 32, %v2162
  %v2164 = vshrl.u32 683565275, %v2163
  %v2165 = vshll.u32 683565275, %v2162
  %v2166 = vshrl.u32 2475754826, %v2163
  %v2167 = vor.u32 %v2165, %v2166
  %v2168 = vshll.u32 2475754826, %v2162
  %v2169 = vshrl.u32 2131351028, %v2163
  %v2170 = vor.u32 %v2168, %v2169
  %v2171 = vshll.u32 2131351028, %v2162
  %v2172 = vshrl.u32 2102212464, %v2163
  %v2173 = vor.u32 %v2171, %v2172
  %v2174 = vshll.u32 2102212464, %v2162
  %v2175 = vshrl.u32 920167782, %v2163
  %v2176 = vor.u32 %v2174, %v2175
  %v2177 = vshll.u32 920167782, %v2162
  %v2178 = vshrl.u32 1326507024, %v2163
  %v2179 = vor.u32 %v2177, %v2178
  %vm2180 = vcmp.lt.s32.totalorder %v2161, 1
  %vm2181 = vcmp.lt.s32.totalorder %v2161, 2
  %vm2182 = vcmp.lt.s32.totalorder %v2161, 3
  %vm2183 = vcmp.lt.s32.totalorder %v2161, 4
  %v2184 = vsel %vm2180, %v2164, %v2167
  %v2185 = vsel %vm2183, %v2173, 2102212464
  %v2186 = vsel %vm2182, %v2170, %v2185
  %v2187 = vsel %vm2181, %v2184, %v2186
  %v2188 = vsel %vm2180, %v2167, %v2170
  %v2189 = vsel %vm2183, %v2176, 920167782
  %v2190 = vsel %vm2182, %v2173, %v2189
  %v2191 = vsel %vm2181, %v2188, %v2190
  %v2192 = vsel %vm2180, %v2170, %v2173
  %v2193 = vsel %vm2183, %v2179, 1326507024
  %v2194 = vsel %vm2182, %v2176, %v2193
  %v2195 = vsel %vm2181, %v2192, %v2194
  %v2196 = vshll.u32 %v2156, 8
  %v2197 = vmul.u32.u64.compose %v2196, %v2195
  %v2198 = vextract.low.u32 %v2197
  %v2199 = vextract.high.u32 %v2197
  %v2200 = vmul.u32.u64.compose %v2196, %v2191
  %v2201 = vextract.low.u32 %v2200
  %v2202 = vextract.high.u32 %v2200
  %v2203 = vmul.u32 %v2196, %v2187
  %v2204 = vadd.s32 %v2199, %v2201
  %vm2205 = vc.u32 %v2199, %v2201
  %v2206 = vadd.s32 %v2202, 1
  %v2207 = vsel %vm2205, %v2206, %v2202
  %v2208 = vadd.s32 %v2203, %v2207
  %v2209 = vadd.s32 %v2208, 536870912
  %v2210 = vshrl.u32 %v2209, 30
  %v2211 = vshll.u32 %v2210, 30
  %v2212 = vsub.s32 %v2208, %v2211
  %vm2213 = vcmp.lt.s32.totalorder %v2212, 0
  %v2214 = vsub.s32 0, %v2212
  %v2215 = vsel %vm2213, %v2214, %v2212
  %v2216 = vclz %v2215
  %v2217 = vsub.s32 %v2216, 2
  %vm2218 = vcmp.gt.s32.totalorder 0, %v2217
  %v2219 = vsel %vm2218, 0, %v2217
  %v2220 = vsub.s32 32, %v2219
  %v2221 = vshll.u32 %v2212, %v2219
  %v2222 = vshrl.u32 %v2204, %v2220
  %v2223 = vor.u32 %v2221, %v2222
  %v2224 = vsub.s32 4294967266, %v2219
  %v2225 = vadd.s32 %v2224, 127
  %v2226 = vshll.u32 %v2225, 23
  %v2227 = vor.u32 4788187, %v2226
  %v2228 = vand.u32 2147483647, %v2227
  %v2230 = vcvt.s32.f32 %v2223
  %v2231 = vmul.f32 %v2230, %v2228
  %v2232 = vxor.u32 %v2231, 2147483648
  %v2233 = vsel %vm2150, %v2232, %v2231
  %v2234 = vsub.s32 4, %v2210
  %v2235 = vsel %vm2150, %v2234, %v2210
  %v2236 = vsel %vm2149, %v72, %v2233
  %v2237 = vsel %vm2149, 0, %v2235
  %v2238 = vcosq.f32.pop %v2236
  %v2239 = vsinq.f32.pop %v2236
  %vm2240 = vweird.f32 %v72
  %v2241 = vadd.s32 %v2237, 3
  %v2242 = vand.u32 %v2241, 3
  %vm2243 = vcmp.lt.s32.totalorder %v2242, 2
  %vm2244 = vcmp.eq.s32.totalorder %v2242, 0
  %v2245 = vxor.u32 %v2239, 2147483648
  %v2246 = vsel %vm2244, %v2238, %v2245
  %vm2247 = vcmp.eq.s32.totalorder %v2242, 2
  %v2248 = vxor.u32 %v2238, 2147483648
  %v2249 = vsel %vm2247, %v2248, %v2239
  %v2250 = vsel %vm2243, %v2246, %v2249
  %v2251 = vsel %vm2240, nan, %v2250
  %v2252 = vand.u32 2147483647, %v73
  %vm2253 = vcmp.le.f32.partialorder %v2252, 0.7853982
  %vm2254 = vcmp.lt.s32.totalorder %v73, 0
  %v2255 = vand.u32 %v73, 2139095040
  %v2256 = vshrl.u32 %v2255, 23
  %v2257 = vsub.s32 %v2256, 127
  %v2258 = vand.u32 2147483647, %v73
  %v2259 = vand.u32 %v2258, 8388607
  %v2260 = vor.u32 %v2259, 8388608
  %v2261 = vsub.s32 0, %v2260
  %v2262 = vadd.s32 %v2257, 1
  %vm2263 = vcmp.gt.s32.totalorder %v2262, 0
  %v2264 = vsel %vm2263, %v2262, 0
  %v2265 = vshrl.u32 %v2264, 5
  %v2266 = vand.u32 %v2264, 31
  %v2267 = vsub.s32 32, %v2266
  %v2268 = vshrl.u32 683565275, %v2267
  %v2269 = vshll.u32 683565275, %v2266
  %v2270 = vshrl.u32 2475754826, %v2267
  %v2271 = vor.u32 %v2269, %v2270
  %v2272 = vshll.u32 2475754826, %v2266
  %v2273 = vshrl.u32 2131351028, %v2267
  %v2274 = vor.u32 %v2272, %v2273
  %v2275 = vshll.u32 2131351028, %v2266
  %v2276 = vshrl.u32 2102212464, %v2267
  %v2277 = vor.u32 %v2275, %v2276
  %v2278 = vshll.u32 2102212464, %v2266
  %v2279 = vshrl.u32 920167782, %v2267
  %v2280 = vor.u32 %v2278, %v2279
  %v2281 = vshll.u32 920167782, %v2266
  %v2282 = vshrl.u32 1326507024, %v2267
  %v2283 = vor.u32 %v2281, %v2282
  %vm2284 = vcmp.lt.s32.totalorder %v2265, 1
  %vm2285 = vcmp.lt.s32.totalorder %v2265, 2
  %vm2286 = vcmp.lt.s32.totalorder %v2265, 3
  %vm2287 = vcmp.lt.s32.totalorder %v2265, 4
  %v2288 = vsel %vm2284, %v2268, %v2271
  %v2289 = vsel %vm2287, %v2277, 2102212464
  %v2290 = vsel %vm2286, %v2274, %v2289
  %v2291 = vsel %vm2285, %v2288, %v2290
  %v2292 = vsel %vm2284, %v2271, %v2274
  %v2293 = vsel %vm2287, %v2280, 920167782
  %v2294 = vsel %vm2286, %v2277, %v2293
  %v2295 = vsel %vm2285, %v2292, %v2294
  %v2296 = vsel %vm2284, %v2274, %v2277
  %v2297 = vsel %vm2287, %v2283, 1326507024
  %v2298 = vsel %vm2286, %v2280, %v2297
  %v2299 = vsel %vm2285, %v2296, %v2298
  %v2300 = vshll.u32 %v2260, 8
  %v2301 = vmul.u32.u64.compose %v2300, %v2299
  %v2302 = vextract.low.u32 %v2301
  %v2303 = vextract.high.u32 %v2301
  %v2304 = vmul.u32.u64.compose %v2300, %v2295
  %v2305 = vextract.low.u32 %v2304
  %v2306 = vextract.high.u32 %v2304
  %v2307 = vmul.u32 %v2300, %v2291
  %v2308 = vadd.s32 %v2303, %v2305
  %vm2309 = vc.u32 %v2303, %v2305
  %v2310 = vadd.s32 %v2306, 1
  %v2311 = vsel %vm2309, %v2310, %v2306
  %v2312 = vadd.s32 %v2307, %v2311
  %v2313 = vadd.s32 %v2312, 536870912
  %v2314 = vshrl.u32 %v2313, 30
  %v2315 = vshll.u32 %v2314, 30
  %v2316 = vsub.s32 %v2312, %v2315
  %vm2317 = vcmp.lt.s32.totalorder %v2316, 0
  %v2318 = vsub.s32 0, %v2316
  %v2319 = vsel %vm2317, %v2318, %v2316
  %v2320 = vclz %v2319
  %v2321 = vsub.s32 %v2320, 2
  %vm2322 = vcmp.gt.s32.totalorder 0, %v2321
  %v2323 = vsel %vm2322, 0, %v2321
  %v2324 = vsub.s32 32, %v2323
  %v2325 = vshll.u32 %v2316, %v2323
  %v2326 = vshrl.u32 %v2308, %v2324
  %v2327 = vor.u32 %v2325, %v2326
  %v2328 = vsub.s32 4294967266, %v2323
  %v2329 = vadd.s32 %v2328, 127
  %v2330 = vshll.u32 %v2329, 23
  %v2331 = vor.u32 4788187, %v2330
  %v2332 = vand.u32 2147483647, %v2331
  %v2334 = vcvt.s32.f32 %v2327
  %v2335 = vmul.f32 %v2334, %v2332
  %v2336 = vxor.u32 %v2335, 2147483648
  %v2337 = vsel %vm2254, %v2336, %v2335
  %v2338 = vsub.s32 4, %v2314
  %v2339 = vsel %vm2254, %v2338, %v2314
  %v2340 = vsel %vm2253, %v73, %v2337
  %v2341 = vsel %vm2253, 0, %v2339
  %v2342 = vcosq.f32.pop %v2340
  %v2343 = vsinq.f32.pop %v2340
  %vm2344 = vweird.f32 %v73
  %v2345 = vadd.s32 %v2341, 3
  %v2346 = vand.u32 %v2345, 3
  %vm2347 = vcmp.lt.s32.totalorder %v2346, 2
  %vm2348 = vcmp.eq.s32.totalorder %v2346, 0
  %v2349 = vxor.u32 %v2343, 2147483648
  %v2350 = vsel %vm2348, %v2342, %v2349
  %vm2351 = vcmp.eq.s32.totalorder %v2346, 2
  %v2352 = vxor.u32 %v2342, 2147483648
  %v2353 = vsel %vm2351, %v2352, %v2343
  %v2354 = vsel %vm2347, %v2350, %v2353
  %v2355 = vsel %vm2344, nan, %v2354
  %v2356 = vand.u32 2147483647, %v74
  %vm2357 = vcmp.le.f32.partialorder %v2356, 0.7853982
  %vm2358 = vcmp.lt.s32.totalorder %v74, 0
  %v2359 = vand.u32 %v74, 2139095040
  %v2360 = vshrl.u32 %v2359, 23
  %v2361 = vsub.s32 %v2360, 127
  %v2362 = vand.u32 2147483647, %v74
  %v2363 = vand.u32 %v2362, 8388607
  %v2364 = vor.u32 %v2363, 8388608
  %v2365 = vsub.s32 0, %v2364
  %v2366 = vadd.s32 %v2361, 1
  %vm2367 = vcmp.gt.s32.totalorder %v2366, 0
  %v2368 = vsel %vm2367, %v2366, 0
  %v2369 = vshrl.u32 %v2368, 5
  %v2370 = vand.u32 %v2368, 31
  %v2371 = vsub.s32 32, %v2370
  %v2372 = vshrl.u32 683565275, %v2371
  %v2373 = vshll.u32 683565275, %v2370
  %v2374 = vshrl.u32 2475754826, %v2371
  %v2375 = vor.u32 %v2373, %v2374
  %v2376 = vshll.u32 2475754826, %v2370
  %v2377 = vshrl.u32 2131351028, %v2371
  %v2378 = vor.u32 %v2376, %v2377
  %v2379 = vshll.u32 2131351028, %v2370
  %v2380 = vshrl.u32 2102212464, %v2371
  %v2381 = vor.u32 %v2379, %v2380
  %v2382 = vshll.u32 2102212464, %v2370
  %v2383 = vshrl.u32 920167782, %v2371
  %v2384 = vor.u32 %v2382, %v2383
  %v2385 = vshll.u32 920167782, %v2370
  %v2386 = vshrl.u32 1326507024, %v2371
  %v2387 = vor.u32 %v2385, %v2386
  %vm2388 = vcmp.lt.s32.totalorder %v2369, 1
  %vm2389 = vcmp.lt.s32.totalorder %v2369, 2
  %vm2390 = vcmp.lt.s32.totalorder %v2369, 3
  %vm2391 = vcmp.lt.s32.totalorder %v2369, 4
  %v2392 = vsel %vm2388, %v2372, %v2375
  %v2393 = vsel %vm2391, %v2381, 2102212464
  %v2394 = vsel %vm2390, %v2378, %v2393
  %v2395 = vsel %vm2389, %v2392, %v2394
  %v2396 = vsel %vm2388, %v2375, %v2378
  %v2397 = vsel %vm2391, %v2384, 920167782
  %v2398 = vsel %vm2390, %v2381, %v2397
  %v2399 = vsel %vm2389, %v2396, %v2398
  %v2400 = vsel %vm2388, %v2378, %v2381
  %v2401 = vsel %vm2391, %v2387, 1326507024
  %v2402 = vsel %vm2390, %v2384, %v2401
  %v2403 = vsel %vm2389, %v2400, %v2402
  %v2404 = vshll.u32 %v2364, 8
  %v2405 = vmul.u32.u64.compose %v2404, %v2403
  %v2406 = vextract.low.u32 %v2405
  %v2407 = vextract.high.u32 %v2405
  %v2408 = vmul.u32.u64.compose %v2404, %v2399
  %v2409 = vextract.low.u32 %v2408
  %v2410 = vextract.high.u32 %v2408
  %v2411 = vmul.u32 %v2404, %v2395
  %v2412 = vadd.s32 %v2407, %v2409
  %vm2413 = vc.u32 %v2407, %v2409
  %v2414 = vadd.s32 %v2410, 1
  %v2415 = vsel %vm2413, %v2414, %v2410
  %v2416 = vadd.s32 %v2411, %v2415
  %v2417 = vadd.s32 %v2416, 536870912
  %v2418 = vshrl.u32 %v2417, 30
  %v2419 = vshll.u32 %v2418, 30
  %v2420 = vsub.s32 %v2416, %v2419
  %vm2421 = vcmp.lt.s32.totalorder %v2420, 0
  %v2422 = vsub.s32 0, %v2420
  %v2423 = vsel %vm2421, %v2422, %v2420
  %v2424 = vclz %v2423
  %v2425 = vsub.s32 %v2424, 2
  %vm2426 = vcmp.gt.s32.totalorder 0, %v2425
  %v2427 = vsel %vm2426, 0, %v2425
  %v2428 = vsub.s32 32, %v2427
  %v2429 = vshll.u32 %v2420, %v2427
  %v2430 = vshrl.u32 %v2412, %v2428
  %v2431 = vor.u32 %v2429, %v2430
  %v2432 = vsub.s32 4294967266, %v2427
  %v2433 = vadd.s32 %v2432, 127
  %v2434 = vshll.u32 %v2433, 23
  %v2435 = vor.u32 4788187, %v2434
  %v2436 = vand.u32 2147483647, %v2435
  %v2438 = vcvt.s32.f32 %v2431
  %v2439 = vmul.f32 %v2438, %v2436
  %v2440 = vxor.u32 %v2439, 2147483648
  %v2441 = vsel %vm2358, %v2440, %v2439
  %v2442 = vsub.s32 4, %v2418
  %v2443 = vsel %vm2358, %v2442, %v2418
  %v2444 = vsel %vm2357, %v74, %v2441
  %v2445 = vsel %vm2357, 0, %v2443
  %v2446 = vcosq.f32.pop %v2444
  %v2447 = vsinq.f32.pop %v2444
  %vm2448 = vweird.f32 %v74
  %v2449 = vadd.s32 %v2445, 3
  %v2450 = vand.u32 %v2449, 3
  %vm2451 = vcmp.lt.s32.totalorder %v2450, 2
  %vm2452 = vcmp.eq.s32.totalorder %v2450, 0
  %v2453 = vxor.u32 %v2447, 2147483648
  %v2454 = vsel %vm2452, %v2446, %v2453
  %vm2455 = vcmp.eq.s32.totalorder %v2450, 2
  %v2456 = vxor.u32 %v2446, 2147483648
  %v2457 = vsel %vm2455, %v2456, %v2447
  %v2458 = vsel %vm2451, %v2454, %v2457
  %v2459 = vsel %vm2448, nan, %v2458
  %v2460 = vand.u32 2147483647, %v75
  %vm2461 = vcmp.le.f32.partialorder %v2460, 0.7853982
  %vm2462 = vcmp.lt.s32.totalorder %v75, 0
  %v2463 = vand.u32 %v75, 2139095040
  %v2464 = vshrl.u32 %v2463, 23
  %v2465 = vsub.s32 %v2464, 127
  %v2466 = vand.u32 2147483647, %v75
  %v2467 = vand.u32 %v2466, 8388607
  %v2468 = vor.u32 %v2467, 8388608
  %v2469 = vsub.s32 0, %v2468
  %v2470 = vadd.s32 %v2465, 1
  %vm2471 = vcmp.gt.s32.totalorder %v2470, 0
  %v2472 = vsel %vm2471, %v2470, 0
  %v2473 = vshrl.u32 %v2472, 5
  %v2474 = vand.u32 %v2472, 31
  %v2475 = vsub.s32 32, %v2474
  %v2476 = vshrl.u32 683565275, %v2475
  %v2477 = vshll.u32 683565275, %v2474
  %v2478 = vshrl.u32 2475754826, %v2475
  %v2479 = vor.u32 %v2477, %v2478
  %v2480 = vshll.u32 2475754826, %v2474
  %v2481 = vshrl.u32 2131351028, %v2475
  %v2482 = vor.u32 %v2480, %v2481
  %v2483 = vshll.u32 2131351028, %v2474
  %v2484 = vshrl.u32 2102212464, %v2475
  %v2485 = vor.u32 %v2483, %v2484
  %v2486 = vshll.u32 2102212464, %v2474
  %v2487 = vshrl.u32 920167782, %v2475
  %v2488 = vor.u32 %v2486, %v2487
  %v2489 = vshll.u32 920167782, %v2474
  %v2490 = vshrl.u32 1326507024, %v2475
  %v2491 = vor.u32 %v2489, %v2490
  %vm2492 = vcmp.lt.s32.totalorder %v2473, 1
  %vm2493 = vcmp.lt.s32.totalorder %v2473, 2
  %vm2494 = vcmp.lt.s32.totalorder %v2473, 3
  %vm2495 = vcmp.lt.s32.totalorder %v2473, 4
  %v2496 = vsel %vm2492, %v2476, %v2479
  %v2497 = vsel %vm2495, %v2485, 2102212464
  %v2498 = vsel %vm2494, %v2482, %v2497
  %v2499 = vsel %vm2493, %v2496, %v2498
  %v2500 = vsel %vm2492, %v2479, %v2482
  %v2501 = vsel %vm2495, %v2488, 920167782
  %v2502 = vsel %vm2494, %v2485, %v2501
  %v2503 = vsel %vm2493, %v2500, %v2502
  %v2504 = vsel %vm2492, %v2482, %v2485
  %v2505 = vsel %vm2495, %v2491, 1326507024
  %v2506 = vsel %vm2494, %v2488, %v2505
  %v2507 = vsel %vm2493, %v2504, %v2506
  %v2508 = vshll.u32 %v2468, 8
  %v2509 = vmul.u32.u64.compose %v2508, %v2507
  %v2510 = vextract.low.u32 %v2509
  %v2511 = vextract.high.u32 %v2509
  %v2512 = vmul.u32.u64.compose %v2508, %v2503
  %v2513 = vextract.low.u32 %v2512
  %v2514 = vextract.high.u32 %v2512
  %v2515 = vmul.u32 %v2508, %v2499
  %v2516 = vadd.s32 %v2511, %v2513
  %vm2517 = vc.u32 %v2511, %v2513
  %v2518 = vadd.s32 %v2514, 1
  %v2519 = vsel %vm2517, %v2518, %v2514
  %v2520 = vadd.s32 %v2515, %v2519
  %v2521 = vadd.s32 %v2520, 536870912
  %v2522 = vshrl.u32 %v2521, 30
  %v2523 = vshll.u32 %v2522, 30
  %v2524 = vsub.s32 %v2520, %v2523
  %vm2525 = vcmp.lt.s32.totalorder %v2524, 0
  %v2526 = vsub.s32 0, %v2524
  %v2527 = vsel %vm2525, %v2526, %v2524
  %v2528 = vclz %v2527
  %v2529 = vsub.s32 %v2528, 2
  %vm2530 = vcmp.gt.s32.totalorder 0, %v2529
  %v2531 = vsel %vm2530, 0, %v2529
  %v2532 = vsub.s32 32, %v2531
  %v2533 = vshll.u32 %v2524, %v2531
  %v2534 = vshrl.u32 %v2516, %v2532
  %v2535 = vor.u32 %v2533, %v2534
  %v2536 = vsub.s32 4294967266, %v2531
  %v2537 = vadd.s32 %v2536, 127
  %v2538 = vshll.u32 %v2537, 23
  %v2539 = vor.u32 4788187, %v2538
  %v2540 = vand.u32 2147483647, %v2539
  %v2542 = vcvt.s32.f32 %v2535
  %v2543 = vmul.f32 %v2542, %v2540
  %v2544 = vxor.u32 %v2543, 2147483648
  %v2545 = vsel %vm2462, %v2544, %v2543
  %v2546 = vsub.s32 4, %v2522
  %v2547 = vsel %vm2462, %v2546, %v2522
  %v2548 = vsel %vm2461, %v75, %v2545
  %v2549 = vsel %vm2461, 0, %v2547
  %v2550 = vcosq.f32.pop %v2548
  %v2551 = vsinq.f32.pop %v2548
  %vm2552 = vweird.f32 %v75
  %v2553 = vadd.s32 %v2549, 3
  %v2554 = vand.u32 %v2553, 3
  %vm2555 = vcmp.lt.s32.totalorder %v2554, 2
  %vm2556 = vcmp.eq.s32.totalorder %v2554, 0
  %v2557 = vxor.u32 %v2551, 2147483648
  %v2558 = vsel %vm2556, %v2550, %v2557
  %vm2559 = vcmp.eq.s32.totalorder %v2554, 2
  %v2560 = vxor.u32 %v2550, 2147483648
  %v2561 = vsel %vm2559, %v2560, %v2551
  %v2562 = vsel %vm2555, %v2558, %v2561
  %v2563 = vsel %vm2552, nan, %v2562
  %v2564 = vand.u32 2147483647, %v76
  %vm2565 = vcmp.le.f32.partialorder %v2564, 0.7853982
  %vm2566 = vcmp.lt.s32.totalorder %v76, 0
  %v2567 = vand.u32 %v76, 2139095040
  %v2568 = vshrl.u32 %v2567, 23
  %v2569 = vsub.s32 %v2568, 127
  %v2570 = vand.u32 2147483647, %v76
  %v2571 = vand.u32 %v2570, 8388607
  %v2572 = vor.u32 %v2571, 8388608
  %v2573 = vsub.s32 0, %v2572
  %v2574 = vadd.s32 %v2569, 1
  %vm2575 = vcmp.gt.s32.totalorder %v2574, 0
  %v2576 = vsel %vm2575, %v2574, 0
  %v2577 = vshrl.u32 %v2576, 5
  %v2578 = vand.u32 %v2576, 31
  %v2579 = vsub.s32 32, %v2578
  %v2580 = vshrl.u32 683565275, %v2579
  %v2581 = vshll.u32 683565275, %v2578
  %v2582 = vshrl.u32 2475754826, %v2579
  %v2583 = vor.u32 %v2581, %v2582
  %v2584 = vshll.u32 2475754826, %v2578
  %v2585 = vshrl.u32 2131351028, %v2579
  %v2586 = vor.u32 %v2584, %v2585
  %v2587 = vshll.u32 2131351028, %v2578
  %v2588 = vshrl.u32 2102212464, %v2579
  %v2589 = vor.u32 %v2587, %v2588
  %v2590 = vshll.u32 2102212464, %v2578
  %v2591 = vshrl.u32 920167782, %v2579
  %v2592 = vor.u32 %v2590, %v2591
  %v2593 = vshll.u32 920167782, %v2578
  %v2594 = vshrl.u32 1326507024, %v2579
  %v2595 = vor.u32 %v2593, %v2594
  %vm2596 = vcmp.lt.s32.totalorder %v2577, 1
  %vm2597 = vcmp.lt.s32.totalorder %v2577, 2
  %vm2598 = vcmp.lt.s32.totalorder %v2577, 3
  %vm2599 = vcmp.lt.s32.totalorder %v2577, 4
  %v2600 = vsel %vm2596, %v2580, %v2583
  %v2601 = vsel %vm2599, %v2589, 2102212464
  %v2602 = vsel %vm2598, %v2586, %v2601
  %v2603 = vsel %vm2597, %v2600, %v2602
  %v2604 = vsel %vm2596, %v2583, %v2586
  %v2605 = vsel %vm2599, %v2592, 920167782
  %v2606 = vsel %vm2598, %v2589, %v2605
  %v2607 = vsel %vm2597, %v2604, %v2606
  %v2608 = vsel %vm2596, %v2586, %v2589
  %v2609 = vsel %vm2599, %v2595, 1326507024
  %v2610 = vsel %vm2598, %v2592, %v2609
  %v2611 = vsel %vm2597, %v2608, %v2610
  %v2612 = vshll.u32 %v2572, 8
  %v2613 = vmul.u32.u64.compose %v2612, %v2611
  %v2614 = vextract.low.u32 %v2613
  %v2615 = vextract.high.u32 %v2613
  %v2616 = vmul.u32.u64.compose %v2612, %v2607
  %v2617 = vextract.low.u32 %v2616
  %v2618 = vextract.high.u32 %v2616
  %v2619 = vmul.u32 %v2612, %v2603
  %v2620 = vadd.s32 %v2615, %v2617
  %vm2621 = vc.u32 %v2615, %v2617
  %v2622 = vadd.s32 %v2618, 1
  %v2623 = vsel %vm2621, %v2622, %v2618
  %v2624 = vadd.s32 %v2619, %v2623
  %v2625 = vadd.s32 %v2624, 536870912
  %v2626 = vshrl.u32 %v2625, 30
  %v2627 = vshll.u32 %v2626, 30
  %v2628 = vsub.s32 %v2624, %v2627
  %vm2629 = vcmp.lt.s32.totalorder %v2628, 0
  %v2630 = vsub.s32 0, %v2628
  %v2631 = vsel %vm2629, %v2630, %v2628
  %v2632 = vclz %v2631
  %v2633 = vsub.s32 %v2632, 2
  %vm2634 = vcmp.gt.s32.totalorder 0, %v2633
  %v2635 = vsel %vm2634, 0, %v2633
  %v2636 = vsub.s32 32, %v2635
  %v2637 = vshll.u32 %v2628, %v2635
  %v2638 = vshrl.u32 %v2620, %v2636
  %v2639 = vor.u32 %v2637, %v2638
  %v2640 = vsub.s32 4294967266, %v2635
  %v2641 = vadd.s32 %v2640, 127
  %v2642 = vshll.u32 %v2641, 23
  %v2643 = vor.u32 4788187, %v2642
  %v2644 = vand.u32 2147483647, %v2643
  %v2646 = vcvt.s32.f32 %v2639
  %v2647 = vmul.f32 %v2646, %v2644
  %v2648 = vxor.u32 %v2647, 2147483648
  %v2649 = vsel %vm2566, %v2648, %v2647
  %v2650 = vsub.s32 4, %v2626
  %v2651 = vsel %vm2566, %v2650, %v2626
  %v2652 = vsel %vm2565, %v76, %v2649
  %v2653 = vsel %vm2565, 0, %v2651
  %v2654 = vcosq.f32.pop %v2652
  %v2655 = vsinq.f32.pop %v2652
  %vm2656 = vweird.f32 %v76
  %v2657 = vadd.s32 %v2653, 3
  %v2658 = vand.u32 %v2657, 3
  %vm2659 = vcmp.lt.s32.totalorder %v2658, 2
  %vm2660 = vcmp.eq.s32.totalorder %v2658, 0
  %v2661 = vxor.u32 %v2655, 2147483648
  %v2662 = vsel %vm2660, %v2654, %v2661
  %vm2663 = vcmp.eq.s32.totalorder %v2658, 2
  %v2664 = vxor.u32 %v2654, 2147483648
  %v2665 = vsel %vm2663, %v2664, %v2655
  %v2666 = vsel %vm2659, %v2662, %v2665
  %v2667 = vsel %vm2656, nan, %v2666
  %v2668 = vand.u32 2147483647, %v77
  %vm2669 = vcmp.le.f32.partialorder %v2668, 0.7853982
  %vm2670 = vcmp.lt.s32.totalorder %v77, 0
  %v2671 = vand.u32 %v77, 2139095040
  %v2672 = vshrl.u32 %v2671, 23
  %v2673 = vsub.s32 %v2672, 127
  %v2674 = vand.u32 2147483647, %v77
  %v2675 = vand.u32 %v2674, 8388607
  %v2676 = vor.u32 %v2675, 8388608
  %v2677 = vsub.s32 0, %v2676
  %v2678 = vadd.s32 %v2673, 1
  %vm2679 = vcmp.gt.s32.totalorder %v2678, 0
  %v2680 = vsel %vm2679, %v2678, 0
  %v2681 = vshrl.u32 %v2680, 5
  %v2682 = vand.u32 %v2680, 31
  %v2683 = vsub.s32 32, %v2682
  %v2684 = vshrl.u32 683565275, %v2683
  %v2685 = vshll.u32 683565275, %v2682
  %v2686 = vshrl.u32 2475754826, %v2683
  %v2687 = vor.u32 %v2685, %v2686
  %v2688 = vshll.u32 2475754826, %v2682
  %v2689 = vshrl.u32 2131351028, %v2683
  %v2690 = vor.u32 %v2688, %v2689
  %v2691 = vshll.u32 2131351028, %v2682
  %v2692 = vshrl.u32 2102212464, %v2683
  %v2693 = vor.u32 %v2691, %v2692
  %v2694 = vshll.u32 2102212464, %v2682
  %v2695 = vshrl.u32 920167782, %v2683
  %v2696 = vor.u32 %v2694, %v2695
  %v2697 = vshll.u32 920167782, %v2682
  %v2698 = vshrl.u32 1326507024, %v2683
  %v2699 = vor.u32 %v2697, %v2698
  %vm2700 = vcmp.lt.s32.totalorder %v2681, 1
  %vm2701 = vcmp.lt.s32.totalorder %v2681, 2
  %vm2702 = vcmp.lt.s32.totalorder %v2681, 3
  %vm2703 = vcmp.lt.s32.totalorder %v2681, 4
  %v2704 = vsel %vm2700, %v2684, %v2687
  %v2705 = vsel %vm2703, %v2693, 2102212464
  %v2706 = vsel %vm2702, %v2690, %v2705
  %v2707 = vsel %vm2701, %v2704, %v2706
  %v2708 = vsel %vm2700, %v2687, %v2690
  %v2709 = vsel %vm2703, %v2696, 920167782
  %v2710 = vsel %vm2702, %v2693, %v2709
  %v2711 = vsel %vm2701, %v2708, %v2710
  %v2712 = vsel %vm2700, %v2690, %v2693
  %v2713 = vsel %vm2703, %v2699, 1326507024
  %v2714 = vsel %vm2702, %v2696, %v2713
  %v2715 = vsel %vm2701, %v2712, %v2714
  %v2716 = vshll.u32 %v2676, 8
  %v2717 = vmul.u32.u64.compose %v2716, %v2715
  %v2718 = vextract.low.u32 %v2717
  %v2719 = vextract.high.u32 %v2717
  %v2720 = vmul.u32.u64.compose %v2716, %v2711
  %v2721 = vextract.low.u32 %v2720
  %v2722 = vextract.high.u32 %v2720
  %v2723 = vmul.u32 %v2716, %v2707
  %v2724 = vadd.s32 %v2719, %v2721
  %vm2725 = vc.u32 %v2719, %v2721
  %v2726 = vadd.s32 %v2722, 1
  %v2727 = vsel %vm2725, %v2726, %v2722
  %v2728 = vadd.s32 %v2723, %v2727
  %v2729 = vadd.s32 %v2728, 536870912
  %v2730 = vshrl.u32 %v2729, 30
  %v2731 = vshll.u32 %v2730, 30
  %v2732 = vsub.s32 %v2728, %v2731
  %vm2733 = vcmp.lt.s32.totalorder %v2732, 0
  %v2734 = vsub.s32 0, %v2732
  %v2735 = vsel %vm2733, %v2734, %v2732
  %v2736 = vclz %v2735
  %v2737 = vsub.s32 %v2736, 2
  %vm2738 = vcmp.gt.s32.totalorder 0, %v2737
  %v2739 = vsel %vm2738, 0, %v2737
  %v2740 = vsub.s32 32, %v2739
  %v2741 = vshll.u32 %v2732, %v2739
  %v2742 = vshrl.u32 %v2724, %v2740
  %v2743 = vor.u32 %v2741, %v2742
  %v2744 = vsub.s32 4294967266, %v2739
  %v2745 = vadd.s32 %v2744, 127
  %v2746 = vshll.u32 %v2745, 23
  %v2747 = vor.u32 4788187, %v2746
  %v2748 = vand.u32 2147483647, %v2747
  %v2750 = vcvt.s32.f32 %v2743
  %v2751 = vmul.f32 %v2750, %v2748
  %v2752 = vxor.u32 %v2751, 2147483648
  %v2753 = vsel %vm2670, %v2752, %v2751
  %v2754 = vsub.s32 4, %v2730
  %v2755 = vsel %vm2670, %v2754, %v2730
  %v2756 = vsel %vm2669, %v77, %v2753
  %v2757 = vsel %vm2669, 0, %v2755
  %v2758 = vcosq.f32.pop %v2756
  %v2759 = vsinq.f32.pop %v2756
  %vm2760 = vweird.f32 %v77
  %v2761 = vadd.s32 %v2757, 3
  %v2762 = vand.u32 %v2761, 3
  %vm2763 = vcmp.lt.s32.totalorder %v2762, 2
  %vm2764 = vcmp.eq.s32.totalorder %v2762, 0
  %v2765 = vxor.u32 %v2759, 2147483648
  %v2766 = vsel %vm2764, %v2758, %v2765
  %vm2767 = vcmp.eq.s32.totalorder %v2762, 2
  %v2768 = vxor.u32 %v2758, 2147483648
  %v2769 = vsel %vm2767, %v2768, %v2759
  %v2770 = vsel %vm2763, %v2766, %v2769
  %v2771 = vsel %vm2760, nan, %v2770
  %v2772 = vand.u32 2147483647, %v78
  %vm2773 = vcmp.le.f32.partialorder %v2772, 0.7853982
  %vm2774 = vcmp.lt.s32.totalorder %v78, 0
  %v2775 = vand.u32 %v78, 2139095040
  %v2776 = vshrl.u32 %v2775, 23
  %v2777 = vsub.s32 %v2776, 127
  %v2778 = vand.u32 2147483647, %v78
  %v2779 = vand.u32 %v2778, 8388607
  %v2780 = vor.u32 %v2779, 8388608
  %v2781 = vsub.s32 0, %v2780
  %v2782 = vadd.s32 %v2777, 1
  %vm2783 = vcmp.gt.s32.totalorder %v2782, 0
  %v2784 = vsel %vm2783, %v2782, 0
  %v2785 = vshrl.u32 %v2784, 5
  %v2786 = vand.u32 %v2784, 31
  %v2787 = vsub.s32 32, %v2786
  %v2788 = vshrl.u32 683565275, %v2787
  %v2789 = vshll.u32 683565275, %v2786
  %v2790 = vshrl.u32 2475754826, %v2787
  %v2791 = vor.u32 %v2789, %v2790
  %v2792 = vshll.u32 2475754826, %v2786
  %v2793 = vshrl.u32 2131351028, %v2787
  %v2794 = vor.u32 %v2792, %v2793
  %v2795 = vshll.u32 2131351028, %v2786
  %v2796 = vshrl.u32 2102212464, %v2787
  %v2797 = vor.u32 %v2795, %v2796
  %v2798 = vshll.u32 2102212464, %v2786
  %v2799 = vshrl.u32 920167782, %v2787
  %v2800 = vor.u32 %v2798, %v2799
  %v2801 = vshll.u32 920167782, %v2786
  %v2802 = vshrl.u32 1326507024, %v2787
  %v2803 = vor.u32 %v2801, %v2802
  %vm2804 = vcmp.lt.s32.totalorder %v2785, 1
  %vm2805 = vcmp.lt.s32.totalorder %v2785, 2
  %vm2806 = vcmp.lt.s32.totalorder %v2785, 3
  %vm2807 = vcmp.lt.s32.totalorder %v2785, 4
  %v2808 = vsel %vm2804, %v2788, %v2791
  %v2809 = vsel %vm2807, %v2797, 2102212464
  %v2810 = vsel %vm2806, %v2794, %v2809
  %v2811 = vsel %vm2805, %v2808, %v2810
  %v2812 = vsel %vm2804, %v2791, %v2794
  %v2813 = vsel %vm2807, %v2800, 920167782
  %v2814 = vsel %vm2806, %v2797, %v2813
  %v2815 = vsel %vm2805, %v2812, %v2814
  %v2816 = vsel %vm2804, %v2794, %v2797
  %v2817 = vsel %vm2807, %v2803, 1326507024
  %v2818 = vsel %vm2806, %v2800, %v2817
  %v2819 = vsel %vm2805, %v2816, %v2818
  %v2820 = vshll.u32 %v2780, 8
  %v2821 = vmul.u32.u64.compose %v2820, %v2819
  %v2822 = vextract.low.u32 %v2821
  %v2823 = vextract.high.u32 %v2821
  %v2824 = vmul.u32.u64.compose %v2820, %v2815
  %v2825 = vextract.low.u32 %v2824
  %v2826 = vextract.high.u32 %v2824
  %v2827 = vmul.u32 %v2820, %v2811
  %v2828 = vadd.s32 %v2823, %v2825
  %vm2829 = vc.u32 %v2823, %v2825
  %v2830 = vadd.s32 %v2826, 1
  %v2831 = vsel %vm2829, %v2830, %v2826
  %v2832 = vadd.s32 %v2827, %v2831
  %v2833 = vadd.s32 %v2832, 536870912
  %v2834 = vshrl.u32 %v2833, 30
  %v2835 = vshll.u32 %v2834, 30
  %v2836 = vsub.s32 %v2832, %v2835
  %vm2837 = vcmp.lt.s32.totalorder %v2836, 0
  %v2838 = vsub.s32 0, %v2836
  %v2839 = vsel %vm2837, %v2838, %v2836
  %v2840 = vclz %v2839
  %v2841 = vsub.s32 %v2840, 2
  %vm2842 = vcmp.gt.s32.totalorder 0, %v2841
  %v2843 = vsel %vm2842, 0, %v2841
  %v2844 = vsub.s32 32, %v2843
  %v2845 = vshll.u32 %v2836, %v2843
  %v2846 = vshrl.u32 %v2828, %v2844
  %v2847 = vor.u32 %v2845, %v2846
  %v2848 = vsub.s32 4294967266, %v2843
  %v2849 = vadd.s32 %v2848, 127
  %v2850 = vshll.u32 %v2849, 23
  %v2851 = vor.u32 4788187, %v2850
  %v2852 = vand.u32 2147483647, %v2851
  %v2854 = vcvt.s32.f32 %v2847
  %v2855 = vmul.f32 %v2854, %v2852
  %v2856 = vxor.u32 %v2855, 2147483648
  %v2857 = vsel %vm2774, %v2856, %v2855
  %v2858 = vsub.s32 4, %v2834
  %v2859 = vsel %vm2774, %v2858, %v2834
  %v2860 = vsel %vm2773, %v78, %v2857
  %v2861 = vsel %vm2773, 0, %v2859
  %v2862 = vcosq.f32.pop %v2860
  %v2863 = vsinq.f32.pop %v2860
  %vm2864 = vweird.f32 %v78
  %v2865 = vadd.s32 %v2861, 3
  %v2866 = vand.u32 %v2865, 3
  %vm2867 = vcmp.lt.s32.totalorder %v2866, 2
  %vm2868 = vcmp.eq.s32.totalorder %v2866, 0
  %v2869 = vxor.u32 %v2863, 2147483648
  %v2870 = vsel %vm2868, %v2862, %v2869
  %vm2871 = vcmp.eq.s32.totalorder %v2866, 2
  %v2872 = vxor.u32 %v2862, 2147483648
  %v2873 = vsel %vm2871, %v2872, %v2863
  %v2874 = vsel %vm2867, %v2870, %v2873
  %v2875 = vsel %vm2864, nan, %v2874
  %v2876 = vand.u32 2147483647, %v79
  %vm2877 = vcmp.le.f32.partialorder %v2876, 0.7853982
  %vm2878 = vcmp.lt.s32.totalorder %v79, 0
  %v2879 = vand.u32 %v79, 2139095040
  %v2880 = vshrl.u32 %v2879, 23
  %v2881 = vsub.s32 %v2880, 127
  %v2882 = vand.u32 2147483647, %v79
  %v2883 = vand.u32 %v2882, 8388607
  %v2884 = vor.u32 %v2883, 8388608
  %v2885 = vsub.s32 0, %v2884
  %v2886 = vadd.s32 %v2881, 1
  %vm2887 = vcmp.gt.s32.totalorder %v2886, 0
  %v2888 = vsel %vm2887, %v2886, 0
  %v2889 = vshrl.u32 %v2888, 5
  %v2890 = vand.u32 %v2888, 31
  %v2891 = vsub.s32 32, %v2890
  %v2892 = vshrl.u32 683565275, %v2891
  %v2893 = vshll.u32 683565275, %v2890
  %v2894 = vshrl.u32 2475754826, %v2891
  %v2895 = vor.u32 %v2893, %v2894
  %v2896 = vshll.u32 2475754826, %v2890
  %v2897 = vshrl.u32 2131351028, %v2891
  %v2898 = vor.u32 %v2896, %v2897
  %v2899 = vshll.u32 2131351028, %v2890
  %v2900 = vshrl.u32 2102212464, %v2891
  %v2901 = vor.u32 %v2899, %v2900
  %v2902 = vshll.u32 2102212464, %v2890
  %v2903 = vshrl.u32 920167782, %v2891
  %v2904 = vor.u32 %v2902, %v2903
  %v2905 = vshll.u32 920167782, %v2890
  %v2906 = vshrl.u32 1326507024, %v2891
  %v2907 = vor.u32 %v2905, %v2906
  %vm2908 = vcmp.lt.s32.totalorder %v2889, 1
  %vm2909 = vcmp.lt.s32.totalorder %v2889, 2
  %vm2910 = vcmp.lt.s32.totalorder %v2889, 3
  %vm2911 = vcmp.lt.s32.totalorder %v2889, 4
  %v2912 = vsel %vm2908, %v2892, %v2895
  %v2913 = vsel %vm2911, %v2901, 2102212464
  %v2914 = vsel %vm2910, %v2898, %v2913
  %v2915 = vsel %vm2909, %v2912, %v2914
  %v2916 = vsel %vm2908, %v2895, %v2898
  %v2917 = vsel %vm2911, %v2904, 920167782
  %v2918 = vsel %vm2910, %v2901, %v2917
  %v2919 = vsel %vm2909, %v2916, %v2918
  %v2920 = vsel %vm2908, %v2898, %v2901
  %v2921 = vsel %vm2911, %v2907, 1326507024
  %v2922 = vsel %vm2910, %v2904, %v2921
  %v2923 = vsel %vm2909, %v2920, %v2922
  %v2924 = vshll.u32 %v2884, 8
  %v2925 = vmul.u32.u64.compose %v2924, %v2923
  %v2926 = vextract.low.u32 %v2925
  %v2927 = vextract.high.u32 %v2925
  %v2928 = vmul.u32.u64.compose %v2924, %v2919
  %v2929 = vextract.low.u32 %v2928
  %v2930 = vextract.high.u32 %v2928
  %v2931 = vmul.u32 %v2924, %v2915
  %v2932 = vadd.s32 %v2927, %v2929
  %vm2933 = vc.u32 %v2927, %v2929
  %v2934 = vadd.s32 %v2930, 1
  %v2935 = vsel %vm2933, %v2934, %v2930
  %v2936 = vadd.s32 %v2931, %v2935
  %v2937 = vadd.s32 %v2936, 536870912
  %v2938 = vshrl.u32 %v2937, 30
  %v2939 = vshll.u32 %v2938, 30
  %v2940 = vsub.s32 %v2936, %v2939
  %vm2941 = vcmp.lt.s32.totalorder %v2940, 0
  %v2942 = vsub.s32 0, %v2940
  %v2943 = vsel %vm2941, %v2942, %v2940
  %v2944 = vclz %v2943
  %v2945 = vsub.s32 %v2944, 2
  %vm2946 = vcmp.gt.s32.totalorder 0, %v2945
  %v2947 = vsel %vm2946, 0, %v2945
  %v2948 = vsub.s32 32, %v2947
  %v2949 = vshll.u32 %v2940, %v2947
  %v2950 = vshrl.u32 %v2932, %v2948
  %v2951 = vor.u32 %v2949, %v2950
  %v2952 = vsub.s32 4294967266, %v2947
  %v2953 = vadd.s32 %v2952, 127
  %v2954 = vshll.u32 %v2953, 23
  %v2955 = vor.u32 4788187, %v2954
  %v2956 = vand.u32 2147483647, %v2955
  %v2958 = vcvt.s32.f32 %v2951
  %v2959 = vmul.f32 %v2958, %v2956
  %v2960 = vxor.u32 %v2959, 2147483648
  %v2961 = vsel %vm2878, %v2960, %v2959
  %v2962 = vsub.s32 4, %v2938
  %v2963 = vsel %vm2878, %v2962, %v2938
  %v2964 = vsel %vm2877, %v79, %v2961
  %v2965 = vsel %vm2877, 0, %v2963
  %v2966 = vcosq.f32.pop %v2964
  %v2967 = vsinq.f32.pop %v2964
  %vm2968 = vweird.f32 %v79
  %v2969 = vadd.s32 %v2965, 3
  %v2970 = vand.u32 %v2969, 3
  %vm2971 = vcmp.lt.s32.totalorder %v2970, 2
  %vm2972 = vcmp.eq.s32.totalorder %v2970, 0
  %v2973 = vxor.u32 %v2967, 2147483648
  %v2974 = vsel %vm2972, %v2966, %v2973
  %vm2975 = vcmp.eq.s32.totalorder %v2970, 2
  %v2976 = vxor.u32 %v2966, 2147483648
  %v2977 = vsel %vm2975, %v2976, %v2967
  %v2978 = vsel %vm2971, %v2974, %v2977
  %v2979 = vsel %vm2968, nan, %v2978
  %v2980 = vand.u32 2147483647, %v80
  %vm2981 = vcmp.le.f32.partialorder %v2980, 0.7853982
  %vm2982 = vcmp.lt.s32.totalorder %v80, 0
  %v2983 = vand.u32 %v80, 2139095040
  %v2984 = vshrl.u32 %v2983, 23
  %v2985 = vsub.s32 %v2984, 127
  %v2986 = vand.u32 2147483647, %v80
  %v2987 = vand.u32 %v2986, 8388607
  %v2988 = vor.u32 %v2987, 8388608
  %v2989 = vsub.s32 0, %v2988
  %v2990 = vadd.s32 %v2985, 1
  %vm2991 = vcmp.gt.s32.totalorder %v2990, 0
  %v2992 = vsel %vm2991, %v2990, 0
  %v2993 = vshrl.u32 %v2992, 5
  %v2994 = vand.u32 %v2992, 31
  %v2995 = vsub.s32 32, %v2994
  %v2996 = vshrl.u32 683565275, %v2995
  %v2997 = vshll.u32 683565275, %v2994
  %v2998 = vshrl.u32 2475754826, %v2995
  %v2999 = vor.u32 %v2997, %v2998
  %v3000 = vshll.u32 2475754826, %v2994
  %v3001 = vshrl.u32 2131351028, %v2995
  %v3002 = vor.u32 %v3000, %v3001
  %v3003 = vshll.u32 2131351028, %v2994
  %v3004 = vshrl.u32 2102212464, %v2995
  %v3005 = vor.u32 %v3003, %v3004
  %v3006 = vshll.u32 2102212464, %v2994
  %v3007 = vshrl.u32 920167782, %v2995
  %v3008 = vor.u32 %v3006, %v3007
  %v3009 = vshll.u32 920167782, %v2994
  %v3010 = vshrl.u32 1326507024, %v2995
  %v3011 = vor.u32 %v3009, %v3010
  %vm3012 = vcmp.lt.s32.totalorder %v2993, 1
  %vm3013 = vcmp.lt.s32.totalorder %v2993, 2
  %vm3014 = vcmp.lt.s32.totalorder %v2993, 3
  %vm3015 = vcmp.lt.s32.totalorder %v2993, 4
  %v3016 = vsel %vm3012, %v2996, %v2999
  %v3017 = vsel %vm3015, %v3005, 2102212464
  %v3018 = vsel %vm3014, %v3002, %v3017
  %v3019 = vsel %vm3013, %v3016, %v3018
  %v3020 = vsel %vm3012, %v2999, %v3002
  %v3021 = vsel %vm3015, %v3008, 920167782
  %v3022 = vsel %vm3014, %v3005, %v3021
  %v3023 = vsel %vm3013, %v3020, %v3022
  %v3024 = vsel %vm3012, %v3002, %v3005
  %v3025 = vsel %vm3015, %v3011, 1326507024
  %v3026 = vsel %vm3014, %v3008, %v3025
  %v3027 = vsel %vm3013, %v3024, %v3026
  %v3028 = vshll.u32 %v2988, 8
  %v3029 = vmul.u32.u64.compose %v3028, %v3027
  %v3030 = vextract.low.u32 %v3029
  %v3031 = vextract.high.u32 %v3029
  %v3032 = vmul.u32.u64.compose %v3028, %v3023
  %v3033 = vextract.low.u32 %v3032
  %v3034 = vextract.high.u32 %v3032
  %v3035 = vmul.u32 %v3028, %v3019
  %v3036 = vadd.s32 %v3031, %v3033
  %vm3037 = vc.u32 %v3031, %v3033
  %v3038 = vadd.s32 %v3034, 1
  %v3039 = vsel %vm3037, %v3038, %v3034
  %v3040 = vadd.s32 %v3035, %v3039
  %v3041 = vadd.s32 %v3040, 536870912
  %v3042 = vshrl.u32 %v3041, 30
  %v3043 = vshll.u32 %v3042, 30
  %v3044 = vsub.s32 %v3040, %v3043
  %vm3045 = vcmp.lt.s32.totalorder %v3044, 0
  %v3046 = vsub.s32 0, %v3044
  %v3047 = vsel %vm3045, %v3046, %v3044
  %v3048 = vclz %v3047
  %v3049 = vsub.s32 %v3048, 2
  %vm3050 = vcmp.gt.s32.totalorder 0, %v3049
  %v3051 = vsel %vm3050, 0, %v3049
  %v3052 = vsub.s32 32, %v3051
  %v3053 = vshll.u32 %v3044, %v3051
  %v3054 = vshrl.u32 %v3036, %v3052
  %v3055 = vor.u32 %v3053, %v3054
  %v3056 = vsub.s32 4294967266, %v3051
  %v3057 = vadd.s32 %v3056, 127
  %v3058 = vshll.u32 %v3057, 23
  %v3059 = vor.u32 4788187, %v3058
  %v3060 = vand.u32 2147483647, %v3059
  %v3062 = vcvt.s32.f32 %v3055
  %v3063 = vmul.f32 %v3062, %v3060
  %v3064 = vxor.u32 %v3063, 2147483648
  %v3065 = vsel %vm2982, %v3064, %v3063
  %v3066 = vsub.s32 4, %v3042
  %v3067 = vsel %vm2982, %v3066, %v3042
  %v3068 = vsel %vm2981, %v80, %v3065
  %v3069 = vsel %vm2981, 0, %v3067
  %v3070 = vcosq.f32.pop %v3068
  %v3071 = vsinq.f32.pop %v3068
  %vm3072 = vweird.f32 %v80
  %v3073 = vadd.s32 %v3069, 3
  %v3074 = vand.u32 %v3073, 3
  %vm3075 = vcmp.lt.s32.totalorder %v3074, 2
  %vm3076 = vcmp.eq.s32.totalorder %v3074, 0
  %v3077 = vxor.u32 %v3071, 2147483648
  %v3078 = vsel %vm3076, %v3070, %v3077
  %vm3079 = vcmp.eq.s32.totalorder %v3074, 2
  %v3080 = vxor.u32 %v3070, 2147483648
  %v3081 = vsel %vm3079, %v3080, %v3071
  %v3082 = vsel %vm3075, %v3078, %v3081
  %v3083 = vsel %vm3072, nan, %v3082
  %v3084 = vand.u32 2147483647, %v81
  %vm3085 = vcmp.le.f32.partialorder %v3084, 0.7853982
  %vm3086 = vcmp.lt.s32.totalorder %v81, 0
  %v3087 = vand.u32 %v81, 2139095040
  %v3088 = vshrl.u32 %v3087, 23
  %v3089 = vsub.s32 %v3088, 127
  %v3090 = vand.u32 2147483647, %v81
  %v3091 = vand.u32 %v3090, 8388607
  %v3092 = vor.u32 %v3091, 8388608
  %v3093 = vsub.s32 0, %v3092
  %v3094 = vadd.s32 %v3089, 1
  %vm3095 = vcmp.gt.s32.totalorder %v3094, 0
  %v3096 = vsel %vm3095, %v3094, 0
  %v3097 = vshrl.u32 %v3096, 5
  %v3098 = vand.u32 %v3096, 31
  %v3099 = vsub.s32 32, %v3098
  %v3100 = vshrl.u32 683565275, %v3099
  %v3101 = vshll.u32 683565275, %v3098
  %v3102 = vshrl.u32 2475754826, %v3099
  %v3103 = vor.u32 %v3101, %v3102
  %v3104 = vshll.u32 2475754826, %v3098
  %v3105 = vshrl.u32 2131351028, %v3099
  %v3106 = vor.u32 %v3104, %v3105
  %v3107 = vshll.u32 2131351028, %v3098
  %v3108 = vshrl.u32 2102212464, %v3099
  %v3109 = vor.u32 %v3107, %v3108
  %v3110 = vshll.u32 2102212464, %v3098
  %v3111 = vshrl.u32 920167782, %v3099
  %v3112 = vor.u32 %v3110, %v3111
  %v3113 = vshll.u32 920167782, %v3098
  %v3114 = vshrl.u32 1326507024, %v3099
  %v3115 = vor.u32 %v3113, %v3114
  %vm3116 = vcmp.lt.s32.totalorder %v3097, 1
  %vm3117 = vcmp.lt.s32.totalorder %v3097, 2
  %vm3118 = vcmp.lt.s32.totalorder %v3097, 3
  %vm3119 = vcmp.lt.s32.totalorder %v3097, 4
  %v3120 = vsel %vm3116, %v3100, %v3103
  %v3121 = vsel %vm3119, %v3109, 2102212464
  %v3122 = vsel %vm3118, %v3106, %v3121
  %v3123 = vsel %vm3117, %v3120, %v3122
  %v3124 = vsel %vm3116, %v3103, %v3106
  %v3125 = vsel %vm3119, %v3112, 920167782
  %v3126 = vsel %vm3118, %v3109, %v3125
  %v3127 = vsel %vm3117, %v3124, %v3126
  %v3128 = vsel %vm3116, %v3106, %v3109
  %v3129 = vsel %vm3119, %v3115, 1326507024
  %v3130 = vsel %vm3118, %v3112, %v3129
  %v3131 = vsel %vm3117, %v3128, %v3130
  %v3132 = vshll.u32 %v3092, 8
  %v3133 = vmul.u32.u64.compose %v3132, %v3131
  %v3134 = vextract.low.u32 %v3133
  %v3135 = vextract.high.u32 %v3133
  %v3136 = vmul.u32.u64.compose %v3132, %v3127
  %v3137 = vextract.low.u32 %v3136
  %v3138 = vextract.high.u32 %v3136
  %v3139 = vmul.u32 %v3132, %v3123
  %v3140 = vadd.s32 %v3135, %v3137
  %vm3141 = vc.u32 %v3135, %v3137
  %v3142 = vadd.s32 %v3138, 1
  %v3143 = vsel %vm3141, %v3142, %v3138
  %v3144 = vadd.s32 %v3139, %v3143
  %v3145 = vadd.s32 %v3144, 536870912
  %v3146 = vshrl.u32 %v3145, 30
  %v3147 = vshll.u32 %v3146, 30
  %v3148 = vsub.s32 %v3144, %v3147
  %vm3149 = vcmp.lt.s32.totalorder %v3148, 0
  %v3150 = vsub.s32 0, %v3148
  %v3151 = vsel %vm3149, %v3150, %v3148
  %v3152 = vclz %v3151
  %v3153 = vsub.s32 %v3152, 2
  %vm3154 = vcmp.gt.s32.totalorder 0, %v3153
  %v3155 = vsel %vm3154, 0, %v3153
  %v3156 = vsub.s32 32, %v3155
  %v3157 = vshll.u32 %v3148, %v3155
  %v3158 = vshrl.u32 %v3140, %v3156
  %v3159 = vor.u32 %v3157, %v3158
  %v3160 = vsub.s32 4294967266, %v3155
  %v3161 = vadd.s32 %v3160, 127
  %v3162 = vshll.u32 %v3161, 23
  %v3163 = vor.u32 4788187, %v3162
  %v3164 = vand.u32 2147483647, %v3163
  %v3166 = vcvt.s32.f32 %v3159
  %v3167 = vmul.f32 %v3166, %v3164
  %v3168 = vxor.u32 %v3167, 2147483648
  %v3169 = vsel %vm3086, %v3168, %v3167
  %v3170 = vsub.s32 4, %v3146
  %v3171 = vsel %vm3086, %v3170, %v3146
  %v3172 = vsel %vm3085, %v81, %v3169
  %v3173 = vsel %vm3085, 0, %v3171
  %v3174 = vcosq.f32.pop %v3172
  %v3175 = vsinq.f32.pop %v3172
  %vm3176 = vweird.f32 %v81
  %v3177 = vadd.s32 %v3173, 3
  %v3178 = vand.u32 %v3177, 3
  %vm3179 = vcmp.lt.s32.totalorder %v3178, 2
  %vm3180 = vcmp.eq.s32.totalorder %v3178, 0
  %v3181 = vxor.u32 %v3175, 2147483648
  %v3182 = vsel %vm3180, %v3174, %v3181
  %vm3183 = vcmp.eq.s32.totalorder %v3178, 2
  %v3184 = vxor.u32 %v3174, 2147483648
  %v3185 = vsel %vm3183, %v3184, %v3175
  %v3186 = vsel %vm3179, %v3182, %v3185
  %v3187 = vsel %vm3176, nan, %v3186
  %v3188 = vand.u32 2147483647, %v82
  %vm3189 = vcmp.le.f32.partialorder %v3188, 0.7853982
  %vm3190 = vcmp.lt.s32.totalorder %v82, 0
  %v3191 = vand.u32 %v82, 2139095040
  %v3192 = vshrl.u32 %v3191, 23
  %v3193 = vsub.s32 %v3192, 127
  %v3194 = vand.u32 2147483647, %v82
  %v3195 = vand.u32 %v3194, 8388607
  %v3196 = vor.u32 %v3195, 8388608
  %v3197 = vsub.s32 0, %v3196
  %v3198 = vadd.s32 %v3193, 1
  %vm3199 = vcmp.gt.s32.totalorder %v3198, 0
  %v3200 = vsel %vm3199, %v3198, 0
  %v3201 = vshrl.u32 %v3200, 5
  %v3202 = vand.u32 %v3200, 31
  %v3203 = vsub.s32 32, %v3202
  %v3204 = vshrl.u32 683565275, %v3203
  %v3205 = vshll.u32 683565275, %v3202
  %v3206 = vshrl.u32 2475754826, %v3203
  %v3207 = vor.u32 %v3205, %v3206
  %v3208 = vshll.u32 2475754826, %v3202
  %v3209 = vshrl.u32 2131351028, %v3203
  %v3210 = vor.u32 %v3208, %v3209
  %v3211 = vshll.u32 2131351028, %v3202
  %v3212 = vshrl.u32 2102212464, %v3203
  %v3213 = vor.u32 %v3211, %v3212
  %v3214 = vshll.u32 2102212464, %v3202
  %v3215 = vshrl.u32 920167782, %v3203
  %v3216 = vor.u32 %v3214, %v3215
  %v3217 = vshll.u32 920167782, %v3202
  %v3218 = vshrl.u32 1326507024, %v3203
  %v3219 = vor.u32 %v3217, %v3218
  %vm3220 = vcmp.lt.s32.totalorder %v3201, 1
  %vm3221 = vcmp.lt.s32.totalorder %v3201, 2
  %vm3222 = vcmp.lt.s32.totalorder %v3201, 3
  %vm3223 = vcmp.lt.s32.totalorder %v3201, 4
  %v3224 = vsel %vm3220, %v3204, %v3207
  %v3225 = vsel %vm3223, %v3213, 2102212464
  %v3226 = vsel %vm3222, %v3210, %v3225
  %v3227 = vsel %vm3221, %v3224, %v3226
  %v3228 = vsel %vm3220, %v3207, %v3210
  %v3229 = vsel %vm3223, %v3216, 920167782
  %v3230 = vsel %vm3222, %v3213, %v3229
  %v3231 = vsel %vm3221, %v3228, %v3230
  %v3232 = vsel %vm3220, %v3210, %v3213
  %v3233 = vsel %vm3223, %v3219, 1326507024
  %v3234 = vsel %vm3222, %v3216, %v3233
  %v3235 = vsel %vm3221, %v3232, %v3234
  %v3236 = vshll.u32 %v3196, 8
  %v3237 = vmul.u32.u64.compose %v3236, %v3235
  %v3238 = vextract.low.u32 %v3237
  %v3239 = vextract.high.u32 %v3237
  %v3240 = vmul.u32.u64.compose %v3236, %v3231
  %v3241 = vextract.low.u32 %v3240
  %v3242 = vextract.high.u32 %v3240
  %v3243 = vmul.u32 %v3236, %v3227
  %v3244 = vadd.s32 %v3239, %v3241
  %vm3245 = vc.u32 %v3239, %v3241
  %v3246 = vadd.s32 %v3242, 1
  %v3247 = vsel %vm3245, %v3246, %v3242
  %v3248 = vadd.s32 %v3243, %v3247
  %v3249 = vadd.s32 %v3248, 536870912
  %v3250 = vshrl.u32 %v3249, 30
  %v3251 = vshll.u32 %v3250, 30
  %v3252 = vsub.s32 %v3248, %v3251
  %vm3253 = vcmp.lt.s32.totalorder %v3252, 0
  %v3254 = vsub.s32 0, %v3252
  %v3255 = vsel %vm3253, %v3254, %v3252
  %v3256 = vclz %v3255
  %v3257 = vsub.s32 %v3256, 2
  %vm3258 = vcmp.gt.s32.totalorder 0, %v3257
  %v3259 = vsel %vm3258, 0, %v3257
  %v3260 = vsub.s32 32, %v3259
  %v3261 = vshll.u32 %v3252, %v3259
  %v3262 = vshrl.u32 %v3244, %v3260
  %v3263 = vor.u32 %v3261, %v3262
  %v3264 = vsub.s32 4294967266, %v3259
  %v3265 = vadd.s32 %v3264, 127
  %v3266 = vshll.u32 %v3265, 23
  %v3267 = vor.u32 4788187, %v3266
  %v3268 = vand.u32 2147483647, %v3267
  %v3270 = vcvt.s32.f32 %v3263
  %v3271 = vmul.f32 %v3270, %v3268
  %v3272 = vxor.u32 %v3271, 2147483648
  %v3273 = vsel %vm3190, %v3272, %v3271
  %v3274 = vsub.s32 4, %v3250
  %v3275 = vsel %vm3190, %v3274, %v3250
  %v3276 = vsel %vm3189, %v82, %v3273
  %v3277 = vsel %vm3189, 0, %v3275
  %v3278 = vcosq.f32.pop %v3276
  %v3279 = vsinq.f32.pop %v3276
  %vm3280 = vweird.f32 %v82
  %v3281 = vadd.s32 %v3277, 3
  %v3282 = vand.u32 %v3281, 3
  %vm3283 = vcmp.lt.s32.totalorder %v3282, 2
  %vm3284 = vcmp.eq.s32.totalorder %v3282, 0
  %v3285 = vxor.u32 %v3279, 2147483648
  %v3286 = vsel %vm3284, %v3278, %v3285
  %vm3287 = vcmp.eq.s32.totalorder %v3282, 2
  %v3288 = vxor.u32 %v3278, 2147483648
  %v3289 = vsel %vm3287, %v3288, %v3279
  %v3290 = vsel %vm3283, %v3286, %v3289
  %v3291 = vsel %vm3280, nan, %v3290
  %v3292 = vand.u32 2147483647, %v83
  %vm3293 = vcmp.le.f32.partialorder %v3292, 0.7853982
  %vm3294 = vcmp.lt.s32.totalorder %v83, 0
  %v3295 = vand.u32 %v83, 2139095040
  %v3296 = vshrl.u32 %v3295, 23
  %v3297 = vsub.s32 %v3296, 127
  %v3298 = vand.u32 2147483647, %v83
  %v3299 = vand.u32 %v3298, 8388607
  %v3300 = vor.u32 %v3299, 8388608
  %v3301 = vsub.s32 0, %v3300
  %v3302 = vadd.s32 %v3297, 1
  %vm3303 = vcmp.gt.s32.totalorder %v3302, 0
  %v3304 = vsel %vm3303, %v3302, 0
  %v3305 = vshrl.u32 %v3304, 5
  %v3306 = vand.u32 %v3304, 31
  %v3307 = vsub.s32 32, %v3306
  %v3308 = vshrl.u32 683565275, %v3307
  %v3309 = vshll.u32 683565275, %v3306
  %v3310 = vshrl.u32 2475754826, %v3307
  %v3311 = vor.u32 %v3309, %v3310
  %v3312 = vshll.u32 2475754826, %v3306
  %v3313 = vshrl.u32 2131351028, %v3307
  %v3314 = vor.u32 %v3312, %v3313
  %v3315 = vshll.u32 2131351028, %v3306
  %v3316 = vshrl.u32 2102212464, %v3307
  %v3317 = vor.u32 %v3315, %v3316
  %v3318 = vshll.u32 2102212464, %v3306
  %v3319 = vshrl.u32 920167782, %v3307
  %v3320 = vor.u32 %v3318, %v3319
  %v3321 = vshll.u32 920167782, %v3306
  %v3322 = vshrl.u32 1326507024, %v3307
  %v3323 = vor.u32 %v3321, %v3322
  %vm3324 = vcmp.lt.s32.totalorder %v3305, 1
  %vm3325 = vcmp.lt.s32.totalorder %v3305, 2
  %vm3326 = vcmp.lt.s32.totalorder %v3305, 3
  %vm3327 = vcmp.lt.s32.totalorder %v3305, 4
  %v3328 = vsel %vm3324, %v3308, %v3311
  %v3329 = vsel %vm3327, %v3317, 2102212464
  %v3330 = vsel %vm3326, %v3314, %v3329
  %v3331 = vsel %vm3325, %v3328, %v3330
  %v3332 = vsel %vm3324, %v3311, %v3314
  %v3333 = vsel %vm3327, %v3320, 920167782
  %v3334 = vsel %vm3326, %v3317, %v3333
  %v3335 = vsel %vm3325, %v3332, %v3334
  %v3336 = vsel %vm3324, %v3314, %v3317
  %v3337 = vsel %vm3327, %v3323, 1326507024
  %v3338 = vsel %vm3326, %v3320, %v3337
  %v3339 = vsel %vm3325, %v3336, %v3338
  %v3340 = vshll.u32 %v3300, 8
  %v3341 = vmul.u32.u64.compose %v3340, %v3339
  %v3342 = vextract.low.u32 %v3341
  %v3343 = vextract.high.u32 %v3341
  %v3344 = vmul.u32.u64.compose %v3340, %v3335
  %v3345 = vextract.low.u32 %v3344
  %v3346 = vextract.high.u32 %v3344
  %v3347 = vmul.u32 %v3340, %v3331
  %v3348 = vadd.s32 %v3343, %v3345
  %vm3349 = vc.u32 %v3343, %v3345
  %v3350 = vadd.s32 %v3346, 1
  %v3351 = vsel %vm3349, %v3350, %v3346
  %v3352 = vadd.s32 %v3347, %v3351
  %v3353 = vadd.s32 %v3352, 536870912
  %v3354 = vshrl.u32 %v3353, 30
  %v3355 = vshll.u32 %v3354, 30
  %v3356 = vsub.s32 %v3352, %v3355
  %vm3357 = vcmp.lt.s32.totalorder %v3356, 0
  %v3358 = vsub.s32 0, %v3356
  %v3359 = vsel %vm3357, %v3358, %v3356
  %v3360 = vclz %v3359
  %v3361 = vsub.s32 %v3360, 2
  %vm3362 = vcmp.gt.s32.totalorder 0, %v3361
  %v3363 = vsel %vm3362, 0, %v3361
  %v3364 = vsub.s32 32, %v3363
  %v3365 = vshll.u32 %v3356, %v3363
  %v3366 = vshrl.u32 %v3348, %v3364
  %v3367 = vor.u32 %v3365, %v3366
  %v3368 = vsub.s32 4294967266, %v3363
  %v3369 = vadd.s32 %v3368, 127
  %v3370 = vshll.u32 %v3369, 23
  %v3371 = vor.u32 4788187, %v3370
  %v3372 = vand.u32 2147483647, %v3371
  %v3374 = vcvt.s32.f32 %v3367
  %v3375 = vmul.f32 %v3374, %v3372
  %v3376 = vxor.u32 %v3375, 2147483648
  %v3377 = vsel %vm3294, %v3376, %v3375
  %v3378 = vsub.s32 4, %v3354
  %v3379 = vsel %vm3294, %v3378, %v3354
  %v3380 = vsel %vm3293, %v83, %v3377
  %v3381 = vsel %vm3293, 0, %v3379
  %v3382 = vcosq.f32.pop %v3380
  %v3383 = vsinq.f32.pop %v3380
  %vm3384 = vweird.f32 %v83
  %v3385 = vadd.s32 %v3381, 3
  %v3386 = vand.u32 %v3385, 3
  %vm3387 = vcmp.lt.s32.totalorder %v3386, 2
  %vm3388 = vcmp.eq.s32.totalorder %v3386, 0
  %v3389 = vxor.u32 %v3383, 2147483648
  %v3390 = vsel %vm3388, %v3382, %v3389
  %vm3391 = vcmp.eq.s32.totalorder %v3386, 2
  %v3392 = vxor.u32 %v3382, 2147483648
  %v3393 = vsel %vm3391, %v3392, %v3383
  %v3394 = vsel %vm3387, %v3390, %v3393
  %v3395 = vsel %vm3384, nan, %v3394
  %vm3396 = vcmask 130048
  %3397 = vst.msk [vmem:[%s1] sm:$0xff] %vm3396, %v186
  %3398 = vst.msk [vmem:[%s1 + $0x8] sm:$0xff] %vm3396, %v289
  %3399 = vst.msk [vmem:[%s1 + $0x10] sm:$0xff] %vm3396, %v392
  %3400 = vst.msk [vmem:[%s1 + $0x18] sm:$0xff] %vm3396, %v495
  %3401 = vst.msk [vmem:[%s1 + $0x20] sm:$0xff] %vm3396, %v598
  %3402 = vst.msk [vmem:[%s1 + $0x28] sm:$0xff] %vm3396, %v701
  %3403 = vst.msk [vmem:[%s1 + $0x30] sm:$0xff] %vm3396, %v804
  %3404 = vst.msk [vmem:[%s1 + $0x38] sm:$0xff] %vm3396, %v907
  %3405 = vst.msk [vmem:[%s1 + $0x40] sm:$0xff] %vm3396, %v1010
  %3406 = vst.msk [vmem:[%s1 + $0x48] sm:$0xff] %vm3396, %v1113
  %3407 = vst.msk [vmem:[%s1 + $0x50] sm:$0xff] %vm3396, %v1216
  %3408 = vst.msk [vmem:[%s1 + $0x58] sm:$0xff] %vm3396, %v1319
  %3409 = vst.msk [vmem:[%s1 + $0x60] sm:$0xff] %vm3396, %v1422
  %3410 = vst.msk [vmem:[%s1 + $0x68] sm:$0xff] %vm3396, %v1525
  %3411 = vst.msk [vmem:[%s1 + $0x70] sm:$0xff] %vm3396, %v1628
  %3412 = vst.msk [vmem:[%s1 + $0x78] sm:$0xff] %vm3396, %v1731
  %3429 = vrot.lane.b32.xlu0 %v186, 16
  %v3430 = vpop.permute.xlu0 %3429
  %3431 = vrot.lane.b32.xlu0 %v289, 16
  %v3432 = vpop.permute.xlu0 %3431
  %3433 = vrot.lane.b32.xlu0 %v392, 16
  %v3434 = vpop.permute.xlu0 %3433
  %3435 = vrot.lane.b32.xlu0 %v495, 16
  %v3436 = vpop.permute.xlu0 %3435
  %3437 = vrot.lane.b32.xlu0 %v598, 16
  %v3438 = vpop.permute.xlu0 %3437
  %3439 = vrot.lane.b32.xlu0 %v701, 16
  %v3440 = vpop.permute.xlu0 %3439
  %3441 = vrot.lane.b32.xlu0 %v804, 16
  %v3442 = vpop.permute.xlu0 %3441
  %3443 = vrot.lane.b32.xlu0 %v907, 16
  %v3444 = vpop.permute.xlu0 %3443
  %3445 = vrot.lane.b32.xlu0 %v1010, 16
  %v3446 = vpop.permute.xlu0 %3445
  %3447 = vrot.lane.b32.xlu0 %v1113, 16
  %v3448 = vpop.permute.xlu0 %3447
  %3449 = vrot.lane.b32.xlu0 %v1216, 16
  %v3450 = vpop.permute.xlu0 %3449
  %3451 = vrot.lane.b32.xlu0 %v1319, 16
  %v3452 = vpop.permute.xlu0 %3451
  %3453 = vrot.lane.b32.xlu0 %v1422, 16
  %v3454 = vpop.permute.xlu0 %3453
  %3455 = vrot.lane.b32.xlu0 %v1525, 16
  %v3456 = vpop.permute.xlu0 %3455
  %3457 = vrot.lane.b32.xlu0 %v1628, 16
  %v3458 = vpop.permute.xlu0 %3457
  %3459 = vrot.lane.b32.xlu0 %v1731, 16
  %v3460 = vpop.permute.xlu0 %3459
  %vm3477 = vcmask 261248
  %3478 = vst.msk [vmem:[%s1] sm:$0xff] %vm3477, %v3430
  %3479 = vst.msk [vmem:[%s1 + $0x8] sm:$0xff] %vm3477, %v3432
  %3480 = vst.msk [vmem:[%s1 + $0x10] sm:$0xff] %vm3477, %v3434
  %3481 = vst.msk [vmem:[%s1 + $0x18] sm:$0xff] %vm3477, %v3436
  %3482 = vst.msk [vmem:[%s1 + $0x20] sm:$0xff] %vm3477, %v3438
  %3483 = vst.msk [vmem:[%s1 + $0x28] sm:$0xff] %vm3477, %v3440
  %3484 = vst.msk [vmem:[%s1 + $0x30] sm:$0xff] %vm3477, %v3442
  %3485 = vst.msk [vmem:[%s1 + $0x38] sm:$0xff] %vm3477, %v3444
  %3486 = vst.msk [vmem:[%s1 + $0x40] sm:$0xff] %vm3477, %v3446
  %3487 = vst.msk [vmem:[%s1 + $0x48] sm:$0xff] %vm3477, %v3448
  %3488 = vst.msk [vmem:[%s1 + $0x50] sm:$0xff] %vm3477, %v3450
  %3489 = vst.msk [vmem:[%s1 + $0x58] sm:$0xff] %vm3477, %v3452
  %3490 = vst.msk [vmem:[%s1 + $0x60] sm:$0xff] %vm3477, %v3454
  %3491 = vst.msk [vmem:[%s1 + $0x68] sm:$0xff] %vm3477, %v3456
  %3492 = vst.msk [vmem:[%s1 + $0x70] sm:$0xff] %vm3477, %v3458
  %3493 = vst.msk [vmem:[%s1 + $0x78] sm:$0xff] %vm3477, %v3460
  %3494 = vst.msk [vmem:[%s2] sm:$0xff] %vm3396, %v1835
  %3495 = vst.msk [vmem:[%s2 + $0x8] sm:$0xff] %vm3396, %v1939
  %3496 = vst.msk [vmem:[%s2 + $0x10] sm:$0xff] %vm3396, %v2043
  %3497 = vst.msk [vmem:[%s2 + $0x18] sm:$0xff] %vm3396, %v2147
  %3498 = vst.msk [vmem:[%s2 + $0x20] sm:$0xff] %vm3396, %v2251
  %3499 = vst.msk [vmem:[%s2 + $0x28] sm:$0xff] %vm3396, %v2355
  %3500 = vst.msk [vmem:[%s2 + $0x30] sm:$0xff] %vm3396, %v2459
  %3501 = vst.msk [vmem:[%s2 + $0x38] sm:$0xff] %vm3396, %v2563
  %3502 = vst.msk [vmem:[%s2 + $0x40] sm:$0xff] %vm3396, %v2667
  %3503 = vst.msk [vmem:[%s2 + $0x48] sm:$0xff] %vm3396, %v2771
  %3504 = vst.msk [vmem:[%s2 + $0x50] sm:$0xff] %vm3396, %v2875
  %3505 = vst.msk [vmem:[%s2 + $0x58] sm:$0xff] %vm3396, %v2979
  %3506 = vst.msk [vmem:[%s2 + $0x60] sm:$0xff] %vm3396, %v3083
  %3507 = vst.msk [vmem:[%s2 + $0x68] sm:$0xff] %vm3396, %v3187
  %3508 = vst.msk [vmem:[%s2 + $0x70] sm:$0xff] %vm3396, %v3291
  %3509 = vst.msk [vmem:[%s2 + $0x78] sm:$0xff] %vm3396, %v3395
  %3526 = vrot.lane.b32.xlu0 %v1835, 16
  %v3527 = vpop.permute.xlu0 %3526
  %3528 = vrot.lane.b32.xlu0 %v1939, 16
  %v3529 = vpop.permute.xlu0 %3528
  %3530 = vrot.lane.b32.xlu0 %v2043, 16
  %v3531 = vpop.permute.xlu0 %3530
  %3532 = vrot.lane.b32.xlu0 %v2147, 16
  %v3533 = vpop.permute.xlu0 %3532
  %3534 = vrot.lane.b32.xlu0 %v2251, 16
  %v3535 = vpop.permute.xlu0 %3534
  %3536 = vrot.lane.b32.xlu0 %v2355, 16
  %v3537 = vpop.permute.xlu0 %3536
  %3538 = vrot.lane.b32.xlu0 %v2459, 16
  %v3539 = vpop.permute.xlu0 %3538
  %3540 = vrot.lane.b32.xlu0 %v2563, 16
  %v3541 = vpop.permute.xlu0 %3540
  %3542 = vrot.lane.b32.xlu0 %v2667, 16
  %v3543 = vpop.permute.xlu0 %3542
  %3544 = vrot.lane.b32.xlu0 %v2771, 16
  %v3545 = vpop.permute.xlu0 %3544
  %3546 = vrot.lane.b32.xlu0 %v2875, 16
  %v3547 = vpop.permute.xlu0 %3546
  %3548 = vrot.lane.b32.xlu0 %v2979, 16
  %v3549 = vpop.permute.xlu0 %3548
  %3550 = vrot.lane.b32.xlu0 %v3083, 16
  %v3551 = vpop.permute.xlu0 %3550
  %3552 = vrot.lane.b32.xlu0 %v3187, 16
  %v3553 = vpop.permute.xlu0 %3552
  %3554 = vrot.lane.b32.xlu0 %v3291, 16
  %v3555 = vpop.permute.xlu0 %3554
  %3556 = vrot.lane.b32.xlu0 %v3395, 16
  %v3557 = vpop.permute.xlu0 %3556
  %3574 = vst.msk [vmem:[%s2] sm:$0xff] %vm3477, %v3527
  %3575 = vst.msk [vmem:[%s2 + $0x8] sm:$0xff] %vm3477, %v3529
  %3576 = vst.msk [vmem:[%s2 + $0x10] sm:$0xff] %vm3477, %v3531
  %3577 = vst.msk [vmem:[%s2 + $0x18] sm:$0xff] %vm3477, %v3533
  %3578 = vst.msk [vmem:[%s2 + $0x20] sm:$0xff] %vm3477, %v3535
  %3579 = vst.msk [vmem:[%s2 + $0x28] sm:$0xff] %vm3477, %v3537
  %3580 = vst.msk [vmem:[%s2 + $0x30] sm:$0xff] %vm3477, %v3539
  %3581 = vst.msk [vmem:[%s2 + $0x38] sm:$0xff] %vm3477, %v3541
  %3582 = vst.msk [vmem:[%s2 + $0x40] sm:$0xff] %vm3477, %v3543
  %3583 = vst.msk [vmem:[%s2 + $0x48] sm:$0xff] %vm3477, %v3545
  %3584 = vst.msk [vmem:[%s2 + $0x50] sm:$0xff] %vm3477, %v3547
  %3585 = vst.msk [vmem:[%s2 + $0x58] sm:$0xff] %vm3477, %v3549
  %3586 = vst.msk [vmem:[%s2 + $0x60] sm:$0xff] %vm3477, %v3551
  %3587 = vst.msk [vmem:[%s2 + $0x68] sm:$0xff] %vm3477, %v3553
  %3588 = vst.msk [vmem:[%s2 + $0x70] sm:$0xff] %vm3477, %v3555
  %3589 = vst.msk [vmem:[%s2 + $0x78] sm:$0xff] %vm3477, %v3557
  // Predicated region
  $region6: #{_build_rope_cache.1} parent=0 // pred_check
    _
  $region7: #{_build_rope_cache.1} parent=0 // pred_check_branch
    %3591 = sbr.rel (0) target = $region9
  $region8: #{_build_rope_cache.1} parent=0 // pred_region
    _
  $region9: #{_build_rope_cache.1} parent=0 // pred_fallthru
    _
  // Predicated region
  $region10: #{_build_rope_cache.1} parent=0 // pred_check
    _
  $region11: #{_build_rope_cache.1} parent=0 // pred_check_branch
    %3593 = sbr.rel (0) target = $region13
  $region12: #{_build_rope_cache.1} parent=0 // pred_region
    _
  $region13: #{_build_rope_cache.1} parent=0 // pred_fallthru
    _
  // Predicated region
  $region14: #{_build_rope_cache.1} parent=0 // pred_check
    _
  $region15: #{_build_rope_cache.1} parent=0 // pred_check_branch
    %3595 = sbr.rel (0) target = $region17
  $region16: #{_build_rope_cache.1} parent=0 // pred_region
    _
  $region17: #{_build_rope_cache.1} parent=0 // pred_fallthru
    _
  // Predicated region
  $region18: #{_build_rope_cache.1} parent=0 // pred_check
    _
  $region19: #{_build_rope_cache.1} parent=0 // pred_check_branch
    %3597 = sbr.rel (0) target = $region21
  $region20: #{_build_rope_cache.1} parent=0 // pred_region
    _
  $region21: #{_build_rope_cache.1} parent=0 // pred_fallthru
    _

</llo_original>
